<compile_context>
chip_gen: v6e
topology: v6e:2x2x1
jax: 0.10.0
libtpu: 0.0.40
codegen_flags: <defaults>
</compile_context>

<pallas_src>
import functools
import math

import jax
import jax.numpy as jnp
import numpy as np
from jax.experimental import pallas as pl
from jax.experimental.pallas import tpu as pltpu

GAIN = math.sqrt(2.0)  # lrelu gain


# ----------------------------------------------------------------------------
# Host-side constant selection matrices (block-diagonal over the batch tile)
# ----------------------------------------------------------------------------
def _blockdiag(mat, bt):
    r, c = mat.shape
    out = np.zeros((bt * r, bt * c), np.float32)
    for b in range(bt):
        out[b * r:(b + 1) * r, b * c:(b + 1) * c] = mat
    return out


def _shift_mats(bt, l):
    """[2, bt*l, bt*l]: row0 -> x_prev (x[l-1], zero pad), row1 -> x_next (x[l+1])."""
    sp = np.zeros((l, l), np.float32)
    sn = np.zeros((l, l), np.float32)
    idx = np.arange(l)
    sp[idx[1:], idx[1:] - 1] = 1.0
    sn[idx[:-1], idx[:-1] + 1] = 1.0
    return np.stack([_blockdiag(sp, bt), _blockdiag(sn, bt)])


def _upshift_mats(bt, l_in):
    """[3, bt*2*l_in, bt*l_in]: tap-t gather = (shift by t-1) o (nearest 2x upsample)."""
    m = 2 * l_in
    rows = np.arange(m)
    mats = []
    for t in range(3):
        src = rows + t - 1
        valid = (src >= 0) & (src < m)
        g = np.zeros((m, l_in), np.float32)
        g[rows[valid], np.clip(src, 0, m - 1)[valid] // 2] = 1.0
        mats.append(_blockdiag(g, bt))
    return np.stack(mats)


def _norm_mats(bt, l):
    """R [bt, bt*l] (per-sample mean) and E [bt*l, bt] (per-sample broadcast)."""
    red = np.zeros((bt, bt * l), np.float32)
    exp = np.zeros((bt * l, bt), np.float32)
    for b in range(bt):
        red[b, b * l:(b + 1) * l] = 1.0 / l
        exp[b * l:(b + 1) * l, b] = 1.0
    return red, exp


# ----------------------------------------------------------------------------
# In-kernel helpers (pure functions on VMEM-resident values)
# ----------------------------------------------------------------------------
def _sel(mat_bf16, x_bf16):
    """Apply a 0/1 selection matrix; result cast back to bf16 (exact for selections)."""
    return jnp.dot(mat_bf16, x_bf16, preferred_element_type=jnp.float32).astype(jnp.bfloat16)


def _conv3(parts_bf16, w_ref, bias_row):
    """k=3 'same' conv as ONE matmul on lane-concatenated taps; parts: 3 x [M, Cin] bf16."""
    xcat = jnp.concatenate(parts_bf16, axis=1)                  # [M, 3*Cin] bf16
    return jnp.dot(xcat, w_ref[...], preferred_element_type=jnp.float32) + bias_row


def _to_rgb_cf(w_ref, b_ref, x_bf16):
    """1x1 conv emitted channels-first: [nc, C] x [M, C] -> [nc, M] (lane-dense along M)."""
    y = jax.lax.dot_general(w_ref[...], x_bf16, (((1,), (1,)), ((), ())),
                            preferred_element_type=jnp.float32)
    return y + b_ref[...]


def _lepilogue(x, noise_col, nw_row, sbs_row, sbh_row, lat_bt, sw, red, exp):
    """LayerEpilogue1d: +noise -> LeakyReLU(0.2) -> InstanceNorm1d (over L) -> StyleMod.

    x [M, C] f32 (M = BT*L, per-sample row blocks of L), noise_col [M,1], rows [1,C],
    lat_bt [BT,D] bf16, sw [D,2C] bf16, red [BT,M] f32 (mean), exp [M,BT] bf16 (broadcast).
    """
    # TODO(synk): use_w3 / use_diseases specific behaviour of LayerEpilogue1d is not in the
    # provided source; implemented as the standard StyleGAN epilogue.
    x = x + noise_col * nw_row
    x = jnp.maximum(x, 0.2 * x)                                  # LeakyReLU(0.2)
    c = x.shape[1]
    mu = jnp.dot(red, x, preferred_element_type=jnp.float32)     # [BT, C]
    ex2 = jnp.dot(red, x * x, preferred_element_type=jnp.float32)
    var = jnp.maximum(ex2 - mu * mu, 0.0)                        # clamp one-pass variance
    inv = jax.lax.rsqrt(var + 1e-5)
    style = jnp.dot(lat_bt, sw, preferred_element_type=jnp.float32)   # [BT, 2C]
    scale = style[:, :c] + sbs_row
    shift = style[:, c:] + sbh_row
    a = inv * (scale + 1.0)                                      # fold IN + StyleMod affine
    b = shift - mu * a
    a_rows = jnp.dot(exp, a.astype(jnp.bfloat16), preferred_element_type=jnp.float32)
    b_rows = jnp.dot(exp, b.astype(jnp.bfloat16), preferred_element_type=jnp.float32)
    return x * a_rows + b_rows


# ----------------------------------------------------------------------------
# Fused kernel (whole forward, one grid step = BT batch elements)
# ----------------------------------------------------------------------------
def _make_fused_kernel(depth):
    def kernel(*refs):
        it = iter(refs)
        lat_ref = next(it)                                       # [BT, NL, D] bf16
        noise_refs = [next(it) for _ in range(depth + 1)]        # [BT*L_s, 2] f32
        alpha_ref = next(it) if depth > 0 else None              # (1, 1) f32
        const_ref = next(it)                                     # [BT*4, C0] f32 (pre-tiled)
        rows0_ref, sw0_ref, cw0_ref = next(it), next(it), next(it)
        sh0_ref, red0_ref, exp0_ref = next(it), next(it), next(it)
        blk_refs = [tuple(next(it) for _ in range(8)) for _ in range(depth)]
        rgb_refs = [next(it) for _ in range(2 if depth == 0 else 4)]
        o_ref = next(it)
        rest = list(it)
        assert not rest, f"ref-layout mismatch: {len(rest)} unconsumed refs"

        rows0 = rows0_ref[...]
        noi0 = noise_refs[0][...]
        red0 = red0_ref[...]
        exp0 = exp0_ref[...]

        # ---- InputBlock: const + bias -> epi1 -> conv3 -> epi2 (length 4) ----
        # TODO(synk): const_input / resnet18 encoder branch (const_input_dim > 0) and the
        # dense (const_input_layer=False) path are not exercised here.
        x = const_ref[...] + rows0[0:1]
        x = _lepilogue(x, noi0[:, 0:1], rows0[1:2], rows0[2:3], rows0[3:4],
                       lat_ref[:, 0, :], sw0_ref[0], red0, exp0)
        xb = x.astype(jnp.bfloat16)
        x = _conv3([_sel(sh0_ref[0], xb), xb, _sel(sh0_ref[1], xb)], cw0_ref, rows0[4:5])
        x = _lepilogue(x, noi0[:, 1:2], rows0[5:6], rows0[6:7], rows0[7:8],
                       lat_ref[:, 1, :], sw0_ref[1], red0, exp0)

        if depth == 0:
            o_ref[0] = _to_rgb_cf(rgb_refs[0], rgb_refs[1], x.astype(jnp.bfloat16))
            return

        # ---- GSynthesisBlocks (fused 2x-upsample conv0_up, conv1, epilogues) ----
        # TODO(synk): fused conv-transpose upscale path (large spatial) not needed here.
        xu_last = None
        for i in range(depth):
            rows_r, sw_r, c0w_r, c1w_r, g_r, sh_r, red_r, exp_r = blk_refs[i]
            rows = rows_r[...]
            noi = noise_refs[i + 1][...]
            red = red_r[...]
            exp = exp_r[...]

            xb = x.astype(jnp.bfloat16)
            xp = _sel(g_r[0], xb)                    # tap -1 of upsample(x)
            xc = _sel(g_r[1], xb)                    # tap  0  == nearest-2x upsample(x)
            xn = _sel(g_r[2], xb)                    # tap +1
            if i == depth - 1:
                xu_last = xc                         # residual to_rgb input
            x = _conv3([xp, xc, xn], c0w_r, rows[0:1])
            x = _lepilogue(x, noi[:, 0:1], rows[1:2], rows[2:3], rows[3:4],
                           lat_ref[:, 2 * (i + 1), :], sw_r[0], red, exp)
            xb = x.astype(jnp.bfloat16)
            x = _conv3([_sel(sh_r[0], xb), xb, _sel(sh_r[1], xb)], c1w_r, rows[4:5])
            x = _lepilogue(x, noi[:, 1:2], rows[5:6], rows[6:7], rows[7:8],
                           lat_ref[:, 2 * (i + 1) + 1, :], sw_r[1], red, exp)

        # ---- fade-in: alpha*to_rgb[d](block_d(x)) + (1-alpha)*to_rgb[d-1](up(x)) ----
        residual = _to_rgb_cf(rgb_refs[0], rgb_refs[1], xu_last)
        straight = _to_rgb_cf(rgb_refs[2], rgb_refs[3], x.astype(jnp.bfloat16))
        a = alpha_ref[0, 0]
        o_ref[0] = a * straight + (1.0 - a) * residual

    return kernel


# ----------------------------------------------------------------------------
# Parameter construction (deterministic; packed layouts for the fused kernel)
# ----------------------------------------------------------------------------
def _conv_pack(key, cin, cout, k, gain):
    kw, kb = jax.random.split(key)
    he_std = gain * (cin * k) ** -0.5            # use_wscale: runtime w_mul folded into w
    w = jax.random.normal(kw, (k, cin, cout), jnp.float32) * he_std
    b = jax.random.normal(kb, (cout,), jnp.float32) * 0.1
    if k == 1:                                   # to_rgb 1x1 conv, channels-first output
        return {'w': jnp.transpose(w[0]).astype(jnp.bfloat16),    # [cout, cin]
                'b': b.reshape(cout, 1)}
    return {'w': w.reshape(k * cin, cout).astype(jnp.bfloat16),   # taps stacked along rows
            'b': b}


def _epi_pack(key, c, dlatent):
    k1, k2, k3 = jax.random.split(key, 3)
    sw = jax.random.normal(k2, (dlatent, 2 * c), jnp.float32) * dlatent ** -0.5
    sb = jax.random.normal(k3, (2 * c,), jnp.float32) * 0.1
    return {'noise_w': jax.random.normal(k1, (c,), jnp.float32) * 0.1,
            'sw': sw.astype(jnp.bfloat16),       # [D, 2C]: scale half | shift half
            'sb_s': sb[:c], 'sb_h': sb[c:]}


def _stage_rows(bias0, epi1, bias1, epi2):
    return jnp.stack([bias0, epi1['noise_w'], epi1['sb_s'], epi1['sb_h'],
                      bias1, epi2['noise_w'], epi2['sb_s'], epi2['sb_h']], axis=0)


def init_gsynthesis_params(key, *, dlatent_size, num_channels, resolution,
                           fmap_base, fmap_decay, fmap_max):
    def nf(stage):
        return min(int(fmap_base / 2.0 ** (stage * fmap_decay)), fmap_max)

    rlog2 = int(math.log2(resolution))
    assert resolution == 2 ** rlog2 and resolution >= 4
    num_layers = rlog2 * 2

    keys = iter(jax.random.split(key, 128))
    c0 = nf(1)
    # TODO(synk): PyTorch stores const as (1, nf, 4) channels-first; loading a real
    # checkpoint would need a transpose into this channels-last [4, nf] layout.
    const = jax.random.normal(next(keys), (4, c0), jnp.float32)
    const_bias = jax.random.normal(next(keys), (c0,), jnp.float32) * 0.1
    epi1 = _epi_pack(next(keys), c0, dlatent_size)
    conv = _conv_pack(next(keys), c0, c0, 3, GAIN)
    epi2 = _epi_pack(next(keys), c0, dlatent_size)
    init = {'const': const,
            'rows': _stage_rows(const_bias, epi1, conv['b'], epi2),
            'sw': jnp.stack([epi1['sw'], epi2['sw']]),
            'convw': conv['w']}

    blocks, rgb = [], [_conv_pack(next(keys), c0, num_channels, 1, 1.0)]
    for res in range(3, rlog2 + 1):
        cin, cout = nf(res - 2), nf(res - 1)
        c0u = _conv_pack(next(keys), cin, cout, 3, GAIN)
        e1 = _epi_pack(next(keys), cout, dlatent_size)
        c1 = _conv_pack(next(keys), cout, cout, 3, GAIN)
        e2 = _epi_pack(next(keys), cout, dlatent_size)
        blocks.append({'rows': _stage_rows(c0u['b'], e1, c1['b'], e2),
                       'sw': jnp.stack([e1['sw'], e2['sw']]),
                       'conv0w': c0u['w'], 'conv1w': c1['w']})
        rgb.append(_conv_pack(next(keys), cout, num_channels, 1, 1.0))
    return {'init': init, 'blocks': blocks, 'rgb': rgb}, num_layers


def make_noises(key, batch, num_blocks):
    """Per-position noise (shared over channels), packed per stage as [B*L, 2] (epi1|epi2)."""
    keys = jax.random.split(key, num_blocks + 1)
    return [jax.random.normal(keys[s], (batch * 4 * 2 ** s, 2), jnp.float32)
            for s in range(num_blocks + 1)]


# ----------------------------------------------------------------------------
# Forward pass (structure='linear') — one pallas_call total
# ----------------------------------------------------------------------------
def _shared_spec(shape):
    zeros = (0,) * len(shape)
    return pl.BlockSpec(tuple(shape), lambda b, _z=zeros: _z)


def gsynthesis_forward(params, noises, dlatents_in, alpha=0.0, *, depth=0,
                       batch_tile=None):
    """dlatents_in: [B, num_layers, D]. Returns PyTorch NCL output [B, num_channels, L_out]."""
    batch, num_layers, dlat = dlatents_in.shape
    num_channels = params['rgb'][0]['w'].shape[0]
    n_blocks = len(params['blocks'])
    assert depth <= n_blocks, 'Requested output depth cannot be produced'

    # Batch tiling: BT samples per grid step, flattened to BT*L rows (MXU fill);
    # grid steps marked 'parallel' so v7x's two TensorCores split a multi-step grid.
    if batch_tile is None:
        batch_tile = min(batch, max(1, 128 // 4))
    bt = batch_tile
    assert batch % bt == 0, 'pad the batch to a multiple of the batch tile'
    grid = batch // bt
    if grid > 1:
        assert (bt * 4) % 8 == 0, 'with a multi-step grid, BT*4 must be a multiple of 8'

    l_out = 4 * 2 ** depth

    args = [dlatents_in.astype(jnp.bfloat16)]
    specs = [pl.BlockSpec((bt, num_layers, dlat), lambda b: (b, 0, 0))]

    for s in range(depth + 1):
        l_s = 4 * 2 ** s
        args.append(noises[s])
        specs.append(pl.BlockSpec((bt * l_s, 2), lambda b: (b, 0)))

    if depth > 0:
        args.append(jnp.asarray(alpha, jnp.float32).reshape(1, 1))
        specs.append(_shared_spec((1, 1)))

    def add_shared(arr):
        args.append(arr)
        specs.append(_shared_spec(arr.shape))

    # Init stage (length 4): pre-tiled const, packed rows, packed style weights, conv weight,
    # and the per-resolution selection matrices (hoisted to host, bf16/f32 constants).
    add_shared(jnp.tile(params['init']['const'], (bt, 1)))            # [BT*4, C0]
    add_shared(params['init']['rows'])                                # [8, C0]
    add_shared(params['init']['sw'])                                  # [2, D, 2C0] bf16
    add_shared(params['init']['convw'])                               # [3C0, C0] bf16
    add_shared(jnp.asarray(_shift_mats(bt, 4), jnp.bfloat16))         # [2, M0, M0]
    red0, exp0 = _norm_mats(bt, 4)
    add_shared(jnp.asarray(red0, jnp.float32))                        # [BT, M0]
    add_shared(jnp.asarray(exp0, jnp.bfloat16))                       # [M0, BT]

    for i in range(depth):
        bp = params['blocks'][i]
        l_in = 4 * 2 ** i
        add_shared(bp['rows'])                                        # [8, Cout]
        add_shared(bp['sw'])                                          # [2, D, 2Cout]
        add_shared(bp['conv0w'])                                      # [3Cin, Cout]
        add_shared(bp['conv1w'])                                      # [3Cout, Cout]
        add_shared(jnp.asarray(_upshift_mats(bt, l_in), jnp.bfloat16))      # [3, 2M, M]
        add_shared(jnp.asarray(_shift_mats(bt, 2 * l_in), jnp.bfloat16))    # [2, 2M, 2M]
        red_i, exp_i = _norm_mats(bt, 2 * l_in)
        add_shared(jnp.asarray(red_i, jnp.float32))
        add_shared(jnp.asarray(exp_i, jnp.bfloat16))

    if depth == 0:
        add_shared(params['rgb'][0]['w'])
        add_shared(params['rgb'][0]['b'])
    else:
        add_shared(params['rgb'][depth - 1]['w'])
        add_shared(params['rgb'][depth - 1]['b'])
        add_shared(params['rgb'][depth]['w'])
        add_shared(params['rgb'][depth]['b'])

    out = pl.pallas_call(
        _make_fused_kernel(depth),
        out_shape=jax.ShapeDtypeStruct((grid, num_channels, bt * l_out), jnp.float32),
        grid=(grid,),
        in_specs=specs,
        out_specs=pl.BlockSpec((1, num_channels, bt * l_out), lambda b: (b, 0, 0)),
        compiler_params=pltpu.CompilerParams(dimension_semantics=("parallel",)),
    )(*args)

    # [G, nc, BT*L] (batch-major columns) -> PyTorch NCL [B, nc, L]
    out = out.reshape(grid, num_channels, bt, l_out)
    return jnp.transpose(out, (0, 2, 1, 3)).reshape(batch, num_channels, l_out)


# ----------------------------------------------------------------------------
if __name__ == "__main__":
    # Small configuration consistent with the module's __init__ defaults (scaled down).
    B = 2
    DLATENT = 32
    NUM_CHANNELS = 4
    RESOLUTION = 8          # resolution_log2 = 3 -> 1 GSynthesisBlock, num_layers = 6
    FMAP_BASE, FMAP_DECAY, FMAP_MAX = 64, 1.0, 32

    key = jax.random.PRNGKey(0)
    kp, kn, kd = jax.random.split(key, 3)

    params, num_layers = init_gsynthesis_params(
        kp, dlatent_size=DLATENT, num_channels=NUM_CHANNELS, resolution=RESOLUTION,
        fmap_base=FMAP_BASE, fmap_decay=FMAP_DECAY, fmap_max=FMAP_MAX)
    noises = make_noises(kn, B, num_blocks=len(params['blocks']))
    dlatents_in = jax.random.normal(kd, (B, num_layers, DLATENT), jnp.float32)

    # depth is static; alpha is a runtime scalar (changing it does NOT recompile).
    fwd = jax.jit(functools.partial(gsynthesis_forward, depth=1))
    out = jax.block_until_ready(fwd(params, noises, dlatents_in, 0.3))

    assert out.shape == (B, NUM_CHANNELS, 8), out.shape     # NCL, matches PyTorch (B, 4, 8)
    assert bool(jnp.all(jnp.isfinite(out)))
    print("KERNEL_OK")
</pallas_src>

<mosaic_0001>
module attributes {stable_mosaic.version = 11 : i64} {
  func.func @kernel(%arg0: i32, %arg1: memref<2x6x32xbf16, #tpu.memory_space<vmem>>, %arg2: memref<8x2xf32, #tpu.memory_space<vmem>>, %arg3: memref<16x2xf32, #tpu.memory_space<vmem>>, %arg4: memref<1x1xf32, #tpu.memory_space<vmem>>, %arg5: memref<8x32xf32, #tpu.memory_space<vmem>>, %arg6: memref<8x32xf32, #tpu.memory_space<vmem>>, %arg7: memref<2x32x64xbf16, #tpu.memory_space<vmem>>, %arg8: memref<96x32xbf16, #tpu.memory_space<vmem>>, %arg9: memref<2x8x8xbf16, #tpu.memory_space<vmem>>, %arg10: memref<2x8xf32, #tpu.memory_space<vmem>>, %arg11: memref<8x2xbf16, #tpu.memory_space<vmem>>, %arg12: memref<8x16xf32, #tpu.memory_space<vmem>>, %arg13: memref<2x32x32xbf16, #tpu.memory_space<vmem>>, %arg14: memref<96x16xbf16, #tpu.memory_space<vmem>>, %arg15: memref<48x16xbf16, #tpu.memory_space<vmem>>, %arg16: memref<3x16x8xbf16, #tpu.memory_space<vmem>>, %arg17: memref<2x16x16xbf16, #tpu.memory_space<vmem>>, %arg18: memref<2x16xf32, #tpu.memory_space<vmem>>, %arg19: memref<16x2xbf16, #tpu.memory_space<vmem>>, %arg20: memref<4x32xbf16, #tpu.memory_space<vmem>>, %arg21: memref<4x1xf32, #tpu.memory_space<vmem>>, %arg22: memref<4x16xbf16, #tpu.memory_space<vmem>>, %arg23: memref<4x1xf32, #tpu.memory_space<vmem>>, %arg24: memref<1x4x16xf32, #tpu.memory_space<vmem>>) attributes {dimension_semantics = [#tpu.dimension_semantics<parallel>], iteration_bounds = array<i64: 1>, scalar_prefetch = 0 : i64, scratch_operands = 0 : i64, tpu.core_type = #tpu.core_type<tc>, window_params = [{transform_indices = @transform_0, window_bounds = array<i64: 2, 6, 32>}, {transform_indices = @transform_1, window_bounds = array<i64: 8, 2>}, {transform_indices = @transform_2, window_bounds = array<i64: 16, 2>}, {pipeline_mode = #tpu.pipeline_mode<synchronous>, transform_indices = @transform_3, window_bounds = array<i64: 1, 1>}, {pipeline_mode = #tpu.pipeline_mode<synchronous>, transform_indices = @transform_4, window_bounds = array<i64: 8, 32>}, {pipeline_mode = #tpu.pipeline_mode<synchronous>, transform_indices = @transform_5, window_bounds = array<i64: 8, 32>}, {pipeline_mode = #tpu.pipeline_mode<synchronous>, transform_indices = @transform_6, window_bounds = array<i64: 2, 32, 64>}, {pipeline_mode = #tpu.pipeline_mode<synchronous>, transform_indices = @transform_7, window_bounds = array<i64: 96, 32>}, {pipeline_mode = #tpu.pipeline_mode<synchronous>, transform_indices = @transform_8, window_bounds = array<i64: 2, 8, 8>}, {pipeline_mode = #tpu.pipeline_mode<synchronous>, transform_indices = @transform_9, window_bounds = array<i64: 2, 8>}, {pipeline_mode = #tpu.pipeline_mode<synchronous>, transform_indices = @transform_10, window_bounds = array<i64: 8, 2>}, {pipeline_mode = #tpu.pipeline_mode<synchronous>, transform_indices = @transform_11, window_bounds = array<i64: 8, 16>}, {pipeline_mode = #tpu.pipeline_mode<synchronous>, transform_indices = @transform_12, window_bounds = array<i64: 2, 32, 32>}, {pipeline_mode = #tpu.pipeline_mode<synchronous>, transform_indices = @transform_13, window_bounds = array<i64: 96, 16>}, {pipeline_mode = #tpu.pipeline_mode<synchronous>, transform_indices = @transform_14, window_bounds = array<i64: 48, 16>}, {pipeline_mode = #tpu.pipeline_mode<synchronous>, transform_indices = @transform_15, window_bounds = array<i64: 3, 16, 8>}, {pipeline_mode = #tpu.pipeline_mode<synchronous>, transform_indices = @transform_16, window_bounds = array<i64: 2, 16, 16>}, {pipeline_mode = #tpu.pipeline_mode<synchronous>, transform_indices = @transform_17, window_bounds = array<i64: 2, 16>}, {pipeline_mode = #tpu.pipeline_mode<synchronous>, transform_indices = @transform_18, window_bounds = array<i64: 16, 2>}, {pipeline_mode = #tpu.pipeline_mode<synchronous>, transform_indices = @transform_19, window_bounds = array<i64: 4, 32>}, {pipeline_mode = #tpu.pipeline_mode<synchronous>, transform_indices = @transform_20, window_bounds = array<i64: 4, 1>}, {pipeline_mode = #tpu.pipeline_mode<synchronous>, transform_indices = @transform_21, window_bounds = array<i64: 4, 16>}, {pipeline_mode = #tpu.pipeline_mode<synchronous>, transform_indices = @transform_22, window_bounds = array<i64: 4, 1>}, {transform_indices = @transform_23, window_bounds = array<i64: 1, 4, 16>}]} {
    %c0 = arith.constant 0 : index
    %c0_0 = arith.constant 0 : index
    %0 = vector.load %arg6[%c0, %c0_0] : memref<8x32xf32, #tpu.memory_space<vmem>>, vector<8x32xf32>
    %c0_1 = arith.constant 0 : index
    %c0_2 = arith.constant 0 : index
    %1 = vector.load %arg2[%c0_1, %c0_2] : memref<8x2xf32, #tpu.memory_space<vmem>>, vector<8x2xf32>
    %c0_3 = arith.constant 0 : index
    %c0_4 = arith.constant 0 : index
    %2 = vector.load %arg10[%c0_3, %c0_4] : memref<2x8xf32, #tpu.memory_space<vmem>>, vector<2x8xf32>
    %c0_5 = arith.constant 0 : index
    %c0_6 = arith.constant 0 : index
    %3 = vector.load %arg11[%c0_5, %c0_6] : memref<8x2xbf16, #tpu.memory_space<vmem>>, vector<8x2xbf16>
    %c0_7 = arith.constant 0 : index
    %c0_8 = arith.constant 0 : index
    %4 = vector.load %arg5[%c0_7, %c0_8] : memref<8x32xf32, #tpu.memory_space<vmem>>, vector<8x32xf32>
    %5 = vector.extract_strided_slice %0 {offsets = [0, 0], sizes = [1, 32], strides = [1, 1]} : vector<8x32xf32> to vector<1x32xf32>
    %6 = vector.broadcast %5 : vector<1x32xf32> to vector<8x32xf32>
    %7 = arith.addf %4, %6 : vector<8x32xf32>
    %8 = vector.extract_strided_slice %1 {offsets = [0, 0], sizes = [8, 1], strides = [1, 1]} : vector<8x2xf32> to vector<8x1xf32>
    %9 = vector.extract_strided_slice %0 {offsets = [1, 0], sizes = [1, 32], strides = [1, 1]} : vector<8x32xf32> to vector<1x32xf32>
    %10 = vector.extract_strided_slice %0 {offsets = [2, 0], sizes = [1, 32], strides = [1, 1]} : vector<8x32xf32> to vector<1x32xf32>
    %11 = vector.extract_strided_slice %0 {offsets = [3, 0], sizes = [1, 32], strides = [1, 1]} : vector<8x32xf32> to vector<1x32xf32>
    %c0_9 = arith.constant 0 : index
    %c0_10 = arith.constant 0 : index
    %c0_11 = arith.constant 0 : index
    %12 = vector.load %arg1[%c0_9, %c0_10, %c0_11] : memref<2x6x32xbf16, #tpu.memory_space<vmem>>, vector<2x1x32xbf16>
    %13 = vector.shape_cast %12 : vector<2x1x32xbf16> to vector<2x32xbf16>
    %c0_12 = arith.constant 0 : index
    %c0_13 = arith.constant 0 : index
    %c0_14 = arith.constant 0 : index
    %14 = vector.load %arg7[%c0_12, %c0_13, %c0_14] : memref<2x32x64xbf16, #tpu.memory_space<vmem>>, vector<1x32x64xbf16>
    %15 = vector.shape_cast %14 : vector<1x32x64xbf16> to vector<32x64xbf16>
    %16 = vector.broadcast %8 : vector<8x1xf32> to vector<8x32xf32>
    %17 = vector.broadcast %9 : vector<1x32xf32> to vector<8x32xf32>
    %18 = arith.mulf %16, %17 : vector<8x32xf32>
    %19 = arith.addf %7, %18 : vector<8x32xf32>
    %cst = arith.constant 2.000000e-01 : f32
    %20 = vector.broadcast %cst : f32 to vector<8x32xf32>
    %21 = arith.mulf %20, %19 : vector<8x32xf32>
    %22 = arith.maximumf %19, %21 : vector<8x32xf32>
    %cst_15 = arith.constant dense<0.000000e+00> : vector<2x32xf32>
    %23 = tpu.matmul %2, %22, %cst_15 {dimension_numbers = #tpu.dot_dimension_numbers<[1], [0], [0], [1], [0, 0, 1, 1], [], []>} : vector<2x8xf32>, vector<8x32xf32>, vector<2x32xf32> -> vector<2x32xf32>
    %24 = arith.mulf %22, %22 : vector<8x32xf32>
    %cst_16 = arith.constant dense<0.000000e+00> : vector<2x32xf32>
    %25 = tpu.matmul %2, %24, %cst_16 {dimension_numbers = #tpu.dot_dimension_numbers<[1], [0], [0], [1], [0, 0, 1, 1], [], []>} : vector<2x8xf32>, vector<8x32xf32>, vector<2x32xf32> -> vector<2x32xf32>
    %26 = arith.mulf %23, %23 : vector<2x32xf32>
    %27 = arith.subf %25, %26 : vector<2x32xf32>
    %cst_17 = arith.constant 0.000000e+00 : f32
    %28 = vector.broadcast %cst_17 : f32 to vector<2x32xf32>
    %29 = arith.maximumf %27, %28 : vector<2x32xf32>
    %cst_18 = arith.constant 9.99999974E-6 : f32
    %30 = vector.broadcast %cst_18 : f32 to vector<2x32xf32>
    %31 = arith.addf %29, %30 : vector<2x32xf32>
    %32 = math.rsqrt %31 : vector<2x32xf32>
    %cst_19 = arith.constant dense<0.000000e+00> : vector<2x64xf32>
    %33 = tpu.matmul %13, %15, %cst_19 {dimension_numbers = #tpu.dot_dimension_numbers<[1], [0], [0], [1], [0, 0, 1, 1], [], []>} : vector<2x32xbf16>, vector<32x64xbf16>, vector<2x64xf32> -> vector<2x64xf32>
    %34 = vector.extract_strided_slice %33 {offsets = [0, 0], sizes = [2, 32], strides = [1, 1]} : vector<2x64xf32> to vector<2x32xf32>
    %35 = vector.broadcast %10 : vector<1x32xf32> to vector<2x32xf32>
    %36 = arith.addf %34, %35 : vector<2x32xf32>
    %37 = vector.extract_strided_slice %33 {offsets = [0, 32], sizes = [2, 32], strides = [1, 1]} : vector<2x64xf32> to vector<2x32xf32>
    %38 = vector.broadcast %11 : vector<1x32xf32> to vector<2x32xf32>
    %39 = arith.addf %37, %38 : vector<2x32xf32>
    %cst_20 = arith.constant 1.000000e+00 : f32
    %40 = vector.broadcast %cst_20 : f32 to vector<2x32xf32>
    %41 = arith.addf %36, %40 : vector<2x32xf32>
    %42 = arith.mulf %32, %41 : vector<2x32xf32>
    %43 = arith.mulf %23, %42 : vector<2x32xf32>
    %44 = arith.subf %39, %43 : vector<2x32xf32>
    %45 = arith.truncf %42 : vector<2x32xf32> to vector<2x32xbf16>
    %cst_21 = arith.constant dense<0.000000e+00> : vector<8x32xf32>
    %46 = tpu.matmul %3, %45, %cst_21 {dimension_numbers = #tpu.dot_dimension_numbers<[1], [0], [0], [1], [0, 0, 1, 1], [], []>} : vector<8x2xbf16>, vector<2x32xbf16>, vector<8x32xf32> -> vector<8x32xf32>
    %47 = arith.truncf %44 : vector<2x32xf32> to vector<2x32xbf16>
    %cst_22 = arith.constant dense<0.000000e+00> : vector<8x32xf32>
    %48 = tpu.matmul %3, %47, %cst_22 {dimension_numbers = #tpu.dot_dimension_numbers<[1], [0], [0], [1], [0, 0, 1, 1], [], []>} : vector<8x2xbf16>, vector<2x32xbf16>, vector<8x32xf32> -> vector<8x32xf32>
    %49 = arith.mulf %22, %46 : vector<8x32xf32>
    %50 = arith.addf %49, %48 : vector<8x32xf32>
    %51 = arith.truncf %50 : vector<8x32xf32> to vector<8x32xbf16>
    %c0_23 = arith.constant 0 : index
    %c0_24 = arith.constant 0 : index
    %c0_25 = arith.constant 0 : index
    %52 = vector.load %arg9[%c0_23, %c0_24, %c0_25] : memref<2x8x8xbf16, #tpu.memory_space<vmem>>, vector<1x8x8xbf16>
    %53 = vector.shape_cast %52 : vector<1x8x8xbf16> to vector<8x8xbf16>
    %cst_26 = arith.constant dense<0.000000e+00> : vector<8x32xf32>
    %54 = tpu.matmul %53, %51, %cst_26 {dimension_numbers = #tpu.dot_dimension_numbers<[1], [0], [0], [1], [0, 0, 1, 1], [], []>} : vector<8x8xbf16>, vector<8x32xbf16>, vector<8x32xf32> -> vector<8x32xf32>
    %55 = arith.truncf %54 : vector<8x32xf32> to vector<8x32xbf16>
    %c1 = arith.constant 1 : index
    %c0_27 = arith.constant 0 : index
    %c0_28 = arith.constant 0 : index
    %56 = vector.load %arg9[%c1, %c0_27, %c0_28] : memref<2x8x8xbf16, #tpu.memory_space<vmem>>, vector<1x8x8xbf16>
    %57 = vector.shape_cast %56 : vector<1x8x8xbf16> to vector<8x8xbf16>
    %cst_29 = arith.constant dense<0.000000e+00> : vector<8x32xf32>
    %58 = tpu.matmul %57, %51, %cst_29 {dimension_numbers = #tpu.dot_dimension_numbers<[1], [0], [0], [1], [0, 0, 1, 1], [], []>} : vector<8x8xbf16>, vector<8x32xbf16>, vector<8x32xf32> -> vector<8x32xf32>
    %59 = arith.truncf %58 : vector<8x32xf32> to vector<8x32xbf16>
    %60 = vector.extract_strided_slice %0 {offsets = [4, 0], sizes = [1, 32], strides = [1, 1]} : vector<8x32xf32> to vector<1x32xf32>
    %61 = tpu.concatenate %55, %51, %59 in 1 : vector<8x32xbf16>, vector<8x32xbf16>, vector<8x32xbf16> -> vector<8x96xbf16>
    %c0_30 = arith.constant 0 : index
    %c0_31 = arith.constant 0 : index
    %62 = vector.load %arg8[%c0_30, %c0_31] : memref<96x32xbf16, #tpu.memory_space<vmem>>, vector<96x32xbf16>
    %cst_32 = arith.constant dense<0.000000e+00> : vector<8x32xf32>
    %63 = tpu.matmul %61, %62, %cst_32 {dimension_numbers = #tpu.dot_dimension_numbers<[1], [0], [0], [1], [0, 0, 1, 1], [], []>} : vector<8x96xbf16>, vector<96x32xbf16>, vector<8x32xf32> -> vector<8x32xf32>
    %64 = vector.broadcast %60 : vector<1x32xf32> to vector<8x32xf32>
    %65 = arith.addf %63, %64 : vector<8x32xf32>
    %66 = vector.extract_strided_slice %1 {offsets = [0, 1], sizes = [8, 1], strides = [1, 1]} : vector<8x2xf32> to vector<8x1xf32>
    %67 = vector.extract_strided_slice %0 {offsets = [5, 0], sizes = [1, 32], strides = [1, 1]} : vector<8x32xf32> to vector<1x32xf32>
    %68 = vector.extract_strided_slice %0 {offsets = [6, 0], sizes = [1, 32], strides = [1, 1]} : vector<8x32xf32> to vector<1x32xf32>
    %69 = vector.extract_strided_slice %0 {offsets = [7, 0], sizes = [1, 32], strides = [1, 1]} : vector<8x32xf32> to vector<1x32xf32>
    %c0_33 = arith.constant 0 : index
    %c1_34 = arith.constant 1 : index
    %c0_35 = arith.constant 0 : index
    %70 = vector.load %arg1[%c0_33, %c1_34, %c0_35] : memref<2x6x32xbf16, #tpu.memory_space<vmem>>, vector<2x1x32xbf16>
    %71 = vector.shape_cast %70 : vector<2x1x32xbf16> to vector<2x32xbf16>
    %c1_36 = arith.constant 1 : index
    %c0_37 = arith.constant 0 : index
    %c0_38 = arith.constant 0 : index
    %72 = vector.load %arg7[%c1_36, %c0_37, %c0_38] : memref<2x32x64xbf16, #tpu.memory_space<vmem>>, vector<1x32x64xbf16>
    %73 = vector.shape_cast %72 : vector<1x32x64xbf16> to vector<32x64xbf16>
    %74 = vector.broadcast %66 : vector<8x1xf32> to vector<8x32xf32>
    %75 = vector.broadcast %67 : vector<1x32xf32> to vector<8x32xf32>
    %76 = arith.mulf %74, %75 : vector<8x32xf32>
    %77 = arith.addf %65, %76 : vector<8x32xf32>
    %cst_39 = arith.constant 2.000000e-01 : f32
    %78 = vector.broadcast %cst_39 : f32 to vector<8x32xf32>
    %79 = arith.mulf %78, %77 : vector<8x32xf32>
    %80 = arith.maximumf %77, %79 : vector<8x32xf32>
    %cst_40 = arith.constant dense<0.000000e+00> : vector<2x32xf32>
    %81 = tpu.matmul %2, %80, %cst_40 {dimension_numbers = #tpu.dot_dimension_numbers<[1], [0], [0], [1], [0, 0, 1, 1], [], []>} : vector<2x8xf32>, vector<8x32xf32>, vector<2x32xf32> -> vector<2x32xf32>
    %82 = arith.mulf %80, %80 : vector<8x32xf32>
    %cst_41 = arith.constant dense<0.000000e+00> : vector<2x32xf32>
    %83 = tpu.matmul %2, %82, %cst_41 {dimension_numbers = #tpu.dot_dimension_numbers<[1], [0], [0], [1], [0, 0, 1, 1], [], []>} : vector<2x8xf32>, vector<8x32xf32>, vector<2x32xf32> -> vector<2x32xf32>
    %84 = arith.mulf %81, %81 : vector<2x32xf32>
    %85 = arith.subf %83, %84 : vector<2x32xf32>
    %cst_42 = arith.constant 0.000000e+00 : f32
    %86 = vector.broadcast %cst_42 : f32 to vector<2x32xf32>
    %87 = arith.maximumf %85, %86 : vector<2x32xf32>
    %cst_43 = arith.constant 9.99999974E-6 : f32
    %88 = vector.broadcast %cst_43 : f32 to vector<2x32xf32>
    %89 = arith.addf %87, %88 : vector<2x32xf32>
    %90 = math.rsqrt %89 : vector<2x32xf32>
    %cst_44 = arith.constant dense<0.000000e+00> : vector<2x64xf32>
    %91 = tpu.matmul %71, %73, %cst_44 {dimension_numbers = #tpu.dot_dimension_numbers<[1], [0], [0], [1], [0, 0, 1, 1], [], []>} : vector<2x32xbf16>, vector<32x64xbf16>, vector<2x64xf32> -> vector<2x64xf32>
    %92 = vector.extract_strided_slice %91 {offsets = [0, 0], sizes = [2, 32], strides = [1, 1]} : vector<2x64xf32> to vector<2x32xf32>
    %93 = vector.broadcast %68 : vector<1x32xf32> to vector<2x32xf32>
    %94 = arith.addf %92, %93 : vector<2x32xf32>
    %95 = vector.extract_strided_slice %91 {offsets = [0, 32], sizes = [2, 32], strides = [1, 1]} : vector<2x64xf32> to vector<2x32xf32>
    %96 = vector.broadcast %69 : vector<1x32xf32> to vector<2x32xf32>
    %97 = arith.addf %95, %96 : vector<2x32xf32>
    %cst_45 = arith.constant 1.000000e+00 : f32
    %98 = vector.broadcast %cst_45 : f32 to vector<2x32xf32>
    %99 = arith.addf %94, %98 : vector<2x32xf32>
    %100 = arith.mulf %90, %99 : vector<2x32xf32>
    %101 = arith.mulf %81, %100 : vector<2x32xf32>
    %102 = arith.subf %97, %101 : vector<2x32xf32>
    %103 = arith.truncf %100 : vector<2x32xf32> to vector<2x32xbf16>
    %cst_46 = arith.constant dense<0.000000e+00> : vector<8x32xf32>
    %104 = tpu.matmul %3, %103, %cst_46 {dimension_numbers = #tpu.dot_dimension_numbers<[1], [0], [0], [1], [0, 0, 1, 1], [], []>} : vector<8x2xbf16>, vector<2x32xbf16>, vector<8x32xf32> -> vector<8x32xf32>
    %105 = arith.truncf %102 : vector<2x32xf32> to vector<2x32xbf16>
    %cst_47 = arith.constant dense<0.000000e+00> : vector<8x32xf32>
    %106 = tpu.matmul %3, %105, %cst_47 {dimension_numbers = #tpu.dot_dimension_numbers<[1], [0], [0], [1], [0, 0, 1, 1], [], []>} : vector<8x2xbf16>, vector<2x32xbf16>, vector<8x32xf32> -> vector<8x32xf32>
    %107 = arith.mulf %80, %104 : vector<8x32xf32>
    %108 = arith.addf %107, %106 : vector<8x32xf32>
    %c0_48 = arith.constant 0 : index
    %c0_49 = arith.constant 0 : index
    %109 = vector.load %arg12[%c0_48, %c0_49] : memref<8x16xf32, #tpu.memory_space<vmem>>, vector<8x16xf32>
    %c0_50 = arith.constant 0 : index
    %c0_51 = arith.constant 0 : index
    %110 = vector.load %arg3[%c0_50, %c0_51] : memref<16x2xf32, #tpu.memory_space<vmem>>, vector<16x2xf32>
    %c0_52 = arith.constant 0 : index
    %c0_53 = arith.constant 0 : index
    %111 = vector.load %arg18[%c0_52, %c0_53] : memref<2x16xf32, #tpu.memory_space<vmem>>, vector<2x16xf32>
    %c0_54 = arith.constant 0 : index
    %c0_55 = arith.constant 0 : index
    %112 = vector.load %arg19[%c0_54, %c0_55] : memref<16x2xbf16, #tpu.memory_space<vmem>>, vector<16x2xbf16>
    %113 = arith.truncf %108 : vector<8x32xf32> to vector<8x32xbf16>
    %c0_56 = arith.constant 0 : index
    %c0_57 = arith.constant 0 : index
    %c0_58 = arith.constant 0 : index
    %114 = vector.load %arg16[%c0_56, %c0_57, %c0_58] : memref<3x16x8xbf16, #tpu.memory_space<vmem>>, vector<1x16x8xbf16>
    %115 = vector.shape_cast %114 : vector<1x16x8xbf16> to vector<16x8xbf16>
    %cst_59 = arith.constant dense<0.000000e+00> : vector<16x32xf32>
    %116 = tpu.matmul %115, %113, %cst_59 {dimension_numbers = #tpu.dot_dimension_numbers<[1], [0], [0], [1], [0, 0, 1, 1], [], []>} : vector<16x8xbf16>, vector<8x32xbf16>, vector<16x32xf32> -> vector<16x32xf32>
    %117 = arith.truncf %116 : vector<16x32xf32> to vector<16x32xbf16>
    %c1_60 = arith.constant 1 : index
    %c0_61 = arith.constant 0 : index
    %c0_62 = arith.constant 0 : index
    %118 = vector.load %arg16[%c1_60, %c0_61, %c0_62] : memref<3x16x8xbf16, #tpu.memory_space<vmem>>, vector<1x16x8xbf16>
    %119 = vector.shape_cast %118 : vector<1x16x8xbf16> to vector<16x8xbf16>
    %cst_63 = arith.constant dense<0.000000e+00> : vector<16x32xf32>
    %120 = tpu.matmul %119, %113, %cst_63 {dimension_numbers = #tpu.dot_dimension_numbers<[1], [0], [0], [1], [0, 0, 1, 1], [], []>} : vector<16x8xbf16>, vector<8x32xbf16>, vector<16x32xf32> -> vector<16x32xf32>
    %121 = arith.truncf %120 : vector<16x32xf32> to vector<16x32xbf16>
    %c2 = arith.constant 2 : index
    %c0_64 = arith.constant 0 : index
    %c0_65 = arith.constant 0 : index
    %122 = vector.load %arg16[%c2, %c0_64, %c0_65] : memref<3x16x8xbf16, #tpu.memory_space<vmem>>, vector<1x16x8xbf16>
    %123 = vector.shape_cast %122 : vector<1x16x8xbf16> to vector<16x8xbf16>
    %cst_66 = arith.constant dense<0.000000e+00> : vector<16x32xf32>
    %124 = tpu.matmul %123, %113, %cst_66 {dimension_numbers = #tpu.dot_dimension_numbers<[1], [0], [0], [1], [0, 0, 1, 1], [], []>} : vector<16x8xbf16>, vector<8x32xbf16>, vector<16x32xf32> -> vector<16x32xf32>
    %125 = arith.truncf %124 : vector<16x32xf32> to vector<16x32xbf16>
    %126 = vector.extract_strided_slice %109 {offsets = [0, 0], sizes = [1, 16], strides = [1, 1]} : vector<8x16xf32> to vector<1x16xf32>
    %127 = tpu.concatenate %117, %121, %125 in 1 : vector<16x32xbf16>, vector<16x32xbf16>, vector<16x32xbf16> -> vector<16x96xbf16>
    %c0_67 = arith.constant 0 : index
    %c0_68 = arith.constant 0 : index
    %128 = vector.load %arg14[%c0_67, %c0_68] : memref<96x16xbf16, #tpu.memory_space<vmem>>, vector<96x16xbf16>
    %cst_69 = arith.constant dense<0.000000e+00> : vector<16x16xf32>
    %129 = tpu.matmul %127, %128, %cst_69 {dimension_numbers = #tpu.dot_dimension_numbers<[1], [0], [0], [1], [0, 0, 1, 1], [], []>} : vector<16x96xbf16>, vector<96x16xbf16>, vector<16x16xf32> -> vector<16x16xf32>
    %130 = vector.broadcast %126 : vector<1x16xf32> to vector<16x16xf32>
    %131 = arith.addf %129, %130 : vector<16x16xf32>
    %132 = vector.extract_strided_slice %110 {offsets = [0, 0], sizes = [16, 1], strides = [1, 1]} : vector<16x2xf32> to vector<16x1xf32>
    %133 = vector.extract_strided_slice %109 {offsets = [1, 0], sizes = [1, 16], strides = [1, 1]} : vector<8x16xf32> to vector<1x16xf32>
    %134 = vector.extract_strided_slice %109 {offsets = [2, 0], sizes = [1, 16], strides = [1, 1]} : vector<8x16xf32> to vector<1x16xf32>
    %135 = vector.extract_strided_slice %109 {offsets = [3, 0], sizes = [1, 16], strides = [1, 1]} : vector<8x16xf32> to vector<1x16xf32>
    %c0_70 = arith.constant 0 : index
    %c2_71 = arith.constant 2 : index
    %c0_72 = arith.constant 0 : index
    %136 = vector.load %arg1[%c0_70, %c2_71, %c0_72] : memref<2x6x32xbf16, #tpu.memory_space<vmem>>, vector<2x1x32xbf16>
    %137 = vector.shape_cast %136 : vector<2x1x32xbf16> to vector<2x32xbf16>
    %c0_73 = arith.constant 0 : index
    %c0_74 = arith.constant 0 : index
    %c0_75 = arith.constant 0 : index
    %138 = vector.load %arg13[%c0_73, %c0_74, %c0_75] : memref<2x32x32xbf16, #tpu.memory_space<vmem>>, vector<1x32x32xbf16>
    %139 = vector.shape_cast %138 : vector<1x32x32xbf16> to vector<32x32xbf16>
    %140 = vector.broadcast %132 : vector<16x1xf32> to vector<16x16xf32>
    %141 = vector.broadcast %133 : vector<1x16xf32> to vector<16x16xf32>
    %142 = arith.mulf %140, %141 : vector<16x16xf32>
    %143 = arith.addf %131, %142 : vector<16x16xf32>
    %cst_76 = arith.constant 2.000000e-01 : f32
    %144 = vector.broadcast %cst_76 : f32 to vector<16x16xf32>
    %145 = arith.mulf %144, %143 : vector<16x16xf32>
    %146 = arith.maximumf %143, %145 : vector<16x16xf32>
    %cst_77 = arith.constant dense<0.000000e+00> : vector<2x16xf32>
    %147 = tpu.matmul %111, %146, %cst_77 {dimension_numbers = #tpu.dot_dimension_numbers<[1], [0], [0], [1], [0, 0, 1, 1], [], []>} : vector<2x16xf32>, vector<16x16xf32>, vector<2x16xf32> -> vector<2x16xf32>
    %148 = arith.mulf %146, %146 : vector<16x16xf32>
    %cst_78 = arith.constant dense<0.000000e+00> : vector<2x16xf32>
    %149 = tpu.matmul %111, %148, %cst_78 {dimension_numbers = #tpu.dot_dimension_numbers<[1], [0], [0], [1], [0, 0, 1, 1], [], []>} : vector<2x16xf32>, vector<16x16xf32>, vector<2x16xf32> -> vector<2x16xf32>
    %150 = arith.mulf %147, %147 : vector<2x16xf32>
    %151 = arith.subf %149, %150 : vector<2x16xf32>
    %cst_79 = arith.constant 0.000000e+00 : f32
    %152 = vector.broadcast %cst_79 : f32 to vector<2x16xf32>
    %153 = arith.maximumf %151, %152 : vector<2x16xf32>
    %cst_80 = arith.constant 9.99999974E-6 : f32
    %154 = vector.broadcast %cst_80 : f32 to vector<2x16xf32>
    %155 = arith.addf %153, %154 : vector<2x16xf32>
    %156 = math.rsqrt %155 : vector<2x16xf32>
    %cst_81 = arith.constant dense<0.000000e+00> : vector<2x32xf32>
    %157 = tpu.matmul %137, %139, %cst_81 {dimension_numbers = #tpu.dot_dimension_numbers<[1], [0], [0], [1], [0, 0, 1, 1], [], []>} : vector<2x32xbf16>, vector<32x32xbf16>, vector<2x32xf32> -> vector<2x32xf32>
    %158 = vector.extract_strided_slice %157 {offsets = [0, 0], sizes = [2, 16], strides = [1, 1]} : vector<2x32xf32> to vector<2x16xf32>
    %159 = vector.broadcast %134 : vector<1x16xf32> to vector<2x16xf32>
    %160 = arith.addf %158, %159 : vector<2x16xf32>
    %161 = vector.extract_strided_slice %157 {offsets = [0, 16], sizes = [2, 16], strides = [1, 1]} : vector<2x32xf32> to vector<2x16xf32>
    %162 = vector.broadcast %135 : vector<1x16xf32> to vector<2x16xf32>
    %163 = arith.addf %161, %162 : vector<2x16xf32>
    %cst_82 = arith.constant 1.000000e+00 : f32
    %164 = vector.broadcast %cst_82 : f32 to vector<2x16xf32>
    %165 = arith.addf %160, %164 : vector<2x16xf32>
    %166 = arith.mulf %156, %165 : vector<2x16xf32>
    %167 = arith.mulf %147, %166 : vector<2x16xf32>
    %168 = arith.subf %163, %167 : vector<2x16xf32>
    %169 = arith.truncf %166 : vector<2x16xf32> to vector<2x16xbf16>
    %cst_83 = arith.constant dense<0.000000e+00> : vector<16x16xf32>
    %170 = tpu.matmul %112, %169, %cst_83 {dimension_numbers = #tpu.dot_dimension_numbers<[1], [0], [0], [1], [0, 0, 1, 1], [], []>} : vector<16x2xbf16>, vector<2x16xbf16>, vector<16x16xf32> -> vector<16x16xf32>
    %171 = arith.truncf %168 : vector<2x16xf32> to vector<2x16xbf16>
    %cst_84 = arith.constant dense<0.000000e+00> : vector<16x16xf32>
    %172 = tpu.matmul %112, %171, %cst_84 {dimension_numbers = #tpu.dot_dimension_numbers<[1], [0], [0], [1], [0, 0, 1, 1], [], []>} : vector<16x2xbf16>, vector<2x16xbf16>, vector<16x16xf32> -> vector<16x16xf32>
    %173 = arith.mulf %146, %170 : vector<16x16xf32>
    %174 = arith.addf %173, %172 : vector<16x16xf32>
    %175 = arith.truncf %174 : vector<16x16xf32> to vector<16x16xbf16>
    %c0_85 = arith.constant 0 : index
    %c0_86 = arith.constant 0 : index
    %c0_87 = arith.constant 0 : index
    %176 = vector.load %arg17[%c0_85, %c0_86, %c0_87] : memref<2x16x16xbf16, #tpu.memory_space<vmem>>, vector<1x16x16xbf16>
    %177 = vector.shape_cast %176 : vector<1x16x16xbf16> to vector<16x16xbf16>
    %cst_88 = arith.constant dense<0.000000e+00> : vector<16x16xf32>
    %178 = tpu.matmul %177, %175, %cst_88 {dimension_numbers = #tpu.dot_dimension_numbers<[1], [0], [0], [1], [0, 0, 1, 1], [], []>} : vector<16x16xbf16>, vector<16x16xbf16>, vector<16x16xf32> -> vector<16x16xf32>
    %179 = arith.truncf %178 : vector<16x16xf32> to vector<16x16xbf16>
    %c1_89 = arith.constant 1 : index
    %c0_90 = arith.constant 0 : index
    %c0_91 = arith.constant 0 : index
    %180 = vector.load %arg17[%c1_89, %c0_90, %c0_91] : memref<2x16x16xbf16, #tpu.memory_space<vmem>>, vector<1x16x16xbf16>
    %181 = vector.shape_cast %180 : vector<1x16x16xbf16> to vector<16x16xbf16>
    %cst_92 = arith.constant dense<0.000000e+00> : vector<16x16xf32>
    %182 = tpu.matmul %181, %175, %cst_92 {dimension_numbers = #tpu.dot_dimension_numbers<[1], [0], [0], [1], [0, 0, 1, 1], [], []>} : vector<16x16xbf16>, vector<16x16xbf16>, vector<16x16xf32> -> vector<16x16xf32>
    %183 = arith.truncf %182 : vector<16x16xf32> to vector<16x16xbf16>
    %184 = vector.extract_strided_slice %109 {offsets = [4, 0], sizes = [1, 16], strides = [1, 1]} : vector<8x16xf32> to vector<1x16xf32>
    %185 = tpu.concatenate %179, %175, %183 in 1 : vector<16x16xbf16>, vector<16x16xbf16>, vector<16x16xbf16> -> vector<16x48xbf16>
    %c0_93 = arith.constant 0 : index
    %c0_94 = arith.constant 0 : index
    %186 = vector.load %arg15[%c0_93, %c0_94] : memref<48x16xbf16, #tpu.memory_space<vmem>>, vector<48x16xbf16>
    %cst_95 = arith.constant dense<0.000000e+00> : vector<16x16xf32>
    %187 = tpu.matmul %185, %186, %cst_95 {dimension_numbers = #tpu.dot_dimension_numbers<[1], [0], [0], [1], [0, 0, 1, 1], [], []>} : vector<16x48xbf16>, vector<48x16xbf16>, vector<16x16xf32> -> vector<16x16xf32>
    %188 = vector.broadcast %184 : vector<1x16xf32> to vector<16x16xf32>
    %189 = arith.addf %187, %188 : vector<16x16xf32>
    %190 = vector.extract_strided_slice %110 {offsets = [0, 1], sizes = [16, 1], strides = [1, 1]} : vector<16x2xf32> to vector<16x1xf32>
    %191 = vector.extract_strided_slice %109 {offsets = [5, 0], sizes = [1, 16], strides = [1, 1]} : vector<8x16xf32> to vector<1x16xf32>
    %192 = vector.extract_strided_slice %109 {offsets = [6, 0], sizes = [1, 16], strides = [1, 1]} : vector<8x16xf32> to vector<1x16xf32>
    %193 = vector.extract_strided_slice %109 {offsets = [7, 0], sizes = [1, 16], strides = [1, 1]} : vector<8x16xf32> to vector<1x16xf32>
    %c0_96 = arith.constant 0 : index
    %c3 = arith.constant 3 : index
    %c0_97 = arith.constant 0 : index
    %194 = vector.load %arg1[%c0_96, %c3, %c0_97] : memref<2x6x32xbf16, #tpu.memory_space<vmem>>, vector<2x1x32xbf16>
    %195 = vector.shape_cast %194 : vector<2x1x32xbf16> to vector<2x32xbf16>
    %c1_98 = arith.constant 1 : index
    %c0_99 = arith.constant 0 : index
    %c0_100 = arith.constant 0 : index
    %196 = vector.load %arg13[%c1_98, %c0_99, %c0_100] : memref<2x32x32xbf16, #tpu.memory_space<vmem>>, vector<1x32x32xbf16>
    %197 = vector.shape_cast %196 : vector<1x32x32xbf16> to vector<32x32xbf16>
    %198 = vector.broadcast %190 : vector<16x1xf32> to vector<16x16xf32>
    %199 = vector.broadcast %191 : vector<1x16xf32> to vector<16x16xf32>
    %200 = arith.mulf %198, %199 : vector<16x16xf32>
    %201 = arith.addf %189, %200 : vector<16x16xf32>
    %cst_101 = arith.constant 2.000000e-01 : f32
    %202 = vector.broadcast %cst_101 : f32 to vector<16x16xf32>
    %203 = arith.mulf %202, %201 : vector<16x16xf32>
    %204 = arith.maximumf %201, %203 : vector<16x16xf32>
    %cst_102 = arith.constant dense<0.000000e+00> : vector<2x16xf32>
    %205 = tpu.matmul %111, %204, %cst_102 {dimension_numbers = #tpu.dot_dimension_numbers<[1], [0], [0], [1], [0, 0, 1, 1], [], []>} : vector<2x16xf32>, vector<16x16xf32>, vector<2x16xf32> -> vector<2x16xf32>
    %206 = arith.mulf %204, %204 : vector<16x16xf32>
    %cst_103 = arith.constant dense<0.000000e+00> : vector<2x16xf32>
    %207 = tpu.matmul %111, %206, %cst_103 {dimension_numbers = #tpu.dot_dimension_numbers<[1], [0], [0], [1], [0, 0, 1, 1], [], []>} : vector<2x16xf32>, vector<16x16xf32>, vector<2x16xf32> -> vector<2x16xf32>
    %208 = arith.mulf %205, %205 : vector<2x16xf32>
    %209 = arith.subf %207, %208 : vector<2x16xf32>
    %cst_104 = arith.constant 0.000000e+00 : f32
    %210 = vector.broadcast %cst_104 : f32 to vector<2x16xf32>
    %211 = arith.maximumf %209, %210 : vector<2x16xf32>
    %cst_105 = arith.constant 9.99999974E-6 : f32
    %212 = vector.broadcast %cst_105 : f32 to vector<2x16xf32>
    %213 = arith.addf %211, %212 : vector<2x16xf32>
    %214 = math.rsqrt %213 : vector<2x16xf32>
    %cst_106 = arith.constant dense<0.000000e+00> : vector<2x32xf32>
    %215 = tpu.matmul %195, %197, %cst_106 {dimension_numbers = #tpu.dot_dimension_numbers<[1], [0], [0], [1], [0, 0, 1, 1], [], []>} : vector<2x32xbf16>, vector<32x32xbf16>, vector<2x32xf32> -> vector<2x32xf32>
    %216 = vector.extract_strided_slice %215 {offsets = [0, 0], sizes = [2, 16], strides = [1, 1]} : vector<2x32xf32> to vector<2x16xf32>
    %217 = vector.broadcast %192 : vector<1x16xf32> to vector<2x16xf32>
    %218 = arith.addf %216, %217 : vector<2x16xf32>
    %219 = vector.extract_strided_slice %215 {offsets = [0, 16], sizes = [2, 16], strides = [1, 1]} : vector<2x32xf32> to vector<2x16xf32>
    %220 = vector.broadcast %193 : vector<1x16xf32> to vector<2x16xf32>
    %221 = arith.addf %219, %220 : vector<2x16xf32>
    %cst_107 = arith.constant 1.000000e+00 : f32
    %222 = vector.broadcast %cst_107 : f32 to vector<2x16xf32>
    %223 = arith.addf %218, %222 : vector<2x16xf32>
    %224 = arith.mulf %214, %223 : vector<2x16xf32>
    %225 = arith.mulf %205, %224 : vector<2x16xf32>
    %226 = arith.subf %221, %225 : vector<2x16xf32>
    %227 = arith.truncf %224 : vector<2x16xf32> to vector<2x16xbf16>
    %cst_108 = arith.constant dense<0.000000e+00> : vector<16x16xf32>
    %228 = tpu.matmul %112, %227, %cst_108 {dimension_numbers = #tpu.dot_dimension_numbers<[1], [0], [0], [1], [0, 0, 1, 1], [], []>} : vector<16x2xbf16>, vector<2x16xbf16>, vector<16x16xf32> -> vector<16x16xf32>
    %229 = arith.truncf %226 : vector<2x16xf32> to vector<2x16xbf16>
    %cst_109 = arith.constant dense<0.000000e+00> : vector<16x16xf32>
    %230 = tpu.matmul %112, %229, %cst_109 {dimension_numbers = #tpu.dot_dimension_numbers<[1], [0], [0], [1], [0, 0, 1, 1], [], []>} : vector<16x2xbf16>, vector<2x16xbf16>, vector<16x16xf32> -> vector<16x16xf32>
    %231 = arith.mulf %204, %228 : vector<16x16xf32>
    %232 = arith.addf %231, %230 : vector<16x16xf32>
    %c0_110 = arith.constant 0 : index
    %c0_111 = arith.constant 0 : index
    %233 = vector.load %arg20[%c0_110, %c0_111] : memref<4x32xbf16, #tpu.memory_space<vmem>>, vector<4x32xbf16>
    %cst_112 = arith.constant dense<0.000000e+00> : vector<4x16xf32>
    %234 = tpu.matmul %233, %121, %cst_112 {dimension_numbers = #tpu.dot_dimension_numbers<[1], [1], [0], [0], [0, 0, 1, 0], [], []>} : vector<4x32xbf16>, vector<16x32xbf16>, vector<4x16xf32> -> vector<4x16xf32>
    %c0_113 = arith.constant 0 : index
    %c0_114 = arith.constant 0 : index
    %235 = vector.load %arg21[%c0_113, %c0_114] : memref<4x1xf32, #tpu.memory_space<vmem>>, vector<4x1xf32>
    %236 = vector.broadcast %235 : vector<4x1xf32> to vector<4x16xf32>
    %237 = arith.addf %234, %236 : vector<4x16xf32>
    %238 = arith.truncf %232 : vector<16x16xf32> to vector<16x16xbf16>
    %c0_115 = arith.constant 0 : index
    %c0_116 = arith.constant 0 : index
    %239 = vector.load %arg22[%c0_115, %c0_116] : memref<4x16xbf16, #tpu.memory_space<vmem>>, vector<4x16xbf16>
    %cst_117 = arith.constant dense<0.000000e+00> : vector<4x16xf32>
    %240 = tpu.matmul %239, %238, %cst_117 {dimension_numbers = #tpu.dot_dimension_numbers<[1], [1], [0], [0], [0, 0, 1, 0], [], []>} : vector<4x16xbf16>, vector<16x16xbf16>, vector<4x16xf32> -> vector<4x16xf32>
    %c0_118 = arith.constant 0 : index
    %c0_119 = arith.constant 0 : index
    %241 = vector.load %arg23[%c0_118, %c0_119] : memref<4x1xf32, #tpu.memory_space<vmem>>, vector<4x1xf32>
    %242 = vector.broadcast %241 : vector<4x1xf32> to vector<4x16xf32>
    %243 = arith.addf %240, %242 : vector<4x16xf32>
    %c0_120 = arith.constant 0 : index
    %c0_121 = arith.constant 0 : index
    %244 = vector.load %arg4[%c0_120, %c0_121] : memref<1x1xf32, #tpu.memory_space<vmem>>, vector<1x1xf32>
    %245 = vector.extract %244[0, 0] : f32 from vector<1x1xf32>
    %246 = vector.broadcast %245 : f32 to vector<4x16xf32>
    %247 = arith.mulf %246, %243 : vector<4x16xf32>
    %cst_122 = arith.constant 1.000000e+00 : f32
    %248 = arith.subf %cst_122, %245 : f32
    %249 = vector.broadcast %248 : f32 to vector<4x16xf32>
    %250 = arith.mulf %249, %237 : vector<4x16xf32>
    %251 = arith.addf %247, %250 : vector<4x16xf32>
    %c0_123 = arith.constant 0 : index
    %c0_124 = arith.constant 0 : index
    %c0_125 = arith.constant 0 : index
    %252 = vector.load %arg24[%c0_123, %c0_124, %c0_125] : memref<1x4x16xf32, #tpu.memory_space<vmem>>, vector<1x4x16xf32>
    %253 = vector.shape_cast %252 : vector<1x4x16xf32> to vector<4x16xf32>
    %254 = vector.shape_cast %251 : vector<4x16xf32> to vector<1x4x16xf32>
    tpu.vector_store %arg24[%c0_123, %c0_124, %c0_125], %254 {strides = array<i32>} : memref<1x4x16xf32, #tpu.memory_space<vmem>>, vector<1x4x16xf32>,
    return
  }
  func.func @transform_0(%arg0: i32) -> (i32, i32, i32) {
    %c0_i32 = arith.constant 0 : i32
    %c0_i32_0 = arith.constant 0 : i32
    %c0_i32_1 = arith.constant 0 : i32
    return %arg0, %c0_i32, %c0_i32_0 : i32, i32, i32
  }
  func.func @transform_1(%arg0: i32) -> (i32, i32) {
    %c0_i32 = arith.constant 0 : i32
    %c0_i32_0 = arith.constant 0 : i32
    return %arg0, %c0_i32 : i32, i32
  }
  func.func @transform_2(%arg0: i32) -> (i32, i32) {
    %c0_i32 = arith.constant 0 : i32
    %c0_i32_0 = arith.constant 0 : i32
    return %arg0, %c0_i32 : i32, i32
  }
  func.func @transform_3(%arg0: i32) -> (i32, i32) {
    %c0_i32 = arith.constant 0 : i32
    %c0_i32_0 = arith.constant 0 : i32
    %c0_i32_1 = arith.constant 0 : i32
    return %c0_i32, %c0_i32_0 : i32, i32
  }
  func.func @transform_4(%arg0: i32) -> (i32, i32) {
    %c0_i32 = arith.constant 0 : i32
    %c0_i32_0 = arith.constant 0 : i32
    %c0_i32_1 = arith.constant 0 : i32
    return %c0_i32, %c0_i32_0 : i32, i32
  }
  func.func @transform_5(%arg0: i32) -> (i32, i32) {
    %c0_i32 = arith.constant 0 : i32
    %c0_i32_0 = arith.constant 0 : i32
    %c0_i32_1 = arith.constant 0 : i32
    return %c0_i32, %c0_i32_0 : i32, i32
  }
  func.func @transform_6(%arg0: i32) -> (i32, i32, i32) {
    %c0_i32 = arith.constant 0 : i32
    %c0_i32_0 = arith.constant 0 : i32
    %c0_i32_1 = arith.constant 0 : i32
    %c0_i32_2 = arith.constant 0 : i32
    return %c0_i32, %c0_i32_0, %c0_i32_1 : i32, i32, i32
  }
  func.func @transform_7(%arg0: i32) -> (i32, i32) {
    %c0_i32 = arith.constant 0 : i32
    %c0_i32_0 = arith.constant 0 : i32
    %c0_i32_1 = arith.constant 0 : i32
    return %c0_i32, %c0_i32_0 : i32, i32
  }
  func.func @transform_8(%arg0: i32) -> (i32, i32, i32) {
    %c0_i32 = arith.constant 0 : i32
    %c0_i32_0 = arith.constant 0 : i32
    %c0_i32_1 = arith.constant 0 : i32
    %c0_i32_2 = arith.constant 0 : i32
    return %c0_i32, %c0_i32_0, %c0_i32_1 : i32, i32, i32
  }
  func.func @transform_9(%arg0: i32) -> (i32, i32) {
    %c0_i32 = arith.constant 0 : i32
    %c0_i32_0 = arith.constant 0 : i32
    %c0_i32_1 = arith.constant 0 : i32
    return %c0_i32, %c0_i32_0 : i32, i32
  }
  func.func @transform_10(%arg0: i32) -> (i32, i32) {
    %c0_i32 = arith.constant 0 : i32
    %c0_i32_0 = arith.constant 0 : i32
    %c0_i32_1 = arith.constant 0 : i32
    return %c0_i32, %c0_i32_0 : i32, i32
  }
  func.func @transform_11(%arg0: i32) -> (i32, i32) {
    %c0_i32 = arith.constant 0 : i32
    %c0_i32_0 = arith.constant 0 : i32
    %c0_i32_1 = arith.constant 0 : i32
    return %c0_i32, %c0_i32_0 : i32, i32
  }
  func.func @transform_12(%arg0: i32) -> (i32, i32, i32) {
    %c0_i32 = arith.constant 0 : i32
    %c0_i32_0 = arith.constant 0 : i32
    %c0_i32_1 = arith.constant 0 : i32
    %c0_i32_2 = arith.constant 0 : i32
    return %c0_i32, %c0_i32_0, %c0_i32_1 : i32, i32, i32
  }
  func.func @transform_13(%arg0: i32) -> (i32, i32) {
    %c0_i32 = arith.constant 0 : i32
    %c0_i32_0 = arith.constant 0 : i32
    %c0_i32_1 = arith.constant 0 : i32
    return %c0_i32, %c0_i32_0 : i32, i32
  }
  func.func @transform_14(%arg0: i32) -> (i32, i32) {
    %c0_i32 = arith.constant 0 : i32
    %c0_i32_0 = arith.constant 0 : i32
    %c0_i32_1 = arith.constant 0 : i32
    return %c0_i32, %c0_i32_0 : i32, i32
  }
  func.func @transform_15(%arg0: i32) -> (i32, i32, i32) {
    %c0_i32 = arith.constant 0 : i32
    %c0_i32_0 = arith.constant 0 : i32
    %c0_i32_1 = arith.constant 0 : i32
    %c0_i32_2 = arith.constant 0 : i32
    return %c0_i32, %c0_i32_0, %c0_i32_1 : i32, i32, i32
  }
  func.func @transform_16(%arg0: i32) -> (i32, i32, i32) {
    %c0_i32 = arith.constant 0 : i32
    %c0_i32_0 = arith.constant 0 : i32
    %c0_i32_1 = arith.constant 0 : i32
    %c0_i32_2 = arith.constant 0 : i32
    return %c0_i32, %c0_i32_0, %c0_i32_1 : i32, i32, i32
  }
  func.func @transform_17(%arg0: i32) -> (i32, i32) {
    %c0_i32 = arith.constant 0 : i32
    %c0_i32_0 = arith.constant 0 : i32
    %c0_i32_1 = arith.constant 0 : i32
    return %c0_i32, %c0_i32_0 : i32, i32
  }
  func.func @transform_18(%arg0: i32) -> (i32, i32) {
    %c0_i32 = arith.constant 0 : i32
    %c0_i32_0 = arith.constant 0 : i32
    %c0_i32_1 = arith.constant 0 : i32
    return %c0_i32, %c0_i32_0 : i32, i32
  }
  func.func @transform_19(%arg0: i32) -> (i32, i32) {
    %c0_i32 = arith.constant 0 : i32
    %c0_i32_0 = arith.constant 0 : i32
    %c0_i32_1 = arith.constant 0 : i32
    return %c0_i32, %c0_i32_0 : i32, i32
  }
  func.func @transform_20(%arg0: i32) -> (i32, i32) {
    %c0_i32 = arith.constant 0 : i32
    %c0_i32_0 = arith.constant 0 : i32
    %c0_i32_1 = arith.constant 0 : i32
    return %c0_i32, %c0_i32_0 : i32, i32
  }
  func.func @transform_21(%arg0: i32) -> (i32, i32) {
    %c0_i32 = arith.constant 0 : i32
    %c0_i32_0 = arith.constant 0 : i32
    %c0_i32_1 = arith.constant 0 : i32
    return %c0_i32, %c0_i32_0 : i32, i32
  }
  func.func @transform_22(%arg0: i32) -> (i32, i32) {
    %c0_i32 = arith.constant 0 : i32
    %c0_i32_0 = arith.constant 0 : i32
    %c0_i32_1 = arith.constant 0 : i32
    return %c0_i32, %c0_i32_0 : i32, i32
  }
  func.func @transform_23(%arg0: i32) -> (i32, i32, i32) {
    %c0_i32 = arith.constant 0 : i32
    %c0_i32_0 = arith.constant 0 : i32
    %c0_i32_1 = arith.constant 0 : i32
    return %arg0, %c0_i32, %c0_i32_0 : i32, i32, i32
  }
}

</mosaic_0001>

<llo_original>
// kernel: gsynthesis_forward.1
$region0: #{gsynthesis_forward.1}
  #allocation0 [shape = 'u32[]', space=smem, size = 0x4, offset = 0x4, fixed_abs, tag = 'smem constant byte address 0x4 - core index']
  #allocation1 [shape = 'u32[144,128]{1,0:T(1,128)}', space=vmem, size = 0x12000, scoped, tag = 'internal scratch']
  #allocation2 [shape = 'f32[1,1]{1,0:T(1,128)S(1)}', space=vmem, size = 0x200, scoped, tag = 'scoped memory for gsynthesis_forward.1']
  %s0 = inlined_call_operand.vmem [shape: bf16[2,6,32], index: 0, kind: input, shape index: {}]
  %s1 = inlined_call_operand.vmem [shape: f32[8,2], index: 1, kind: input, shape index: {}]
  %s2 = inlined_call_operand.vmem [shape: f32[16,2], index: 2, kind: input, shape index: {}]
  %s3 = inlined_call_operand.<no memory space> [shape: f32[1,1], index: 3, kind: input, shape index: {}]
  %s4 = inlined_call_operand.vmem [shape: f32[8,32], index: 4, kind: input, shape index: {}]
  %s5 = inlined_call_operand.vmem [shape: f32[8,32], index: 5, kind: input, shape index: {}]
  %s6 = inlined_call_operand.vmem [shape: bf16[2,32,64], index: 6, kind: input, shape index: {}]
  %s7 = inlined_call_operand.vmem [shape: bf16[96,32], index: 7, kind: input, shape index: {}]
  %s8 = inlined_call_operand.vmem [shape: bf16[2,8,8], index: 8, kind: input, shape index: {}]
  %s9 = inlined_call_operand.vmem [shape: f32[2,8], index: 9, kind: input, shape index: {}]
  %s10 = inlined_call_operand.vmem [shape: bf16[8,2], index: 10, kind: input, shape index: {}]
  %s11 = inlined_call_operand.vmem [shape: f32[8,16], index: 11, kind: input, shape index: {}]
  %s12 = inlined_call_operand.vmem [shape: bf16[2,32,32], index: 12, kind: input, shape index: {}]
  %s13 = inlined_call_operand.vmem [shape: bf16[96,16], index: 13, kind: input, shape index: {}]
  %s14 = inlined_call_operand.vmem [shape: bf16[48,16], index: 14, kind: input, shape index: {}]
  %s15 = inlined_call_operand.vmem [shape: bf16[3,16,8], index: 15, kind: input, shape index: {}]
  %s16 = inlined_call_operand.vmem [shape: bf16[2,16,16], index: 16, kind: input, shape index: {}]
  %s17 = inlined_call_operand.vmem [shape: f32[2,16], index: 17, kind: input, shape index: {}]
  %s18 = inlined_call_operand.vmem [shape: bf16[16,2], index: 18, kind: input, shape index: {}]
  %s19 = inlined_call_operand.vmem [shape: bf16[4,32], index: 19, kind: input, shape index: {}]
  %s20 = inlined_call_operand.vmem [shape: f32[4,1], index: 20, kind: input, shape index: {}]
  %s21 = inlined_call_operand.vmem [shape: bf16[4,16], index: 21, kind: input, shape index: {}]
  %s22 = inlined_call_operand.vmem [shape: f32[4,1], index: 22, kind: input, shape index: {}]
  %s23 = inlined_call_operand.vmem [shape: f32[1,4,16], index: 23, kind: output, shape index: {}]
  %s24 = sld [smem:[#allocation0]]
  $region102: #{gsynthesis_forward.1} parent=0
    _
  %s26 = ssub.s32 1, %s24
  %s27 = scalar_select 0, %s26, %s24
  %v28 = vstv %s3
  %29 = vst [vmem:[#allocation2] sm:$0x1] %v28
  // Predicated region
  $region2: #{gsynthesis_forward.1} parent=0 // pred_check
    _
  $region3: #{gsynthesis_forward.1} parent=0 // pred_check_branch
    %31 = sbr.rel (0) target = $region5
  $region4: #{gsynthesis_forward.1} parent=0 // pred_region
    _
  $region5: #{gsynthesis_forward.1} parent=0 // pred_fallthru
    _
  // Predicated region
  $region6: #{gsynthesis_forward.1} parent=0 // pred_check
    _
  $region7: #{gsynthesis_forward.1} parent=0 // pred_check_branch
    %33 = sbr.rel (0) target = $region9
  $region8: #{gsynthesis_forward.1} parent=0 // pred_region
    _
  $region9: #{gsynthesis_forward.1} parent=0 // pred_fallthru
    _
  // Predicated region
  $region10: #{gsynthesis_forward.1} parent=0 // pred_check
    _
  $region11: #{gsynthesis_forward.1} parent=0 // pred_check_branch
    %35 = sbr.rel (0) target = $region13
  $region12: #{gsynthesis_forward.1} parent=0 // pred_region
    _
  $region13: #{gsynthesis_forward.1} parent=0 // pred_fallthru
    _
  // Predicated region
  $region14: #{gsynthesis_forward.1} parent=0 // pred_check
    _
  $region15: #{gsynthesis_forward.1} parent=0 // pred_check_branch
    %37 = sbr.rel (0) target = $region17
  $region16: #{gsynthesis_forward.1} parent=0 // pred_region
    _
  $region17: #{gsynthesis_forward.1} parent=0 // pred_fallthru
    _
  // Predicated region
  $region18: #{gsynthesis_forward.1} parent=0 // pred_check
    _
  $region19: #{gsynthesis_forward.1} parent=0 // pred_check_branch
    %39 = sbr.rel (0) target = $region21
  $region20: #{gsynthesis_forward.1} parent=0 // pred_region
    _
  $region21: #{gsynthesis_forward.1} parent=0 // pred_fallthru
    _
  // Predicated region
  $region22: #{gsynthesis_forward.1} parent=0 // pred_check
    _
  $region23: #{gsynthesis_forward.1} parent=0 // pred_check_branch
    %41 = sbr.rel (0) target = $region25
  $region24: #{gsynthesis_forward.1} parent=0 // pred_region
    _
  $region25: #{gsynthesis_forward.1} parent=0 // pred_fallthru
    _
  // Predicated region
  $region26: #{gsynthesis_forward.1} parent=0 // pred_check
    _
  $region27: #{gsynthesis_forward.1} parent=0 // pred_check_branch
    %43 = sbr.rel (0) target = $region29
  $region28: #{gsynthesis_forward.1} parent=0 // pred_region
    _
  $region29: #{gsynthesis_forward.1} parent=0 // pred_fallthru
    _
  // Predicated region
  $region30: #{gsynthesis_forward.1} parent=0 // pred_check
    _
  $region31: #{gsynthesis_forward.1} parent=0 // pred_check_branch
    %45 = sbr.rel (0) target = $region33
  $region32: #{gsynthesis_forward.1} parent=0 // pred_region
    _
  $region33: #{gsynthesis_forward.1} parent=0 // pred_fallthru
    _
  // Predicated region
  $region34: #{gsynthesis_forward.1} parent=0 // pred_check
    _
  $region35: #{gsynthesis_forward.1} parent=0 // pred_check_branch
    %47 = sbr.rel (0) target = $region37
  $region36: #{gsynthesis_forward.1} parent=0 // pred_region
    _
  $region37: #{gsynthesis_forward.1} parent=0 // pred_fallthru
    _
  // Predicated region
  $region38: #{gsynthesis_forward.1} parent=0 // pred_check
    _
  $region39: #{gsynthesis_forward.1} parent=0 // pred_check_branch
    %49 = sbr.rel (0) target = $region41
  $region40: #{gsynthesis_forward.1} parent=0 // pred_region
    _
  $region41: #{gsynthesis_forward.1} parent=0 // pred_fallthru
    _
  // Predicated region
  $region42: #{gsynthesis_forward.1} parent=0 // pred_check
    _
  $region43: #{gsynthesis_forward.1} parent=0 // pred_check_branch
    %51 = sbr.rel (0) target = $region45
  $region44: #{gsynthesis_forward.1} parent=0 // pred_region
    _
  $region45: #{gsynthesis_forward.1} parent=0 // pred_fallthru
    _
  // Predicated region
  $region46: #{gsynthesis_forward.1} parent=0 // pred_check
    _
  $region47: #{gsynthesis_forward.1} parent=0 // pred_check_branch
    %53 = sbr.rel (0) target = $region49
  $region48: #{gsynthesis_forward.1} parent=0 // pred_region
    _
  $region49: #{gsynthesis_forward.1} parent=0 // pred_fallthru
    _
  // Predicated region
  $region50: #{gsynthesis_forward.1} parent=0 // pred_check
    _
  $region51: #{gsynthesis_forward.1} parent=0 // pred_check_branch
    %55 = sbr.rel (0) target = $region53
  $region52: #{gsynthesis_forward.1} parent=0 // pred_region
    _
  $region53: #{gsynthesis_forward.1} parent=0 // pred_fallthru
    _
  // Predicated region
  $region54: #{gsynthesis_forward.1} parent=0 // pred_check
    _
  $region55: #{gsynthesis_forward.1} parent=0 // pred_check_branch
    %57 = sbr.rel (0) target = $region57
  $region56: #{gsynthesis_forward.1} parent=0 // pred_region
    _
  $region57: #{gsynthesis_forward.1} parent=0 // pred_fallthru
    _
  // Predicated region
  $region58: #{gsynthesis_forward.1} parent=0 // pred_check
    _
  $region59: #{gsynthesis_forward.1} parent=0 // pred_check_branch
    %59 = sbr.rel (0) target = $region61
  $region60: #{gsynthesis_forward.1} parent=0 // pred_region
    _
  $region61: #{gsynthesis_forward.1} parent=0 // pred_fallthru
    _
  // Predicated region
  $region62: #{gsynthesis_forward.1} parent=0 // pred_check
    _
  $region63: #{gsynthesis_forward.1} parent=0 // pred_check_branch
    %61 = sbr.rel (0) target = $region65
  $region64: #{gsynthesis_forward.1} parent=0 // pred_region
    _
  $region65: #{gsynthesis_forward.1} parent=0 // pred_fallthru
    _
  // Predicated region
  $region66: #{gsynthesis_forward.1} parent=0 // pred_check
    _
  $region67: #{gsynthesis_forward.1} parent=0 // pred_check_branch
    %63 = sbr.rel (0) target = $region69
  $region68: #{gsynthesis_forward.1} parent=0 // pred_region
    _
  $region69: #{gsynthesis_forward.1} parent=0 // pred_fallthru
    _
  // Predicated region
  $region70: #{gsynthesis_forward.1} parent=0 // pred_check
    _
  $region71: #{gsynthesis_forward.1} parent=0 // pred_check_branch
    %65 = sbr.rel (0) target = $region73
  $region72: #{gsynthesis_forward.1} parent=0 // pred_region
    _
  $region73: #{gsynthesis_forward.1} parent=0 // pred_fallthru
    _
  // Predicated region
  $region74: #{gsynthesis_forward.1} parent=0 // pred_check
    _
  $region75: #{gsynthesis_forward.1} parent=0 // pred_check_branch
    %67 = sbr.rel (0) target = $region77
  $region76: #{gsynthesis_forward.1} parent=0 // pred_region
    _
  $region77: #{gsynthesis_forward.1} parent=0 // pred_fallthru
    _
  // Predicated region
  $region78: #{gsynthesis_forward.1} parent=0 // pred_check
    _
  $region79: #{gsynthesis_forward.1} parent=0 // pred_check_branch
    %69 = sbr.rel (0) target = $region81
  $region80: #{gsynthesis_forward.1} parent=0 // pred_region
    _
  $region81: #{gsynthesis_forward.1} parent=0 // pred_fallthru
    _
  // Predicated region
  $region82: #{gsynthesis_forward.1} parent=0 // pred_check
    _
  $region83: #{gsynthesis_forward.1} parent=0 // pred_check_branch
    %71 = sbr.rel (0) target = $region85
  $region84: #{gsynthesis_forward.1} parent=0 // pred_region
    _
  $region85: #{gsynthesis_forward.1} parent=0 // pred_fallthru
    _
  // Predicated region
  $region86: #{gsynthesis_forward.1} parent=0 // pred_check
    _
  $region87: #{gsynthesis_forward.1} parent=0 // pred_check_branch
    %73 = sbr.rel (0) target = $region89
  $region88: #{gsynthesis_forward.1} parent=0 // pred_region
    _
  $region89: #{gsynthesis_forward.1} parent=0 // pred_fallthru
    _
  // Predicated region
  $region90: #{gsynthesis_forward.1} parent=0 // pred_check
    _
  $region91: #{gsynthesis_forward.1} parent=0 // pred_check_branch
    %75 = sbr.rel (0) target = $region93
  $region92: #{gsynthesis_forward.1} parent=0 // pred_region
    _
  $region93: #{gsynthesis_forward.1} parent=0 // pred_fallthru
    _
  %v77 = vld [vmem:[%s5] sm:$0xff]
  %v78 = vld [vmem:[%s1] sm:$0xff]
  %v79 = vld [vmem:[%s9] sm:$0x3]
  %v80 = vld [vmem:[%s10] sm:$0xf]
  %v81 = vld [vmem:[%s4] sm:$0xff]
  %v82 = vlaneseq
  %v83 = vshrl.u32 %v82, 7
  %v84 = vsub.s32 0, %v83
  %v85 = vrot.slane %v77, %v84
  %v86 = vadd.f32 %v81, %v85
  %v87 = vld [vmem:[%s0] sm:$0x1]
  %v88 = vld [vmem:[%s0 + $0x4] sm:$0x1]
  %v89 = vld [vmem:[%s6] sm:$0xf]
  %v90 = vld [vmem:[%s6 + $0x4] sm:$0xf]
  %v91 = vld [vmem:[%s6 + $0x8] sm:$0xf]
  %v92 = vld [vmem:[%s6 + $0xc] sm:$0xf]
  %94 = vset.pattern.permute.xlu0 0
  %95 = vperm.xlu0 %94, %v78
  %v96 = vpop.permute.xlu0 %95
  %v98 = vlaneseq
  %v99 = vshrl.u32 %v98, 7
  %v100 = vsub.s32 1, %v99
  %v101 = vrot.slane %v77, %v100
  %v102 = vmul.f32 %v96, %v101
  %v103 = vadd.f32 %v86, %v102
  %v104 = vmul.f32 %v103, 0.2
  %v105 = vmax.f32 %v103, %v104
  %vm106 = vcmask 64512
  %v108 = vsel %vm106, %v79, 0
  %110 = vmatprep.subr.mxu0 0.0
  %111 = vmatpush1.msra.mxu0 0.0
  %112 = vmatprep.subr.mxu0 0.0
  %113 = vmatpush1.msra.mxu0 0.0
  %114 = vmatprep.subr.mxu0 0.0
  %115 = vmatpush1.msra.mxu0 0.0
  %116 = vmatprep.subr.mxu0 0.0
  %117 = vmatpush1.msra.mxu0 0.0
  %118 = vmatprep.subr.mxu0 0.0
  %119 = vmatpush1.msra.mxu0 0.0
  %120 = vmatprep.subr.mxu0 0.0
  %121 = vmatpush1.msra.mxu0 0.0
  %122 = vmatprep.subr.mxu0 0.0
  %123 = vmatpush1.msra.mxu0 0.0
  %124 = vmatprep.subr.mxu0 0.0
  %125 = vmatpush1.msra.mxu0 0.0
  %126 = vmatprep.subr.mxu0 0.0
  %127 = vmatpush1.msra.mxu0 0.0
  %128 = vmatprep.subr.mxu0 0.0
  %129 = vmatpush1.msra.mxu0 0.0
  %130 = vmatprep.subr.mxu0 0.0
  %131 = vmatpush1.msra.mxu0 0.0
  %132 = vmatprep.subr.mxu0 0.0
  %133 = vmatpush1.msra.mxu0 0.0
  %134 = vmatprep.subr.mxu0 0.0
  %135 = vmatpush1.msra.mxu0 0.0
  %136 = vmatprep.subr.mxu0 0.0
  %137 = vmatpush1.msra.mxu0 0.0
  %138 = vmatprep.subr.mxu0 0.0
  %139 = vmatpush1.msra.mxu0 0.0
  %140 = vmatprep.subr.mxu0 0.0
  %141 = vmatpush1.msra.mxu0 %v105
  %142 = vmatprep.subr.mxu0 0.0
  %143 = vmatpush2.msra.mxu0 0.0
  %144 = vmatprep.subr.mxu0 0.0
  %145 = vmatpush2.msra.mxu0 0.0
  %146 = vmatprep.subr.mxu0 0.0
  %147 = vmatpush2.msra.mxu0 0.0
  %148 = vmatprep.subr.mxu0 0.0
  %149 = vmatpush2.msra.mxu0 0.0
  %150 = vmatprep.subr.mxu0 0.0
  %151 = vmatpush2.msra.mxu0 0.0
  %152 = vmatprep.subr.mxu0 0.0
  %153 = vmatpush2.msra.mxu0 0.0
  %154 = vmatprep.subr.mxu0 0.0
  %155 = vmatpush2.msra.mxu0 0.0
  %156 = vmatprep.subr.mxu0 0.0
  %157 = vmatpush2.msra.mxu0 0.0
  %158 = vmatprep.subr.mxu0 0.0
  %159 = vmatpush2.msra.mxu0 0.0
  %160 = vmatprep.subr.mxu0 0.0
  %161 = vmatpush2.msra.mxu0 0.0
  %162 = vmatprep.subr.mxu0 0.0
  %163 = vmatpush2.msra.mxu0 0.0
  %164 = vmatprep.subr.mxu0 0.0
  %165 = vmatpush2.msra.mxu0 0.0
  %166 = vmatprep.subr.mxu0 0.0
  %167 = vmatpush2.msra.mxu0 0.0
  %168 = vmatprep.subr.mxu0 0.0
  %169 = vmatpush2.msra.mxu0 0.0
  %170 = vmatprep.subr.mxu0 0.0
  %171 = vmatpush2.msra.mxu0 0.0
  %172 = vmatprep.subr.mxu0 0.0
  %173 = vmatpush2.msra.mxu0 0.0
  %174 = vmatprep.mubr.f32.mxu0 0.0
  %175 = vmatmul.mubr.f32.gmra.mxu0 %v108
  %v176 = vpop.f32.mrf.mxu0
  %v177 = vadd.f32 0.0, %v176
  %v178 = vpop.f32.mrf.mxu0
  %179 = vdwg.mxu0
  %v180 = vmul.f32 %v105, %v105
  %181 = vmatprep.subr.mxu0 0.0
  %182 = vmatpush1.msra.mxu0 0.0
  %183 = vmatprep.subr.mxu0 0.0
  %184 = vmatpush1.msra.mxu0 0.0
  %185 = vmatprep.subr.mxu0 0.0
  %186 = vmatpush1.msra.mxu0 0.0
  %187 = vmatprep.subr.mxu0 0.0
  %188 = vmatpush1.msra.mxu0 0.0
  %189 = vmatprep.subr.mxu0 0.0
  %190 = vmatpush1.msra.mxu0 0.0
  %191 = vmatprep.subr.mxu0 0.0
  %192 = vmatpush1.msra.mxu0 0.0
  %193 = vmatprep.subr.mxu0 0.0
  %194 = vmatpush1.msra.mxu0 0.0
  %195 = vmatprep.subr.mxu0 0.0
  %196 = vmatpush1.msra.mxu0 0.0
  %197 = vmatprep.subr.mxu0 0.0
  %198 = vmatpush1.msra.mxu0 0.0
  %199 = vmatprep.subr.mxu0 0.0
  %200 = vmatpush1.msra.mxu0 0.0
  %201 = vmatprep.subr.mxu0 0.0
  %202 = vmatpush1.msra.mxu0 0.0
  %203 = vmatprep.subr.mxu0 0.0
  %204 = vmatpush1.msra.mxu0 0.0
  %205 = vmatprep.subr.mxu0 0.0
  %206 = vmatpush1.msra.mxu0 0.0
  %207 = vmatprep.subr.mxu0 0.0
  %208 = vmatpush1.msra.mxu0 0.0
  %209 = vmatprep.subr.mxu0 0.0
  %210 = vmatpush1.msra.mxu0 0.0
  %211 = vmatprep.subr.mxu0 0.0
  %212 = vmatpush1.msra.mxu0 %v180
  %213 = vmatprep.subr.mxu0 0.0
  %214 = vmatpush2.msra.mxu0 0.0
  %215 = vmatprep.subr.mxu0 0.0
  %216 = vmatpush2.msra.mxu0 0.0
  %217 = vmatprep.subr.mxu0 0.0
  %218 = vmatpush2.msra.mxu0 0.0
  %219 = vmatprep.subr.mxu0 0.0
  %220 = vmatpush2.msra.mxu0 0.0
  %221 = vmatprep.subr.mxu0 0.0
  %222 = vmatpush2.msra.mxu0 0.0
  %223 = vmatprep.subr.mxu0 0.0
  %224 = vmatpush2.msra.mxu0 0.0
  %225 = vmatprep.subr.mxu0 0.0
  %226 = vmatpush2.msra.mxu0 0.0
  %227 = vmatprep.subr.mxu0 0.0
  %228 = vmatpush2.msra.mxu0 0.0
  %229 = vmatprep.subr.mxu0 0.0
  %230 = vmatpush2.msra.mxu0 0.0
  %231 = vmatprep.subr.mxu0 0.0
  %232 = vmatpush2.msra.mxu0 0.0
  %233 = vmatprep.subr.mxu0 0.0
  %234 = vmatpush2.msra.mxu0 0.0
  %235 = vmatprep.subr.mxu0 0.0
  %236 = vmatpush2.msra.mxu0 0.0
  %237 = vmatprep.subr.mxu0 0.0
  %238 = vmatpush2.msra.mxu0 0.0
  %239 = vmatprep.subr.mxu0 0.0
  %240 = vmatpush2.msra.mxu0 0.0
  %241 = vmatprep.subr.mxu0 0.0
  %242 = vmatpush2.msra.mxu0 0.0
  %243 = vmatprep.subr.mxu0 0.0
  %244 = vmatpush2.msra.mxu0 0.0
  %245 = vmatprep.mubr.f32.mxu0 0.0
  %246 = vmatmul.mubr.f32.gmra.mxu0 %v108
  %v247 = vpop.f32.mrf.mxu0
  %v248 = vadd.f32 0.0, %v247
  %v249 = vpop.f32.mrf.mxu0
  %250 = vdwg.mxu0
  %v251 = vmul.f32 %v177, %v177
  %v252 = vsub.f32 %v248, %v251
  %v253 = vmax.f32 %v252, 0.0
  %v254 = vadd.f32 %v253, 1e-05
  %v255 = vrsqrt.pop %v254
  %v258 = vunpack.c.l.b16 %v87
  %v259 = vunpack.c.l.b16 %v88
  %v260 = vpack.c.b16 %v258, %v258
  %v261 = vpack.c.b16 %v259, %v259
  %v262 = vunpack.c.l.b16 %v260
  %v263 = vunpack.c.l.b16 %v261
  %v264 = vrot.slane %v263, 7
  %vm265 = vcmask 1041409
  %v266 = vsel %vm265, %v264, %v262
  %v267 = vpack.c.b16 %v266, %v266
  %v272 = vunpack.c.l.b16 %v89
  %v273 = vunpack.c.l.b16 %v90
  %v274 = vunpack.c.l.b16 %v91
  %v275 = vunpack.c.l.b16 %v92
  %v276 = vpack.c.b16 %v273, %v272
  %v277 = vpack.c.b16 %v275, %v274
  %vm280 = vcmask 261120
  %v282 = vsel %vm280, %v267, 0
  %284 = vmatprep.subr.bf16.mxu0 0
  %285 = vmatpush1.bf16.msra.mxu0 0
  %286 = vmatprep.subr.bf16.mxu0 0
  %287 = vmatpush1.bf16.msra.mxu0 0
  %288 = vmatprep.subr.bf16.mxu0 0
  %289 = vmatpush1.bf16.msra.mxu0 0
  %290 = vmatprep.subr.bf16.mxu0 0
  %291 = vmatpush1.bf16.msra.mxu0 0
  %292 = vmatprep.subr.bf16.mxu0 0
  %293 = vmatpush1.bf16.msra.mxu0 0
  %294 = vmatprep.subr.bf16.mxu0 0
  %295 = vmatpush1.bf16.msra.mxu0 0
  %296 = vmatprep.subr.bf16.mxu0 0
  %297 = vmatpush1.bf16.msra.mxu0 %v277
  %298 = vmatprep.subr.bf16.mxu0 0
  %299 = vmatpush1.bf16.msra.mxu0 %v276
  %300 = vmatprep.subr.bf16.mxu0 0
  %301 = vmatpush2.bf16.msra.mxu0 0
  %302 = vmatprep.subr.bf16.mxu0 0
  %303 = vmatpush2.bf16.msra.mxu0 0
  %304 = vmatprep.subr.bf16.mxu0 0
  %305 = vmatpush2.bf16.msra.mxu0 0
  %306 = vmatprep.subr.bf16.mxu0 0
  %307 = vmatpush2.bf16.msra.mxu0 0
  %308 = vmatprep.subr.bf16.mxu0 0
  %309 = vmatpush2.bf16.msra.mxu0 0
  %310 = vmatprep.subr.bf16.mxu0 0
  %311 = vmatpush2.bf16.msra.mxu0 0
  %312 = vmatprep.subr.bf16.mxu0 0
  %313 = vmatpush2.bf16.msra.mxu0 0
  %314 = vmatprep.subr.bf16.mxu0 0
  %315 = vmatpush2.bf16.msra.mxu0 0
  %316 = vmatprep.mubr.bf16.mxu0 0
  %317 = vmatmul.mubr.bf16.gmra.mxu0 %v282
  %v318 = vpop.f32.mrf.mxu0
  %v319 = vadd.f32 0.0, %v318
  %v320 = vpop.f32.mrf.mxu0
  %v321 = vpop.f32.mrf.mxu0
  %v322 = vpop.f32.mrf.mxu0
  %323 = vdwg.mxu0
  %v324 = vlaneseq
  %v325 = vshrl.u32 %v324, 7
  %v326 = vsub.s32 2, %v325
  %v327 = vrot.slane %v77, %v326
  %v328 = vadd.f32 %v319, %v327
  %v329 = vlaneseq
  %v330 = vshrl.u32 %v329, 7
  %v331 = vsub.s32 3, %v330
  %v332 = vrot.slane %v77, %v331
  %334 = vrot.lane.b32.xlu0 %v332, 32
  %v335 = vpop.permute.xlu0 %334
  %v337 = vadd.f32 %v319, %v335
  %v338 = vadd.f32 %v328, 1.0
  %v339 = vmul.f32 %v255, %v338
  %v340 = vmul.f32 %v177, %v339
  %342 = vrot.lane.b32.xlu0 %v340, 32
  %v343 = vpop.permute.xlu0 %342
  %v345 = vsub.f32 %v337, %v343
  %v346 = vpack.c.bf16 %v339, %v339
  %vm347 = vcmask 15360
  %v349 = vsel %vm347, %v80, 0
  %vm351 = vcmask 1040384
  %v353 = vsel %vm351, %v346, 0
  %355 = vmatprep.subr.bf16.mxu0 0
  %356 = vmatpush1.bf16.msra.mxu0 0
  %357 = vmatprep.subr.bf16.mxu0 0
  %358 = vmatpush1.bf16.msra.mxu0 0
  %359 = vmatprep.subr.bf16.mxu0 0
  %360 = vmatpush1.bf16.msra.mxu0 0
  %361 = vmatprep.subr.bf16.mxu0 0
  %362 = vmatpush1.bf16.msra.mxu0 0
  %363 = vmatprep.subr.bf16.mxu0 0
  %364 = vmatpush1.bf16.msra.mxu0 0
  %365 = vmatprep.subr.bf16.mxu0 0
  %366 = vmatpush1.bf16.msra.mxu0 0
  %367 = vmatprep.subr.bf16.mxu0 0
  %368 = vmatpush1.bf16.msra.mxu0 0
  %369 = vmatprep.subr.bf16.mxu0 0
  %370 = vmatpush1.bf16.msra.mxu0 %v353
  %371 = vmatprep.subr.bf16.mxu0 0
  %372 = vmatpush2.bf16.msra.mxu0 0
  %373 = vmatprep.subr.bf16.mxu0 0
  %374 = vmatpush2.bf16.msra.mxu0 0
  %375 = vmatprep.subr.bf16.mxu0 0
  %376 = vmatpush2.bf16.msra.mxu0 0
  %377 = vmatprep.subr.bf16.mxu0 0
  %378 = vmatpush2.bf16.msra.mxu0 0
  %379 = vmatprep.subr.bf16.mxu0 0
  %380 = vmatpush2.bf16.msra.mxu0 0
  %381 = vmatprep.subr.bf16.mxu0 0
  %382 = vmatpush2.bf16.msra.mxu0 0
  %383 = vmatprep.subr.bf16.mxu0 0
  %384 = vmatpush2.bf16.msra.mxu0 0
  %385 = vmatprep.subr.bf16.mxu0 0
  %386 = vmatpush2.bf16.msra.mxu0 0
  %387 = vmatprep.mubr.bf16.mxu0 0
  %388 = vmatmul.mubr.bf16.gmra.mxu0 %v349
  %v389 = vpop.f32.mrf.mxu0
  %v390 = vadd.f32 0.0, %v389
  %v391 = vpop.f32.mrf.mxu0
  %v392 = vpop.f32.mrf.mxu0
  %v393 = vpop.f32.mrf.mxu0
  %394 = vdwg.mxu0
  %v395 = vpack.c.bf16 %v345, %v345
  %397 = vrot.lane.b32.xlu0 %v395, 96
  %v398 = vpop.permute.xlu0 %397
  %v400 = vsel %vm351, %v398, 0
  %402 = vmatprep.subr.bf16.mxu0 0
  %403 = vmatpush1.bf16.msra.mxu0 0
  %404 = vmatprep.subr.bf16.mxu0 0
  %405 = vmatpush1.bf16.msra.mxu0 0
  %406 = vmatprep.subr.bf16.mxu0 0
  %407 = vmatpush1.bf16.msra.mxu0 0
  %408 = vmatprep.subr.bf16.mxu0 0
  %409 = vmatpush1.bf16.msra.mxu0 0
  %410 = vmatprep.subr.bf16.mxu0 0
  %411 = vmatpush1.bf16.msra.mxu0 0
  %412 = vmatprep.subr.bf16.mxu0 0
  %413 = vmatpush1.bf16.msra.mxu0 0
  %414 = vmatprep.subr.bf16.mxu0 0
  %415 = vmatpush1.bf16.msra.mxu0 0
  %416 = vmatprep.subr.bf16.mxu0 0
  %417 = vmatpush1.bf16.msra.mxu0 %v400
  %418 = vmatprep.subr.bf16.mxu0 0
  %419 = vmatpush2.bf16.msra.mxu0 0
  %420 = vmatprep.subr.bf16.mxu0 0
  %421 = vmatpush2.bf16.msra.mxu0 0
  %422 = vmatprep.subr.bf16.mxu0 0
  %423 = vmatpush2.bf16.msra.mxu0 0
  %424 = vmatprep.subr.bf16.mxu0 0
  %425 = vmatpush2.bf16.msra.mxu0 0
  %426 = vmatprep.subr.bf16.mxu0 0
  %427 = vmatpush2.bf16.msra.mxu0 0
  %428 = vmatprep.subr.bf16.mxu0 0
  %429 = vmatpush2.bf16.msra.mxu0 0
  %430 = vmatprep.subr.bf16.mxu0 0
  %431 = vmatpush2.bf16.msra.mxu0 0
  %432 = vmatprep.subr.bf16.mxu0 0
  %433 = vmatpush2.bf16.msra.mxu0 0
  %434 = vmatprep.mubr.bf16.mxu0 0
  %435 = vmatmul.mubr.bf16.gmra.mxu0 %v349
  %v436 = vpop.f32.mrf.mxu0
  %v437 = vadd.f32 0.0, %v436
  %v438 = vpop.f32.mrf.mxu0
  %v439 = vpop.f32.mrf.mxu0
  %v440 = vpop.f32.mrf.mxu0
  %441 = vdwg.mxu0
  %v442 = vmul.f32 %v105, %v390
  %v443 = vadd.f32 %v442, %v437
  %v444 = vpack.c.bf16 %v443, %v443
  %v445 = vld [vmem:[%s8] sm:$0xf]
  %v447 = vsel %vm106, %v445, 0
  %vm449 = vcmask 1043456
  %v451 = vsel %vm449, %v444, 0
  %453 = vmatprep.subr.bf16.mxu0 0
  %454 = vmatpush1.bf16.msra.mxu0 0
  %455 = vmatprep.subr.bf16.mxu0 0
  %456 = vmatpush1.bf16.msra.mxu0 0
  %457 = vmatprep.subr.bf16.mxu0 0
  %458 = vmatpush1.bf16.msra.mxu0 0
  %459 = vmatprep.subr.bf16.mxu0 0
  %460 = vmatpush1.bf16.msra.mxu0 0
  %461 = vmatprep.subr.bf16.mxu0 0
  %462 = vmatpush1.bf16.msra.mxu0 0
  %463 = vmatprep.subr.bf16.mxu0 0
  %464 = vmatpush1.bf16.msra.mxu0 0
  %465 = vmatprep.subr.bf16.mxu0 0
  %466 = vmatpush1.bf16.msra.mxu0 0
  %467 = vmatprep.subr.bf16.mxu0 0
  %468 = vmatpush1.bf16.msra.mxu0 %v451
  %469 = vmatprep.subr.bf16.mxu0 0
  %470 = vmatpush2.bf16.msra.mxu0 0
  %471 = vmatprep.subr.bf16.mxu0 0
  %472 = vmatpush2.bf16.msra.mxu0 0
  %473 = vmatprep.subr.bf16.mxu0 0
  %474 = vmatpush2.bf16.msra.mxu0 0
  %475 = vmatprep.subr.bf16.mxu0 0
  %476 = vmatpush2.bf16.msra.mxu0 0
  %477 = vmatprep.subr.bf16.mxu0 0
  %478 = vmatpush2.bf16.msra.mxu0 0
  %479 = vmatprep.subr.bf16.mxu0 0
  %480 = vmatpush2.bf16.msra.mxu0 0
  %481 = vmatprep.subr.bf16.mxu0 0
  %482 = vmatpush2.bf16.msra.mxu0 0
  %483 = vmatprep.subr.bf16.mxu0 0
  %484 = vmatpush2.bf16.msra.mxu0 0
  %485 = vmatprep.mubr.bf16.mxu0 0
  %486 = vmatmul.mubr.bf16.gmra.mxu0 %v447
  %v487 = vpop.f32.mrf.mxu0
  %v488 = vadd.f32 0.0, %v487
  %v489 = vpop.f32.mrf.mxu0
  %v490 = vpop.f32.mrf.mxu0
  %v491 = vpop.f32.mrf.mxu0
  %492 = vdwg.mxu0
  %v493 = vpack.c.bf16 %v488, %v488
  %s494 = scalar_lea.vmem %s8, 4
  %v495 = vld [vmem:[%s494] sm:$0xf]
  %v497 = vsel %vm106, %v495, 0
  %499 = vmatprep.subr.bf16.mxu0 0
  %500 = vmatpush1.bf16.msra.mxu0 0
  %501 = vmatprep.subr.bf16.mxu0 0
  %502 = vmatpush1.bf16.msra.mxu0 0
  %503 = vmatprep.subr.bf16.mxu0 0
  %504 = vmatpush1.bf16.msra.mxu0 0
  %505 = vmatprep.subr.bf16.mxu0 0
  %506 = vmatpush1.bf16.msra.mxu0 0
  %507 = vmatprep.subr.bf16.mxu0 0
  %508 = vmatpush1.bf16.msra.mxu0 0
  %509 = vmatprep.subr.bf16.mxu0 0
  %510 = vmatpush1.bf16.msra.mxu0 0
  %511 = vmatprep.subr.bf16.mxu0 0
  %512 = vmatpush1.bf16.msra.mxu0 0
  %513 = vmatprep.subr.bf16.mxu0 0
  %514 = vmatpush1.bf16.msra.mxu0 %v451
  %515 = vmatprep.subr.bf16.mxu0 0
  %516 = vmatpush2.bf16.msra.mxu0 0
  %517 = vmatprep.subr.bf16.mxu0 0
  %518 = vmatpush2.bf16.msra.mxu0 0
  %519 = vmatprep.subr.bf16.mxu0 0
  %520 = vmatpush2.bf16.msra.mxu0 0
  %521 = vmatprep.subr.bf16.mxu0 0
  %522 = vmatpush2.bf16.msra.mxu0 0
  %523 = vmatprep.subr.bf16.mxu0 0
  %524 = vmatpush2.bf16.msra.mxu0 0
  %525 = vmatprep.subr.bf16.mxu0 0
  %526 = vmatpush2.bf16.msra.mxu0 0
  %527 = vmatprep.subr.bf16.mxu0 0
  %528 = vmatpush2.bf16.msra.mxu0 0
  %529 = vmatprep.subr.bf16.mxu0 0
  %530 = vmatpush2.bf16.msra.mxu0 0
  %531 = vmatprep.mubr.bf16.mxu0 0
  %532 = vmatmul.mubr.bf16.gmra.mxu0 %v497
  %v533 = vpop.f32.mrf.mxu0
  %v534 = vadd.f32 0.0, %v533
  %v535 = vpop.f32.mrf.mxu0
  %v536 = vpop.f32.mrf.mxu0
  %v537 = vpop.f32.mrf.mxu0
  %538 = vdwg.mxu0
  %v539 = vpack.c.bf16 %v534, %v534
  %541 = vrot.lane.b32.xlu0 %v444, 32
  %v542 = vpop.permute.xlu0 %541
  %544 = vrot.lane.b32.xlu0 %v539, 64
  %v545 = vpop.permute.xlu0 %544
  %v548 = vsel %vm280, %v493, %v542
  %vm549 = vcmask 523264
  %v551 = vsel %vm549, %v548, %v545
  %v552 = vld [vmem:[%s7] sm:$0xf]
  %v553 = vld [vmem:[%s7 + $0x4] sm:$0xf]
  %v554 = vld [vmem:[%s7 + $0x8] sm:$0xf]
  %v555 = vld [vmem:[%s7 + $0xc] sm:$0xf]
  %v556 = vld [vmem:[%s7 + $0x10] sm:$0xf]
  %v557 = vld [vmem:[%s7 + $0x14] sm:$0xf]
  %v558 = vld [vmem:[%s7 + $0x18] sm:$0xf]
  %v559 = vld [vmem:[%s7 + $0x1c] sm:$0xf]
  %v560 = vld [vmem:[%s7 + $0x20] sm:$0xf]
  %v561 = vld [vmem:[%s7 + $0x24] sm:$0xf]
  %v562 = vld [vmem:[%s7 + $0x28] sm:$0xf]
  %v563 = vld [vmem:[%s7 + $0x2c] sm:$0xf]
  %v564 = vlaneseq
  %v565 = vshrl.u32 %v564, 7
  %v566 = vsub.s32 4, %v565
  %v567 = vrot.slane %v77, %v566
  %v580 = vunpack.c.l.b16 %v552
  %v581 = vunpack.c.l.b16 %v553
  %v582 = vunpack.c.l.b16 %v554
  %v583 = vunpack.c.l.b16 %v555
  %v584 = vunpack.c.l.b16 %v556
  %v585 = vunpack.c.l.b16 %v557
  %v586 = vunpack.c.l.b16 %v558
  %v587 = vunpack.c.l.b16 %v559
  %v588 = vunpack.c.l.b16 %v560
  %v589 = vunpack.c.l.b16 %v561
  %v590 = vunpack.c.l.b16 %v562
  %v591 = vunpack.c.l.b16 %v563
  %v592 = vpack.c.b16 %v581, %v580
  %v593 = vpack.c.b16 %v583, %v582
  %v594 = vpack.c.b16 %v585, %v584
  %v595 = vpack.c.b16 %v587, %v586
  %v596 = vpack.c.b16 %v589, %v588
  %v597 = vpack.c.b16 %v591, %v590
  %vm604 = vcmask 785408
  %v605 = vsel %vm604, %v551, 0
  %607 = vmatprep.subr.bf16.mxu0 0
  %608 = vmatpush1.bf16.msra.mxu0 0
  %609 = vmatprep.subr.bf16.mxu0 0
  %610 = vmatpush1.bf16.msra.mxu0 0
  %611 = vmatprep.subr.bf16.mxu0 0
  %612 = vmatpush1.bf16.msra.mxu0 %v597
  %613 = vmatprep.subr.bf16.mxu0 0
  %614 = vmatpush1.bf16.msra.mxu0 %v596
  %615 = vmatprep.subr.bf16.mxu0 0
  %616 = vmatpush1.bf16.msra.mxu0 %v595
  %617 = vmatprep.subr.bf16.mxu0 0
  %618 = vmatpush1.bf16.msra.mxu0 %v594
  %619 = vmatprep.subr.bf16.mxu0 0
  %620 = vmatpush1.bf16.msra.mxu0 %v593
  %621 = vmatprep.subr.bf16.mxu0 0
  %622 = vmatpush1.bf16.msra.mxu0 %v592
  %623 = vmatprep.subr.bf16.mxu0 0
  %624 = vmatpush2.bf16.msra.mxu0 0
  %625 = vmatprep.subr.bf16.mxu0 0
  %626 = vmatpush2.bf16.msra.mxu0 0
  %627 = vmatprep.subr.bf16.mxu0 0
  %628 = vmatpush2.bf16.msra.mxu0 0
  %629 = vmatprep.subr.bf16.mxu0 0
  %630 = vmatpush2.bf16.msra.mxu0 0
  %631 = vmatprep.subr.bf16.mxu0 0
  %632 = vmatpush2.bf16.msra.mxu0 0
  %633 = vmatprep.subr.bf16.mxu0 0
  %634 = vmatpush2.bf16.msra.mxu0 0
  %635 = vmatprep.subr.bf16.mxu0 0
  %636 = vmatpush2.bf16.msra.mxu0 0
  %637 = vmatprep.subr.bf16.mxu0 0
  %638 = vmatpush2.bf16.msra.mxu0 0
  %639 = vmatprep.mubr.bf16.mxu0 0
  %640 = vmatmul.mubr.bf16.gmra.mxu0 %v605
  %v641 = vpop.f32.mrf.mxu0
  %v642 = vadd.f32 %v567, %v641
  %v643 = vpop.f32.mrf.mxu0
  %v644 = vpop.f32.mrf.mxu0
  %v645 = vpop.f32.mrf.mxu0
  %646 = vdwg.mxu0
  %s647 = scalar_lea.vmem %s6, 16
  %v648 = vld [vmem:[%s647] sm:$0xf]
  %v649 = vld [vmem:[%s647 + $0x4] sm:$0xf]
  %v650 = vld [vmem:[%s647 + $0x8] sm:$0xf]
  %v651 = vld [vmem:[%s647 + $0xc] sm:$0xf]
  %652 = vset.pattern.permute.xlu0 1
  %653 = vperm.xlu0 %652, %v78
  %v654 = vpop.permute.xlu0 %653
  %v656 = vlaneseq
  %v657 = vshrl.u32 %v656, 7
  %v658 = vsub.s32 5, %v657
  %v659 = vrot.slane %v77, %v658
  %v660 = vmul.f32 %v654, %v659
  %v661 = vadd.f32 %v642, %v660
  %v662 = vmul.f32 %v661, 0.2
  %v663 = vmax.f32 %v661, %v662
  %664 = vmatprep.subr.mxu0 0.0
  %665 = vmatpush1.msra.mxu0 0.0
  %666 = vmatprep.subr.mxu0 0.0
  %667 = vmatpush1.msra.mxu0 0.0
  %668 = vmatprep.subr.mxu0 0.0
  %669 = vmatpush1.msra.mxu0 0.0
  %670 = vmatprep.subr.mxu0 0.0
  %671 = vmatpush1.msra.mxu0 0.0
  %672 = vmatprep.subr.mxu0 0.0
  %673 = vmatpush1.msra.mxu0 0.0
  %674 = vmatprep.subr.mxu0 0.0
  %675 = vmatpush1.msra.mxu0 0.0
  %676 = vmatprep.subr.mxu0 0.0
  %677 = vmatpush1.msra.mxu0 0.0
  %678 = vmatprep.subr.mxu0 0.0
  %679 = vmatpush1.msra.mxu0 0.0
  %680 = vmatprep.subr.mxu0 0.0
  %681 = vmatpush1.msra.mxu0 0.0
  %682 = vmatprep.subr.mxu0 0.0
  %683 = vmatpush1.msra.mxu0 0.0
  %684 = vmatprep.subr.mxu0 0.0
  %685 = vmatpush1.msra.mxu0 0.0
  %686 = vmatprep.subr.mxu0 0.0
  %687 = vmatpush1.msra.mxu0 0.0
  %688 = vmatprep.subr.mxu0 0.0
  %689 = vmatpush1.msra.mxu0 0.0
  %690 = vmatprep.subr.mxu0 0.0
  %691 = vmatpush1.msra.mxu0 0.0
  %692 = vmatprep.subr.mxu0 0.0
  %693 = vmatpush1.msra.mxu0 0.0
  %694 = vmatprep.subr.mxu0 0.0
  %695 = vmatpush1.msra.mxu0 %v663
  %696 = vmatprep.subr.mxu0 0.0
  %697 = vmatpush2.msra.mxu0 0.0
  %698 = vmatprep.subr.mxu0 0.0
  %699 = vmatpush2.msra.mxu0 0.0
  %700 = vmatprep.subr.mxu0 0.0
  %701 = vmatpush2.msra.mxu0 0.0
  %702 = vmatprep.subr.mxu0 0.0
  %703 = vmatpush2.msra.mxu0 0.0
  %704 = vmatprep.subr.mxu0 0.0
  %705 = vmatpush2.msra.mxu0 0.0
  %706 = vmatprep.subr.mxu0 0.0
  %707 = vmatpush2.msra.mxu0 0.0
  %708 = vmatprep.subr.mxu0 0.0
  %709 = vmatpush2.msra.mxu0 0.0
  %710 = vmatprep.subr.mxu0 0.0
  %711 = vmatpush2.msra.mxu0 0.0
  %712 = vmatprep.subr.mxu0 0.0
  %713 = vmatpush2.msra.mxu0 0.0
  %714 = vmatprep.subr.mxu0 0.0
  %715 = vmatpush2.msra.mxu0 0.0
  %716 = vmatprep.subr.mxu0 0.0
  %717 = vmatpush2.msra.mxu0 0.0
  %718 = vmatprep.subr.mxu0 0.0
  %719 = vmatpush2.msra.mxu0 0.0
  %720 = vmatprep.subr.mxu0 0.0
  %721 = vmatpush2.msra.mxu0 0.0
  %722 = vmatprep.subr.mxu0 0.0
  %723 = vmatpush2.msra.mxu0 0.0
  %724 = vmatprep.subr.mxu0 0.0
  %725 = vmatpush2.msra.mxu0 0.0
  %726 = vmatprep.subr.mxu0 0.0
  %727 = vmatpush2.msra.mxu0 0.0
  %728 = vmatprep.mubr.f32.mxu0 0.0
  %729 = vmatmul.mubr.f32.gmra.mxu0 %v108
  %v730 = vpop.f32.mrf.mxu0
  %v731 = vadd.f32 0.0, %v730
  %v732 = vpop.f32.mrf.mxu0
  %733 = vdwg.mxu0
  %v734 = vmul.f32 %v663, %v663
  %735 = vmatprep.subr.mxu0 0.0
  %736 = vmatpush1.msra.mxu0 0.0
  %737 = vmatprep.subr.mxu0 0.0
  %738 = vmatpush1.msra.mxu0 0.0
  %739 = vmatprep.subr.mxu0 0.0
  %740 = vmatpush1.msra.mxu0 0.0
  %741 = vmatprep.subr.mxu0 0.0
  %742 = vmatpush1.msra.mxu0 0.0
  %743 = vmatprep.subr.mxu0 0.0
  %744 = vmatpush1.msra.mxu0 0.0
  %745 = vmatprep.subr.mxu0 0.0
  %746 = vmatpush1.msra.mxu0 0.0
  %747 = vmatprep.subr.mxu0 0.0
  %748 = vmatpush1.msra.mxu0 0.0
  %749 = vmatprep.subr.mxu0 0.0
  %750 = vmatpush1.msra.mxu0 0.0
  %751 = vmatprep.subr.mxu0 0.0
  %752 = vmatpush1.msra.mxu0 0.0
  %753 = vmatprep.subr.mxu0 0.0
  %754 = vmatpush1.msra.mxu0 0.0
  %755 = vmatprep.subr.mxu0 0.0
  %756 = vmatpush1.msra.mxu0 0.0
  %757 = vmatprep.subr.mxu0 0.0
  %758 = vmatpush1.msra.mxu0 0.0
  %759 = vmatprep.subr.mxu0 0.0
  %760 = vmatpush1.msra.mxu0 0.0
  %761 = vmatprep.subr.mxu0 0.0
  %762 = vmatpush1.msra.mxu0 0.0
  %763 = vmatprep.subr.mxu0 0.0
  %764 = vmatpush1.msra.mxu0 0.0
  %765 = vmatprep.subr.mxu0 0.0
  %766 = vmatpush1.msra.mxu0 %v734
  %767 = vmatprep.subr.mxu0 0.0
  %768 = vmatpush2.msra.mxu0 0.0
  %769 = vmatprep.subr.mxu0 0.0
  %770 = vmatpush2.msra.mxu0 0.0
  %771 = vmatprep.subr.mxu0 0.0
  %772 = vmatpush2.msra.mxu0 0.0
  %773 = vmatprep.subr.mxu0 0.0
  %774 = vmatpush2.msra.mxu0 0.0
  %775 = vmatprep.subr.mxu0 0.0
  %776 = vmatpush2.msra.mxu0 0.0
  %777 = vmatprep.subr.mxu0 0.0
  %778 = vmatpush2.msra.mxu0 0.0
  %779 = vmatprep.subr.mxu0 0.0
  %780 = vmatpush2.msra.mxu0 0.0
  %781 = vmatprep.subr.mxu0 0.0
  %782 = vmatpush2.msra.mxu0 0.0
  %783 = vmatprep.subr.mxu0 0.0
  %784 = vmatpush2.msra.mxu0 0.0
  %785 = vmatprep.subr.mxu0 0.0
  %786 = vmatpush2.msra.mxu0 0.0
  %787 = vmatprep.subr.mxu0 0.0
  %788 = vmatpush2.msra.mxu0 0.0
  %789 = vmatprep.subr.mxu0 0.0
  %790 = vmatpush2.msra.mxu0 0.0
  %791 = vmatprep.subr.mxu0 0.0
  %792 = vmatpush2.msra.mxu0 0.0
  %793 = vmatprep.subr.mxu0 0.0
  %794 = vmatpush2.msra.mxu0 0.0
  %795 = vmatprep.subr.mxu0 0.0
  %796 = vmatpush2.msra.mxu0 0.0
  %797 = vmatprep.subr.mxu0 0.0
  %798 = vmatpush2.msra.mxu0 0.0
  %799 = vmatprep.mubr.f32.mxu0 0.0
  %800 = vmatmul.mubr.f32.gmra.mxu0 %v108
  %v801 = vpop.f32.mrf.mxu0
  %v802 = vadd.f32 0.0, %v801
  %v803 = vpop.f32.mrf.mxu0
  %804 = vdwg.mxu0
  %v805 = vmul.f32 %v731, %v731
  %v806 = vsub.f32 %v802, %v805
  %v807 = vmax.f32 %v806, 0.0
  %v808 = vadd.f32 %v807, 1e-05
  %v809 = vrsqrt.pop %v808
  %v810 = vrot.slane %v262, 1
  %v811 = vsel %vm265, %v263, %v810
  %v812 = vpack.c.b16 %v811, %v811
  %v817 = vunpack.c.l.b16 %v648
  %v818 = vunpack.c.l.b16 %v649
  %v819 = vunpack.c.l.b16 %v650
  %v820 = vunpack.c.l.b16 %v651
  %v821 = vpack.c.b16 %v818, %v817
  %v822 = vpack.c.b16 %v820, %v819
  %v826 = vsel %vm280, %v812, 0
  %828 = vmatprep.subr.bf16.mxu0 0
  %829 = vmatpush1.bf16.msra.mxu0 0
  %830 = vmatprep.subr.bf16.mxu0 0
  %831 = vmatpush1.bf16.msra.mxu0 0
  %832 = vmatprep.subr.bf16.mxu0 0
  %833 = vmatpush1.bf16.msra.mxu0 0
  %834 = vmatprep.subr.bf16.mxu0 0
  %835 = vmatpush1.bf16.msra.mxu0 0
  %836 = vmatprep.subr.bf16.mxu0 0
  %837 = vmatpush1.bf16.msra.mxu0 0
  %838 = vmatprep.subr.bf16.mxu0 0
  %839 = vmatpush1.bf16.msra.mxu0 0
  %840 = vmatprep.subr.bf16.mxu0 0
  %841 = vmatpush1.bf16.msra.mxu0 %v822
  %842 = vmatprep.subr.bf16.mxu0 0
  %843 = vmatpush1.bf16.msra.mxu0 %v821
  %844 = vmatprep.subr.bf16.mxu0 0
  %845 = vmatpush2.bf16.msra.mxu0 0
  %846 = vmatprep.subr.bf16.mxu0 0
  %847 = vmatpush2.bf16.msra.mxu0 0
  %848 = vmatprep.subr.bf16.mxu0 0
  %849 = vmatpush2.bf16.msra.mxu0 0
  %850 = vmatprep.subr.bf16.mxu0 0
  %851 = vmatpush2.bf16.msra.mxu0 0
  %852 = vmatprep.subr.bf16.mxu0 0
  %853 = vmatpush2.bf16.msra.mxu0 0
  %854 = vmatprep.subr.bf16.mxu0 0
  %855 = vmatpush2.bf16.msra.mxu0 0
  %856 = vmatprep.subr.bf16.mxu0 0
  %857 = vmatpush2.bf16.msra.mxu0 0
  %858 = vmatprep.subr.bf16.mxu0 0
  %859 = vmatpush2.bf16.msra.mxu0 0
  %860 = vmatprep.mubr.bf16.mxu0 0
  %861 = vmatmul.mubr.bf16.gmra.mxu0 %v826
  %v862 = vpop.f32.mrf.mxu0
  %v863 = vadd.f32 0.0, %v862
  %v864 = vpop.f32.mrf.mxu0
  %v865 = vpop.f32.mrf.mxu0
  %v866 = vpop.f32.mrf.mxu0
  %867 = vdwg.mxu0
  %v868 = vlaneseq
  %v869 = vshrl.u32 %v868, 7
  %v870 = vsub.s32 6, %v869
  %v871 = vrot.slane %v77, %v870
  %v872 = vadd.f32 %v863, %v871
  %v873 = vlaneseq
  %v874 = vshrl.u32 %v873, 7
  %v875 = vsub.s32 7, %v874
  %v876 = vrot.slane %v77, %v875
  %878 = vrot.lane.b32.xlu0 %v876, 32
  %v879 = vpop.permute.xlu0 %878
  %v881 = vadd.f32 %v863, %v879
  %v882 = vadd.f32 %v872, 1.0
  %v883 = vmul.f32 %v809, %v882
  %v884 = vmul.f32 %v731, %v883
  %886 = vrot.lane.b32.xlu0 %v884, 32
  %v887 = vpop.permute.xlu0 %886
  %v889 = vsub.f32 %v881, %v887
  %v890 = vpack.c.bf16 %v883, %v883
  %v892 = vsel %vm351, %v890, 0
  %894 = vmatprep.subr.bf16.mxu0 0
  %895 = vmatpush1.bf16.msra.mxu0 0
  %896 = vmatprep.subr.bf16.mxu0 0
  %897 = vmatpush1.bf16.msra.mxu0 0
  %898 = vmatprep.subr.bf16.mxu0 0
  %899 = vmatpush1.bf16.msra.mxu0 0
  %900 = vmatprep.subr.bf16.mxu0 0
  %901 = vmatpush1.bf16.msra.mxu0 0
  %902 = vmatprep.subr.bf16.mxu0 0
  %903 = vmatpush1.bf16.msra.mxu0 0
  %904 = vmatprep.subr.bf16.mxu0 0
  %905 = vmatpush1.bf16.msra.mxu0 0
  %906 = vmatprep.subr.bf16.mxu0 0
  %907 = vmatpush1.bf16.msra.mxu0 0
  %908 = vmatprep.subr.bf16.mxu0 0
  %909 = vmatpush1.bf16.msra.mxu0 %v892
  %910 = vmatprep.subr.bf16.mxu0 0
  %911 = vmatpush2.bf16.msra.mxu0 0
  %912 = vmatprep.subr.bf16.mxu0 0
  %913 = vmatpush2.bf16.msra.mxu0 0
  %914 = vmatprep.subr.bf16.mxu0 0
  %915 = vmatpush2.bf16.msra.mxu0 0
  %916 = vmatprep.subr.bf16.mxu0 0
  %917 = vmatpush2.bf16.msra.mxu0 0
  %918 = vmatprep.subr.bf16.mxu0 0
  %919 = vmatpush2.bf16.msra.mxu0 0
  %920 = vmatprep.subr.bf16.mxu0 0
  %921 = vmatpush2.bf16.msra.mxu0 0
  %922 = vmatprep.subr.bf16.mxu0 0
  %923 = vmatpush2.bf16.msra.mxu0 0
  %924 = vmatprep.subr.bf16.mxu0 0
  %925 = vmatpush2.bf16.msra.mxu0 0
  %926 = vmatprep.mubr.bf16.mxu0 0
  %927 = vmatmul.mubr.bf16.gmra.mxu0 %v349
  %v928 = vpop.f32.mrf.mxu0
  %v929 = vadd.f32 0.0, %v928
  %v930 = vpop.f32.mrf.mxu0
  %v931 = vpop.f32.mrf.mxu0
  %v932 = vpop.f32.mrf.mxu0
  %933 = vdwg.mxu0
  %v934 = vpack.c.bf16 %v889, %v889
  %936 = vrot.lane.b32.xlu0 %v934, 96
  %v937 = vpop.permute.xlu0 %936
  %v939 = vsel %vm351, %v937, 0
  %941 = vmatprep.subr.bf16.mxu0 0
  %942 = vmatpush1.bf16.msra.mxu0 0
  %943 = vmatprep.subr.bf16.mxu0 0
  %944 = vmatpush1.bf16.msra.mxu0 0
  %945 = vmatprep.subr.bf16.mxu0 0
  %946 = vmatpush1.bf16.msra.mxu0 0
  %947 = vmatprep.subr.bf16.mxu0 0
  %948 = vmatpush1.bf16.msra.mxu0 0
  %949 = vmatprep.subr.bf16.mxu0 0
  %950 = vmatpush1.bf16.msra.mxu0 0
  %951 = vmatprep.subr.bf16.mxu0 0
  %952 = vmatpush1.bf16.msra.mxu0 0
  %953 = vmatprep.subr.bf16.mxu0 0
  %954 = vmatpush1.bf16.msra.mxu0 0
  %955 = vmatprep.subr.bf16.mxu0 0
  %956 = vmatpush1.bf16.msra.mxu0 %v939
  %957 = vmatprep.subr.bf16.mxu0 0
  %958 = vmatpush2.bf16.msra.mxu0 0
  %959 = vmatprep.subr.bf16.mxu0 0
  %960 = vmatpush2.bf16.msra.mxu0 0
  %961 = vmatprep.subr.bf16.mxu0 0
  %962 = vmatpush2.bf16.msra.mxu0 0
  %963 = vmatprep.subr.bf16.mxu0 0
  %964 = vmatpush2.bf16.msra.mxu0 0
  %965 = vmatprep.subr.bf16.mxu0 0
  %966 = vmatpush2.bf16.msra.mxu0 0
  %967 = vmatprep.subr.bf16.mxu0 0
  %968 = vmatpush2.bf16.msra.mxu0 0
  %969 = vmatprep.subr.bf16.mxu0 0
  %970 = vmatpush2.bf16.msra.mxu0 0
  %971 = vmatprep.subr.bf16.mxu0 0
  %972 = vmatpush2.bf16.msra.mxu0 0
  %973 = vmatprep.mubr.bf16.mxu0 0
  %974 = vmatmul.mubr.bf16.gmra.mxu0 %v349
  %v975 = vpop.f32.mrf.mxu0
  %v976 = vadd.f32 0.0, %v975
  %v977 = vpop.f32.mrf.mxu0
  %v978 = vpop.f32.mrf.mxu0
  %v979 = vpop.f32.mrf.mxu0
  %980 = vdwg.mxu0
  %v981 = vmul.f32 %v663, %v929
  %v982 = vadd.f32 %v981, %v976
  %v983 = vld [vmem:[%s11] sm:$0xff]
  %v984 = vld [vmem:[%s2] sm:$0xff]
  %v985 = vld [vmem:[%s2 + $0x8] sm:$0xff]
  %v986 = vld [vmem:[%s17] sm:$0x3]
  %v987 = vld [vmem:[%s18] sm:$0xf]
  %v988 = vld [vmem:[%s18 + $0x4] sm:$0xf]
  %v989 = vpack.c.bf16 %v982, %v982
  %v990 = vld [vmem:[%s15] sm:$0xf]
  %v991 = vld [vmem:[%s15 + $0x4] sm:$0xf]
  %v994 = vunpack.c.l.b16 %v990
  %v995 = vunpack.c.l.b16 %v991
  %v996 = vpack.c.b16 %v995, %v994
  %v998 = vsel %vm106, %v996, 0
  %v1001 = vsel %vm449, %v989, 0
  %1003 = vmatprep.subr.bf16.mxu0 0
  %1004 = vmatpush1.bf16.msra.mxu0 0
  %1005 = vmatprep.subr.bf16.mxu0 0
  %1006 = vmatpush1.bf16.msra.mxu0 0
  %1007 = vmatprep.subr.bf16.mxu0 0
  %1008 = vmatpush1.bf16.msra.mxu0 0
  %1009 = vmatprep.subr.bf16.mxu0 0
  %1010 = vmatpush1.bf16.msra.mxu0 0
  %1011 = vmatprep.subr.bf16.mxu0 0
  %1012 = vmatpush1.bf16.msra.mxu0 0
  %1013 = vmatprep.subr.bf16.mxu0 0
  %1014 = vmatpush1.bf16.msra.mxu0 0
  %1015 = vmatprep.subr.bf16.mxu0 0
  %1016 = vmatpush1.bf16.msra.mxu0 0
  %1017 = vmatprep.subr.bf16.mxu0 0
  %1018 = vmatpush1.bf16.msra.mxu0 %v1001
  %1019 = vmatprep.subr.bf16.mxu0 0
  %1020 = vmatpush2.bf16.msra.mxu0 0
  %1021 = vmatprep.subr.bf16.mxu0 0
  %1022 = vmatpush2.bf16.msra.mxu0 0
  %1023 = vmatprep.subr.bf16.mxu0 0
  %1024 = vmatpush2.bf16.msra.mxu0 0
  %1025 = vmatprep.subr.bf16.mxu0 0
  %1026 = vmatpush2.bf16.msra.mxu0 0
  %1027 = vmatprep.subr.bf16.mxu0 0
  %1028 = vmatpush2.bf16.msra.mxu0 0
  %1029 = vmatprep.subr.bf16.mxu0 0
  %1030 = vmatpush2.bf16.msra.mxu0 0
  %1031 = vmatprep.subr.bf16.mxu0 0
  %1032 = vmatpush2.bf16.msra.mxu0 0
  %1033 = vmatprep.subr.bf16.mxu0 0
  %1034 = vmatpush2.bf16.msra.mxu0 0
  %1035 = vmatprep.mubr.bf16.mxu0 0
  %1036 = vmatmul.mubr.bf16.gmra.mxu0 %v998
  %v1037 = vpop.f32.mrf.mxu0
  %v1038 = vadd.f32 0.0, %v1037
  %v1039 = vpop.f32.mrf.mxu0
  %v1040 = vpop.f32.mrf.mxu0
  %v1041 = vadd.f32 0.0, %v1040
  %v1042 = vpop.f32.mrf.mxu0
  %1043 = vdwg.mxu0
  %v1044 = vpack.c.bf16 %v1041, %v1038
  %s1045 = scalar_lea.vmem %s15, 8
  %v1046 = vld [vmem:[%s1045] sm:$0xf]
  %v1047 = vld [vmem:[%s1045 + $0x4] sm:$0xf]
  %v1050 = vunpack.c.l.b16 %v1046
  %v1051 = vunpack.c.l.b16 %v1047
  %v1052 = vpack.c.b16 %v1051, %v1050
  %v1054 = vsel %vm106, %v1052, 0
  %1056 = vmatprep.subr.bf16.mxu0 0
  %1057 = vmatpush1.bf16.msra.mxu0 0
  %1058 = vmatprep.subr.bf16.mxu0 0
  %1059 = vmatpush1.bf16.msra.mxu0 0
  %1060 = vmatprep.subr.bf16.mxu0 0
  %1061 = vmatpush1.bf16.msra.mxu0 0
  %1062 = vmatprep.subr.bf16.mxu0 0
  %1063 = vmatpush1.bf16.msra.mxu0 0
  %1064 = vmatprep.subr.bf16.mxu0 0
  %1065 = vmatpush1.bf16.msra.mxu0 0
  %1066 = vmatprep.subr.bf16.mxu0 0
  %1067 = vmatpush1.bf16.msra.mxu0 0
  %1068 = vmatprep.subr.bf16.mxu0 0
  %1069 = vmatpush1.bf16.msra.mxu0 0
  %1070 = vmatprep.subr.bf16.mxu0 0
  %1071 = vmatpush1.bf16.msra.mxu0 %v1001
  %1072 = vmatprep.subr.bf16.mxu0 0
  %1073 = vmatpush2.bf16.msra.mxu0 0
  %1074 = vmatprep.subr.bf16.mxu0 0
  %1075 = vmatpush2.bf16.msra.mxu0 0
  %1076 = vmatprep.subr.bf16.mxu0 0
  %1077 = vmatpush2.bf16.msra.mxu0 0
  %1078 = vmatprep.subr.bf16.mxu0 0
  %1079 = vmatpush2.bf16.msra.mxu0 0
  %1080 = vmatprep.subr.bf16.mxu0 0
  %1081 = vmatpush2.bf16.msra.mxu0 0
  %1082 = vmatprep.subr.bf16.mxu0 0
  %1083 = vmatpush2.bf16.msra.mxu0 0
  %1084 = vmatprep.subr.bf16.mxu0 0
  %1085 = vmatpush2.bf16.msra.mxu0 0
  %1086 = vmatprep.subr.bf16.mxu0 0
  %1087 = vmatpush2.bf16.msra.mxu0 0
  %1088 = vmatprep.mubr.bf16.mxu0 0
  %1089 = vmatmul.mubr.bf16.gmra.mxu0 %v1054
  %v1090 = vpop.f32.mrf.mxu0
  %v1091 = vadd.f32 0.0, %v1090
  %v1092 = vpop.f32.mrf.mxu0
  %v1093 = vpop.f32.mrf.mxu0
  %v1094 = vadd.f32 0.0, %v1093
  %v1095 = vpop.f32.mrf.mxu0
  %1096 = vdwg.mxu0
  %v1097 = vpack.c.bf16 %v1094, %v1091
  %s1098 = scalar_lea.vmem %s15, 16
  %v1099 = vld [vmem:[%s1098] sm:$0xf]
  %v1100 = vld [vmem:[%s1098 + $0x4] sm:$0xf]
  %v1103 = vunpack.c.l.b16 %v1099
  %v1104 = vunpack.c.l.b16 %v1100
  %v1105 = vpack.c.b16 %v1104, %v1103
  %v1107 = vsel %vm106, %v1105, 0
  %1109 = vmatprep.subr.bf16.mxu0 0
  %1110 = vmatpush1.bf16.msra.mxu0 0
  %1111 = vmatprep.subr.bf16.mxu0 0
  %1112 = vmatpush1.bf16.msra.mxu0 0
  %1113 = vmatprep.subr.bf16.mxu0 0
  %1114 = vmatpush1.bf16.msra.mxu0 0
  %1115 = vmatprep.subr.bf16.mxu0 0
  %1116 = vmatpush1.bf16.msra.mxu0 0
  %1117 = vmatprep.subr.bf16.mxu0 0
  %1118 = vmatpush1.bf16.msra.mxu0 0
  %1119 = vmatprep.subr.bf16.mxu0 0
  %1120 = vmatpush1.bf16.msra.mxu0 0
  %1121 = vmatprep.subr.bf16.mxu0 0
  %1122 = vmatpush1.bf16.msra.mxu0 0
  %1123 = vmatprep.subr.bf16.mxu0 0
  %1124 = vmatpush1.bf16.msra.mxu0 %v1001
  %1125 = vmatprep.subr.bf16.mxu0 0
  %1126 = vmatpush2.bf16.msra.mxu0 0
  %1127 = vmatprep.subr.bf16.mxu0 0
  %1128 = vmatpush2.bf16.msra.mxu0 0
  %1129 = vmatprep.subr.bf16.mxu0 0
  %1130 = vmatpush2.bf16.msra.mxu0 0
  %1131 = vmatprep.subr.bf16.mxu0 0
  %1132 = vmatpush2.bf16.msra.mxu0 0
  %1133 = vmatprep.subr.bf16.mxu0 0
  %1134 = vmatpush2.bf16.msra.mxu0 0
  %1135 = vmatprep.subr.bf16.mxu0 0
  %1136 = vmatpush2.bf16.msra.mxu0 0
  %1137 = vmatprep.subr.bf16.mxu0 0
  %1138 = vmatpush2.bf16.msra.mxu0 0
  %1139 = vmatprep.subr.bf16.mxu0 0
  %1140 = vmatpush2.bf16.msra.mxu0 0
  %1141 = vmatprep.mubr.bf16.mxu0 0
  %1142 = vmatmul.mubr.bf16.gmra.mxu0 %v1107
  %v1143 = vpop.f32.mrf.mxu0
  %v1144 = vadd.f32 0.0, %v1143
  %v1145 = vpop.f32.mrf.mxu0
  %v1146 = vpop.f32.mrf.mxu0
  %v1147 = vadd.f32 0.0, %v1146
  %v1148 = vpop.f32.mrf.mxu0
  %1149 = vdwg.mxu0
  %v1150 = vpack.c.bf16 %v1147, %v1144
  %1152 = vrot.lane.b32.xlu0 %v1097, 32
  %v1153 = vpop.permute.xlu0 %1152
  %1155 = vrot.lane.b32.xlu0 %v1150, 64
  %v1156 = vpop.permute.xlu0 %1155
  %v1159 = vsel %vm280, %v1044, %v1153
  %v1161 = vsel %vm549, %v1159, %v1156
  %v1162 = vld [vmem:[%s13] sm:$0xf]
  %v1163 = vld [vmem:[%s13 + $0x4] sm:$0xf]
  %v1164 = vld [vmem:[%s13 + $0x8] sm:$0xf]
  %v1165 = vld [vmem:[%s13 + $0xc] sm:$0xf]
  %v1166 = vld [vmem:[%s13 + $0x10] sm:$0xf]
  %v1167 = vld [vmem:[%s13 + $0x14] sm:$0xf]
  %v1168 = vld [vmem:[%s13 + $0x18] sm:$0xf]
  %v1169 = vld [vmem:[%s13 + $0x1c] sm:$0xf]
  %v1170 = vld [vmem:[%s13 + $0x20] sm:$0xf]
  %v1171 = vld [vmem:[%s13 + $0x24] sm:$0xf]
  %v1172 = vld [vmem:[%s13 + $0x28] sm:$0xf]
  %v1173 = vld [vmem:[%s13 + $0x2c] sm:$0xf]
  %v1174 = vlaneseq
  %v1175 = vshrl.u32 %v1174, 7
  %v1176 = vsub.s32 0, %v1175
  %v1177 = vrot.slane %v983, %v1176
  %v1190 = vunpack.c.l.b16 %v1162
  %v1191 = vunpack.c.l.b16 %v1163
  %v1192 = vunpack.c.l.b16 %v1164
  %v1193 = vunpack.c.l.b16 %v1165
  %v1194 = vunpack.c.l.b16 %v1166
  %v1195 = vunpack.c.l.b16 %v1167
  %v1196 = vunpack.c.l.b16 %v1168
  %v1197 = vunpack.c.l.b16 %v1169
  %v1198 = vunpack.c.l.b16 %v1170
  %v1199 = vunpack.c.l.b16 %v1171
  %v1200 = vunpack.c.l.b16 %v1172
  %v1201 = vunpack.c.l.b16 %v1173
  %v1202 = vpack.c.b16 %v1191, %v1190
  %v1203 = vpack.c.b16 %v1193, %v1192
  %v1204 = vpack.c.b16 %v1195, %v1194
  %v1205 = vpack.c.b16 %v1197, %v1196
  %v1206 = vpack.c.b16 %v1199, %v1198
  %v1207 = vpack.c.b16 %v1201, %v1200
  %v1214 = vsel %vm604, %v1161, 0
  %1216 = vmatprep.subr.bf16.mxu0 0
  %1217 = vmatpush1.bf16.msra.mxu0 0
  %1218 = vmatprep.subr.bf16.mxu0 0
  %1219 = vmatpush1.bf16.msra.mxu0 0
  %1220 = vmatprep.subr.bf16.mxu0 0
  %1221 = vmatpush1.bf16.msra.mxu0 %v1207
  %1222 = vmatprep.subr.bf16.mxu0 0
  %1223 = vmatpush1.bf16.msra.mxu0 %v1206
  %1224 = vmatprep.subr.bf16.mxu0 0
  %1225 = vmatpush1.bf16.msra.mxu0 %v1205
  %1226 = vmatprep.subr.bf16.mxu0 0
  %1227 = vmatpush1.bf16.msra.mxu0 %v1204
  %1228 = vmatprep.subr.bf16.mxu0 0
  %1229 = vmatpush1.bf16.msra.mxu0 %v1203
  %1230 = vmatprep.subr.bf16.mxu0 0
  %1231 = vmatpush1.bf16.msra.mxu0 %v1202
  %1232 = vmatprep.subr.bf16.mxu0 0
  %1233 = vmatpush2.bf16.msra.mxu0 0
  %1234 = vmatprep.subr.bf16.mxu0 0
  %1235 = vmatpush2.bf16.msra.mxu0 0
  %1236 = vmatprep.subr.bf16.mxu0 0
  %1237 = vmatpush2.bf16.msra.mxu0 0
  %1238 = vmatprep.subr.bf16.mxu0 0
  %1239 = vmatpush2.bf16.msra.mxu0 0
  %1240 = vmatprep.subr.bf16.mxu0 0
  %1241 = vmatpush2.bf16.msra.mxu0 0
  %1242 = vmatprep.subr.bf16.mxu0 0
  %1243 = vmatpush2.bf16.msra.mxu0 0
  %1244 = vmatprep.subr.bf16.mxu0 0
  %1245 = vmatpush2.bf16.msra.mxu0 0
  %1246 = vmatprep.subr.bf16.mxu0 0
  %1247 = vmatpush2.bf16.msra.mxu0 0
  %1248 = vmatprep.mubr.bf16.mxu0 0
  %1249 = vmatmul.mubr.bf16.gmra.mxu0 %v1214
  %v1250 = vpop.f32.mrf.mxu0
  %v1251 = vadd.f32 %v1177, %v1250
  %v1252 = vpop.f32.mrf.mxu0
  %v1253 = vpop.f32.mrf.mxu0
  %v1254 = vadd.f32 %v1177, %v1253
  %v1255 = vpop.f32.mrf.mxu0
  %1256 = vdwg.mxu0
  %v1257 = vld [vmem:[%s0] sm:$0x2]
  %v1258 = vld [vmem:[%s0 + $0x4] sm:$0x2]
  %v1259 = vld [vmem:[%s12] sm:$0xf]
  %v1260 = vld [vmem:[%s12 + $0x4] sm:$0xf]
  %v1261 = vld [vmem:[%s12 + $0x8] sm:$0xf]
  %v1262 = vld [vmem:[%s12 + $0xc] sm:$0xf]
  %1264 = vset.pattern.permute.xlu0 0
  %1265 = vperm.xlu0 %1264, %v984
  %v1266 = vpop.permute.xlu0 %1265
  %1269 = vset.pattern.permute.xlu0 0
  %1270 = vperm.xlu0 %1269, %v985
  %v1271 = vpop.permute.xlu0 %1270
  %v1273 = vlaneseq
  %v1274 = vshrl.u32 %v1273, 7
  %v1275 = vsub.s32 1, %v1274
  %v1276 = vrot.slane %v983, %v1275
  %v1277 = vmul.f32 %v1266, %v1276
  %v1278 = vmul.f32 %v1271, %v1276
  %v1279 = vadd.f32 %v1251, %v1277
  %v1280 = vadd.f32 %v1254, %v1278
  %v1281 = vmul.f32 %v1279, 0.2
  %v1282 = vmul.f32 %v1280, 0.2
  %v1283 = vmax.f32 %v1279, %v1281
  %v1284 = vmax.f32 %v1280, %v1282
  %vm1285 = vcmask 130048
  %v1287 = vsel %vm1285, %v986, 0
  %1289 = vmatprep.subr.mxu0 0.0
  %1290 = vmatpush1.msra.mxu0 0.0
  %1291 = vmatprep.subr.mxu0 0.0
  %1292 = vmatpush1.msra.mxu0 0.0
  %1293 = vmatprep.subr.mxu0 0.0
  %1294 = vmatpush1.msra.mxu0 0.0
  %1295 = vmatprep.subr.mxu0 0.0
  %1296 = vmatpush1.msra.mxu0 0.0
  %1297 = vmatprep.subr.mxu0 0.0
  %1298 = vmatpush1.msra.mxu0 0.0
  %1299 = vmatprep.subr.mxu0 0.0
  %1300 = vmatpush1.msra.mxu0 0.0
  %1301 = vmatprep.subr.mxu0 0.0
  %1302 = vmatpush1.msra.mxu0 0.0
  %1303 = vmatprep.subr.mxu0 0.0
  %1304 = vmatpush1.msra.mxu0 0.0
  %1305 = vmatprep.subr.mxu0 0.0
  %1306 = vmatpush1.msra.mxu0 0.0
  %1307 = vmatprep.subr.mxu0 0.0
  %1308 = vmatpush1.msra.mxu0 0.0
  %1309 = vmatprep.subr.mxu0 0.0
  %1310 = vmatpush1.msra.mxu0 0.0
  %1311 = vmatprep.subr.mxu0 0.0
  %1312 = vmatpush1.msra.mxu0 0.0
  %1313 = vmatprep.subr.mxu0 0.0
  %1314 = vmatpush1.msra.mxu0 0.0
  %1315 = vmatprep.subr.mxu0 0.0
  %1316 = vmatpush1.msra.mxu0 0.0
  %1317 = vmatprep.subr.mxu0 0.0
  %1318 = vmatpush1.msra.mxu0 %v1284
  %1319 = vmatprep.subr.mxu0 0.0
  %1320 = vmatpush1.msra.mxu0 %v1283
  %1321 = vmatprep.subr.mxu0 0.0
  %1322 = vmatpush2.msra.mxu0 0.0
  %1323 = vmatprep.subr.mxu0 0.0
  %1324 = vmatpush2.msra.mxu0 0.0
  %1325 = vmatprep.subr.mxu0 0.0
  %1326 = vmatpush2.msra.mxu0 0.0
  %1327 = vmatprep.subr.mxu0 0.0
  %1328 = vmatpush2.msra.mxu0 0.0
  %1329 = vmatprep.subr.mxu0 0.0
  %1330 = vmatpush2.msra.mxu0 0.0
  %1331 = vmatprep.subr.mxu0 0.0
  %1332 = vmatpush2.msra.mxu0 0.0
  %1333 = vmatprep.subr.mxu0 0.0
  %1334 = vmatpush2.msra.mxu0 0.0
  %1335 = vmatprep.subr.mxu0 0.0
  %1336 = vmatpush2.msra.mxu0 0.0
  %1337 = vmatprep.subr.mxu0 0.0
  %1338 = vmatpush2.msra.mxu0 0.0
  %1339 = vmatprep.subr.mxu0 0.0
  %1340 = vmatpush2.msra.mxu0 0.0
  %1341 = vmatprep.subr.mxu0 0.0
  %1342 = vmatpush2.msra.mxu0 0.0
  %1343 = vmatprep.subr.mxu0 0.0
  %1344 = vmatpush2.msra.mxu0 0.0
  %1345 = vmatprep.subr.mxu0 0.0
  %1346 = vmatpush2.msra.mxu0 0.0
  %1347 = vmatprep.subr.mxu0 0.0
  %1348 = vmatpush2.msra.mxu0 0.0
  %1349 = vmatprep.subr.mxu0 0.0
  %1350 = vmatpush2.msra.mxu0 0.0
  %1351 = vmatprep.subr.mxu0 0.0
  %1352 = vmatpush2.msra.mxu0 0.0
  %1353 = vmatprep.mubr.f32.mxu0 0.0
  %1354 = vmatmul.mubr.f32.gmra.mxu0 %v1287
  %v1355 = vpop.f32.mrf.mxu0
  %v1356 = vadd.f32 0.0, %v1355
  %v1357 = vpop.f32.mrf.mxu0
  %1358 = vdwg.mxu0
  %v1359 = vmul.f32 %v1283, %v1283
  %v1360 = vmul.f32 %v1284, %v1284
  %1361 = vmatprep.subr.mxu0 0.0
  %1362 = vmatpush1.msra.mxu0 0.0
  %1363 = vmatprep.subr.mxu0 0.0
  %1364 = vmatpush1.msra.mxu0 0.0
  %1365 = vmatprep.subr.mxu0 0.0
  %1366 = vmatpush1.msra.mxu0 0.0
  %1367 = vmatprep.subr.mxu0 0.0
  %1368 = vmatpush1.msra.mxu0 0.0
  %1369 = vmatprep.subr.mxu0 0.0
  %1370 = vmatpush1.msra.mxu0 0.0
  %1371 = vmatprep.subr.mxu0 0.0
  %1372 = vmatpush1.msra.mxu0 0.0
  %1373 = vmatprep.subr.mxu0 0.0
  %1374 = vmatpush1.msra.mxu0 0.0
  %1375 = vmatprep.subr.mxu0 0.0
  %1376 = vmatpush1.msra.mxu0 0.0
  %1377 = vmatprep.subr.mxu0 0.0
  %1378 = vmatpush1.msra.mxu0 0.0
  %1379 = vmatprep.subr.mxu0 0.0
  %1380 = vmatpush1.msra.mxu0 0.0
  %1381 = vmatprep.subr.mxu0 0.0
  %1382 = vmatpush1.msra.mxu0 0.0
  %1383 = vmatprep.subr.mxu0 0.0
  %1384 = vmatpush1.msra.mxu0 0.0
  %1385 = vmatprep.subr.mxu0 0.0
  %1386 = vmatpush1.msra.mxu0 0.0
  %1387 = vmatprep.subr.mxu0 0.0
  %1388 = vmatpush1.msra.mxu0 0.0
  %1389 = vmatprep.subr.mxu0 0.0
  %1390 = vmatpush1.msra.mxu0 %v1360
  %1391 = vmatprep.subr.mxu0 0.0
  %1392 = vmatpush1.msra.mxu0 %v1359
  %1393 = vmatprep.subr.mxu0 0.0
  %1394 = vmatpush2.msra.mxu0 0.0
  %1395 = vmatprep.subr.mxu0 0.0
  %1396 = vmatpush2.msra.mxu0 0.0
  %1397 = vmatprep.subr.mxu0 0.0
  %1398 = vmatpush2.msra.mxu0 0.0
  %1399 = vmatprep.subr.mxu0 0.0
  %1400 = vmatpush2.msra.mxu0 0.0
  %1401 = vmatprep.subr.mxu0 0.0
  %1402 = vmatpush2.msra.mxu0 0.0
  %1403 = vmatprep.subr.mxu0 0.0
  %1404 = vmatpush2.msra.mxu0 0.0
  %1405 = vmatprep.subr.mxu0 0.0
  %1406 = vmatpush2.msra.mxu0 0.0
  %1407 = vmatprep.subr.mxu0 0.0
  %1408 = vmatpush2.msra.mxu0 0.0
  %1409 = vmatprep.subr.mxu0 0.0
  %1410 = vmatpush2.msra.mxu0 0.0
  %1411 = vmatprep.subr.mxu0 0.0
  %1412 = vmatpush2.msra.mxu0 0.0
  %1413 = vmatprep.subr.mxu0 0.0
  %1414 = vmatpush2.msra.mxu0 0.0
  %1415 = vmatprep.subr.mxu0 0.0
  %1416 = vmatpush2.msra.mxu0 0.0
  %1417 = vmatprep.subr.mxu0 0.0
  %1418 = vmatpush2.msra.mxu0 0.0
  %1419 = vmatprep.subr.mxu0 0.0
  %1420 = vmatpush2.msra.mxu0 0.0
  %1421 = vmatprep.subr.mxu0 0.0
  %1422 = vmatpush2.msra.mxu0 0.0
  %1423 = vmatprep.subr.mxu0 0.0
  %1424 = vmatpush2.msra.mxu0 0.0
  %1425 = vmatprep.mubr.f32.mxu0 0.0
  %1426 = vmatmul.mubr.f32.gmra.mxu0 %v1287
  %v1427 = vpop.f32.mrf.mxu0
  %v1428 = vadd.f32 0.0, %v1427
  %v1429 = vpop.f32.mrf.mxu0
  %1430 = vdwg.mxu0
  %v1431 = vmul.f32 %v1356, %v1356
  %v1432 = vsub.f32 %v1428, %v1431
  %v1433 = vmax.f32 %v1432, 0.0
  %v1434 = vadd.f32 %v1433, 1e-05
  %v1435 = vrsqrt.pop %v1434
  %v1438 = vunpack.c.l.b16 %v1257
  %v1439 = vunpack.c.l.b16 %v1258
  %v1440 = vpack.c.b16 %v1438, %v1438
  %v1441 = vpack.c.b16 %v1439, %v1439
  %v1442 = vunpack.c.l.b16 %v1440
  %v1443 = vunpack.c.l.b16 %v1441
  %v1444 = vrot.slane %v1442, 2
  %v1445 = vrot.slane %v1443, 1
  %v1446 = vsel %vm265, %v1445, %v1444
  %v1447 = vpack.c.b16 %v1446, %v1446
  %v1452 = vunpack.c.l.b16 %v1259
  %v1453 = vunpack.c.l.b16 %v1260
  %v1454 = vunpack.c.l.b16 %v1261
  %v1455 = vunpack.c.l.b16 %v1262
  %v1456 = vpack.c.b16 %v1453, %v1452
  %v1457 = vpack.c.b16 %v1455, %v1454
  %v1461 = vsel %vm280, %v1447, 0
  %1463 = vmatprep.subr.bf16.mxu0 0
  %1464 = vmatpush1.bf16.msra.mxu0 0
  %1465 = vmatprep.subr.bf16.mxu0 0
  %1466 = vmatpush1.bf16.msra.mxu0 0
  %1467 = vmatprep.subr.bf16.mxu0 0
  %1468 = vmatpush1.bf16.msra.mxu0 0
  %1469 = vmatprep.subr.bf16.mxu0 0
  %1470 = vmatpush1.bf16.msra.mxu0 0
  %1471 = vmatprep.subr.bf16.mxu0 0
  %1472 = vmatpush1.bf16.msra.mxu0 0
  %1473 = vmatprep.subr.bf16.mxu0 0
  %1474 = vmatpush1.bf16.msra.mxu0 0
  %1475 = vmatprep.subr.bf16.mxu0 0
  %1476 = vmatpush1.bf16.msra.mxu0 %v1457
  %1477 = vmatprep.subr.bf16.mxu0 0
  %1478 = vmatpush1.bf16.msra.mxu0 %v1456
  %1479 = vmatprep.subr.bf16.mxu0 0
  %1480 = vmatpush2.bf16.msra.mxu0 0
  %1481 = vmatprep.subr.bf16.mxu0 0
  %1482 = vmatpush2.bf16.msra.mxu0 0
  %1483 = vmatprep.subr.bf16.mxu0 0
  %1484 = vmatpush2.bf16.msra.mxu0 0
  %1485 = vmatprep.subr.bf16.mxu0 0
  %1486 = vmatpush2.bf16.msra.mxu0 0
  %1487 = vmatprep.subr.bf16.mxu0 0
  %1488 = vmatpush2.bf16.msra.mxu0 0
  %1489 = vmatprep.subr.bf16.mxu0 0
  %1490 = vmatpush2.bf16.msra.mxu0 0
  %1491 = vmatprep.subr.bf16.mxu0 0
  %1492 = vmatpush2.bf16.msra.mxu0 0
  %1493 = vmatprep.subr.bf16.mxu0 0
  %1494 = vmatpush2.bf16.msra.mxu0 0
  %1495 = vmatprep.mubr.bf16.mxu0 0
  %1496 = vmatmul.mubr.bf16.gmra.mxu0 %v1461
  %v1497 = vpop.f32.mrf.mxu0
  %v1498 = vadd.f32 0.0, %v1497
  %v1499 = vpop.f32.mrf.mxu0
  %v1500 = vpop.f32.mrf.mxu0
  %v1501 = vpop.f32.mrf.mxu0
  %1502 = vdwg.mxu0
  %v1503 = vlaneseq
  %v1504 = vshrl.u32 %v1503, 7
  %v1505 = vsub.s32 2, %v1504
  %v1506 = vrot.slane %v983, %v1505
  %v1507 = vadd.f32 %v1498, %v1506
  %v1508 = vlaneseq
  %v1509 = vshrl.u32 %v1508, 7
  %v1510 = vsub.s32 3, %v1509
  %v1511 = vrot.slane %v983, %v1510
  %1513 = vrot.lane.b32.xlu0 %v1511, 16
  %v1514 = vpop.permute.xlu0 %1513
  %v1516 = vadd.f32 %v1498, %v1514
  %v1517 = vadd.f32 %v1507, 1.0
  %v1518 = vmul.f32 %v1435, %v1517
  %v1519 = vmul.f32 %v1356, %v1518
  %1521 = vrot.lane.b32.xlu0 %v1519, 16
  %v1522 = vpop.permute.xlu0 %1521
  %v1524 = vsub.f32 %v1516, %v1522
  %v1525 = vpack.c.bf16 %v1518, %v1518
  %v1528 = vunpack.c.l.b16 %v987
  %v1529 = vunpack.c.l.b16 %v988
  %v1530 = vpack.c.b16 %v1529, %v1528
  %v1532 = vsel %vm347, %v1530, 0
  %v1535 = vsel %vm351, %v1525, 0
  %1537 = vmatprep.subr.bf16.mxu0 0
  %1538 = vmatpush1.bf16.msra.mxu0 0
  %1539 = vmatprep.subr.bf16.mxu0 0
  %1540 = vmatpush1.bf16.msra.mxu0 0
  %1541 = vmatprep.subr.bf16.mxu0 0
  %1542 = vmatpush1.bf16.msra.mxu0 0
  %1543 = vmatprep.subr.bf16.mxu0 0
  %1544 = vmatpush1.bf16.msra.mxu0 0
  %1545 = vmatprep.subr.bf16.mxu0 0
  %1546 = vmatpush1.bf16.msra.mxu0 0
  %1547 = vmatprep.subr.bf16.mxu0 0
  %1548 = vmatpush1.bf16.msra.mxu0 0
  %1549 = vmatprep.subr.bf16.mxu0 0
  %1550 = vmatpush1.bf16.msra.mxu0 0
  %1551 = vmatprep.subr.bf16.mxu0 0
  %1552 = vmatpush1.bf16.msra.mxu0 %v1535
  %1553 = vmatprep.subr.bf16.mxu0 0
  %1554 = vmatpush2.bf16.msra.mxu0 0
  %1555 = vmatprep.subr.bf16.mxu0 0
  %1556 = vmatpush2.bf16.msra.mxu0 0
  %1557 = vmatprep.subr.bf16.mxu0 0
  %1558 = vmatpush2.bf16.msra.mxu0 0
  %1559 = vmatprep.subr.bf16.mxu0 0
  %1560 = vmatpush2.bf16.msra.mxu0 0
  %1561 = vmatprep.subr.bf16.mxu0 0
  %1562 = vmatpush2.bf16.msra.mxu0 0
  %1563 = vmatprep.subr.bf16.mxu0 0
  %1564 = vmatpush2.bf16.msra.mxu0 0
  %1565 = vmatprep.subr.bf16.mxu0 0
  %1566 = vmatpush2.bf16.msra.mxu0 0
  %1567 = vmatprep.subr.bf16.mxu0 0
  %1568 = vmatpush2.bf16.msra.mxu0 0
  %1569 = vmatprep.mubr.bf16.mxu0 0
  %1570 = vmatmul.mubr.bf16.gmra.mxu0 %v1532
  %v1571 = vpop.f32.mrf.mxu0
  %v1572 = vadd.f32 0.0, %v1571
  %v1573 = vpop.f32.mrf.mxu0
  %v1574 = vpop.f32.mrf.mxu0
  %v1575 = vadd.f32 0.0, %v1574
  %v1576 = vpop.f32.mrf.mxu0
  %1577 = vdwg.mxu0
  %v1578 = vpack.c.bf16 %v1524, %v1524
  %1580 = vrot.lane.b32.xlu0 %v1578, 112
  %v1581 = vpop.permute.xlu0 %1580
  %v1583 = vsel %vm351, %v1581, 0
  %1585 = vmatprep.subr.bf16.mxu0 0
  %1586 = vmatpush1.bf16.msra.mxu0 0
  %1587 = vmatprep.subr.bf16.mxu0 0
  %1588 = vmatpush1.bf16.msra.mxu0 0
  %1589 = vmatprep.subr.bf16.mxu0 0
  %1590 = vmatpush1.bf16.msra.mxu0 0
  %1591 = vmatprep.subr.bf16.mxu0 0
  %1592 = vmatpush1.bf16.msra.mxu0 0
  %1593 = vmatprep.subr.bf16.mxu0 0
  %1594 = vmatpush1.bf16.msra.mxu0 0
  %1595 = vmatprep.subr.bf16.mxu0 0
  %1596 = vmatpush1.bf16.msra.mxu0 0
  %1597 = vmatprep.subr.bf16.mxu0 0
  %1598 = vmatpush1.bf16.msra.mxu0 0
  %1599 = vmatprep.subr.bf16.mxu0 0
  %1600 = vmatpush1.bf16.msra.mxu0 %v1583
  %1601 = vmatprep.subr.bf16.mxu0 0
  %1602 = vmatpush2.bf16.msra.mxu0 0
  %1603 = vmatprep.subr.bf16.mxu0 0
  %1604 = vmatpush2.bf16.msra.mxu0 0
  %1605 = vmatprep.subr.bf16.mxu0 0
  %1606 = vmatpush2.bf16.msra.mxu0 0
  %1607 = vmatprep.subr.bf16.mxu0 0
  %1608 = vmatpush2.bf16.msra.mxu0 0
  %1609 = vmatprep.subr.bf16.mxu0 0
  %1610 = vmatpush2.bf16.msra.mxu0 0
  %1611 = vmatprep.subr.bf16.mxu0 0
  %1612 = vmatpush2.bf16.msra.mxu0 0
  %1613 = vmatprep.subr.bf16.mxu0 0
  %1614 = vmatpush2.bf16.msra.mxu0 0
  %1615 = vmatprep.subr.bf16.mxu0 0
  %1616 = vmatpush2.bf16.msra.mxu0 0
  %1617 = vmatprep.mubr.bf16.mxu0 0
  %1618 = vmatmul.mubr.bf16.gmra.mxu0 %v1532
  %v1619 = vpop.f32.mrf.mxu0
  %v1620 = vadd.f32 0.0, %v1619
  %v1621 = vpop.f32.mrf.mxu0
  %v1622 = vpop.f32.mrf.mxu0
  %v1623 = vadd.f32 0.0, %v1622
  %v1624 = vpop.f32.mrf.mxu0
  %1625 = vdwg.mxu0
  %v1626 = vmul.f32 %v1283, %v1572
  %v1627 = vmul.f32 %v1284, %v1575
  %v1628 = vadd.f32 %v1626, %v1620
  %v1629 = vadd.f32 %v1627, %v1623
  %v1630 = vpack.c.bf16 %v1629, %v1628
  %v1631 = vld [vmem:[%s16] sm:$0xf]
  %v1632 = vld [vmem:[%s16 + $0x4] sm:$0xf]
  %v1635 = vunpack.c.l.b16 %v1631
  %v1636 = vunpack.c.l.b16 %v1632
  %v1637 = vpack.c.b16 %v1636, %v1635
  %v1639 = vsel %vm1285, %v1637, 0
  %1641 = vmatprep.subr.bf16.mxu0 0
  %1642 = vmatpush1.bf16.msra.mxu0 0
  %1643 = vmatprep.subr.bf16.mxu0 0
  %1644 = vmatpush1.bf16.msra.mxu0 0
  %1645 = vmatprep.subr.bf16.mxu0 0
  %1646 = vmatpush1.bf16.msra.mxu0 0
  %1647 = vmatprep.subr.bf16.mxu0 0
  %1648 = vmatpush1.bf16.msra.mxu0 0
  %1649 = vmatprep.subr.bf16.mxu0 0
  %1650 = vmatpush1.bf16.msra.mxu0 0
  %1651 = vmatprep.subr.bf16.mxu0 0
  %1652 = vmatpush1.bf16.msra.mxu0 0
  %1653 = vmatprep.subr.bf16.mxu0 0
  %1654 = vmatpush1.bf16.msra.mxu0 0
  %1655 = vmatprep.subr.bf16.mxu0 0
  %1656 = vmatpush1.bf16.msra.mxu0 %v1630
  %1657 = vmatprep.subr.bf16.mxu0 0
  %1658 = vmatpush2.bf16.msra.mxu0 0
  %1659 = vmatprep.subr.bf16.mxu0 0
  %1660 = vmatpush2.bf16.msra.mxu0 0
  %1661 = vmatprep.subr.bf16.mxu0 0
  %1662 = vmatpush2.bf16.msra.mxu0 0
  %1663 = vmatprep.subr.bf16.mxu0 0
  %1664 = vmatpush2.bf16.msra.mxu0 0
  %1665 = vmatprep.subr.bf16.mxu0 0
  %1666 = vmatpush2.bf16.msra.mxu0 0
  %1667 = vmatprep.subr.bf16.mxu0 0
  %1668 = vmatpush2.bf16.msra.mxu0 0
  %1669 = vmatprep.subr.bf16.mxu0 0
  %1670 = vmatpush2.bf16.msra.mxu0 0
  %1671 = vmatprep.subr.bf16.mxu0 0
  %1672 = vmatpush2.bf16.msra.mxu0 0
  %1673 = vmatprep.mubr.bf16.mxu0 0
  %1674 = vmatmul.mubr.bf16.gmra.mxu0 %v1639
  %v1675 = vpop.f32.mrf.mxu0
  %v1676 = vadd.f32 0.0, %v1675
  %v1677 = vpop.f32.mrf.mxu0
  %v1678 = vpop.f32.mrf.mxu0
  %v1679 = vadd.f32 0.0, %v1678
  %v1680 = vpop.f32.mrf.mxu0
  %1681 = vdwg.mxu0
  %v1682 = vpack.c.bf16 %v1679, %v1676
  %s1683 = scalar_lea.vmem %s16, 8
  %v1684 = vld [vmem:[%s1683] sm:$0xf]
  %v1685 = vld [vmem:[%s1683 + $0x4] sm:$0xf]
  %v1688 = vunpack.c.l.b16 %v1684
  %v1689 = vunpack.c.l.b16 %v1685
  %v1690 = vpack.c.b16 %v1689, %v1688
  %v1692 = vsel %vm1285, %v1690, 0
  %1694 = vmatprep.subr.bf16.mxu0 0
  %1695 = vmatpush1.bf16.msra.mxu0 0
  %1696 = vmatprep.subr.bf16.mxu0 0
  %1697 = vmatpush1.bf16.msra.mxu0 0
  %1698 = vmatprep.subr.bf16.mxu0 0
  %1699 = vmatpush1.bf16.msra.mxu0 0
  %1700 = vmatprep.subr.bf16.mxu0 0
  %1701 = vmatpush1.bf16.msra.mxu0 0
  %1702 = vmatprep.subr.bf16.mxu0 0
  %1703 = vmatpush1.bf16.msra.mxu0 0
  %1704 = vmatprep.subr.bf16.mxu0 0
  %1705 = vmatpush1.bf16.msra.mxu0 0
  %1706 = vmatprep.subr.bf16.mxu0 0
  %1707 = vmatpush1.bf16.msra.mxu0 0
  %1708 = vmatprep.subr.bf16.mxu0 0
  %1709 = vmatpush1.bf16.msra.mxu0 %v1630
  %1710 = vmatprep.subr.bf16.mxu0 0
  %1711 = vmatpush2.bf16.msra.mxu0 0
  %1712 = vmatprep.subr.bf16.mxu0 0
  %1713 = vmatpush2.bf16.msra.mxu0 0
  %1714 = vmatprep.subr.bf16.mxu0 0
  %1715 = vmatpush2.bf16.msra.mxu0 0
  %1716 = vmatprep.subr.bf16.mxu0 0
  %1717 = vmatpush2.bf16.msra.mxu0 0
  %1718 = vmatprep.subr.bf16.mxu0 0
  %1719 = vmatpush2.bf16.msra.mxu0 0
  %1720 = vmatprep.subr.bf16.mxu0 0
  %1721 = vmatpush2.bf16.msra.mxu0 0
  %1722 = vmatprep.subr.bf16.mxu0 0
  %1723 = vmatpush2.bf16.msra.mxu0 0
  %1724 = vmatprep.subr.bf16.mxu0 0
  %1725 = vmatpush2.bf16.msra.mxu0 0
  %1726 = vmatprep.mubr.bf16.mxu0 0
  %1727 = vmatmul.mubr.bf16.gmra.mxu0 %v1692
  %v1728 = vpop.f32.mrf.mxu0
  %v1729 = vadd.f32 0.0, %v1728
  %v1730 = vpop.f32.mrf.mxu0
  %v1731 = vpop.f32.mrf.mxu0
  %v1732 = vadd.f32 0.0, %v1731
  %v1733 = vpop.f32.mrf.mxu0
  %1734 = vdwg.mxu0
  %v1735 = vpack.c.bf16 %v1732, %v1729
  %1737 = vrot.lane.b32.xlu0 %v1630, 16
  %v1738 = vpop.permute.xlu0 %1737
  %1740 = vrot.lane.b32.xlu0 %v1735, 32
  %v1741 = vpop.permute.xlu0 %1740
  %v1744 = vsel %vm1285, %v1682, %v1738
  %v1746 = vsel %vm280, %v1744, %v1741
  %v1747 = vld [vmem:[%s14] sm:$0xf]
  %v1748 = vld [vmem:[%s14 + $0x4] sm:$0xf]
  %v1749 = vld [vmem:[%s14 + $0x8] sm:$0xf]
  %v1750 = vld [vmem:[%s14 + $0xc] sm:$0xf]
  %v1751 = vld [vmem:[%s14 + $0x10] sm:$0xf]
  %v1752 = vld [vmem:[%s14 + $0x14] sm:$0xf]
  %v1753 = vlaneseq
  %v1754 = vshrl.u32 %v1753, 7
  %v1755 = vsub.s32 4, %v1754
  %v1756 = vrot.slane %v983, %v1755
  %v1763 = vunpack.c.l.b16 %v1747
  %v1764 = vunpack.c.l.b16 %v1748
  %v1765 = vunpack.c.l.b16 %v1749
  %v1766 = vunpack.c.l.b16 %v1750
  %v1767 = vunpack.c.l.b16 %v1751
  %v1768 = vunpack.c.l.b16 %v1752
  %v1769 = vpack.c.b16 %v1764, %v1763
  %v1770 = vpack.c.b16 %v1766, %v1765
  %v1771 = vpack.c.b16 %v1768, %v1767
  %vm1775 = vcmask 392192
  %v1776 = vsel %vm1775, %v1746, 0
  %1778 = vmatprep.subr.bf16.mxu0 0
  %1779 = vmatpush1.bf16.msra.mxu0 0
  %1780 = vmatprep.subr.bf16.mxu0 0
  %1781 = vmatpush1.bf16.msra.mxu0 0
  %1782 = vmatprep.subr.bf16.mxu0 0
  %1783 = vmatpush1.bf16.msra.mxu0 0
  %1784 = vmatprep.subr.bf16.mxu0 0
  %1785 = vmatpush1.bf16.msra.mxu0 0
  %1786 = vmatprep.subr.bf16.mxu0 0
  %1787 = vmatpush1.bf16.msra.mxu0 0
  %1788 = vmatprep.subr.bf16.mxu0 0
  %1789 = vmatpush1.bf16.msra.mxu0 %v1771
  %1790 = vmatprep.subr.bf16.mxu0 0
  %1791 = vmatpush1.bf16.msra.mxu0 %v1770
  %1792 = vmatprep.subr.bf16.mxu0 0
  %1793 = vmatpush1.bf16.msra.mxu0 %v1769
  %1794 = vmatprep.subr.bf16.mxu0 0
  %1795 = vmatpush2.bf16.msra.mxu0 0
  %1796 = vmatprep.subr.bf16.mxu0 0
  %1797 = vmatpush2.bf16.msra.mxu0 0
  %1798 = vmatprep.subr.bf16.mxu0 0
  %1799 = vmatpush2.bf16.msra.mxu0 0
  %1800 = vmatprep.subr.bf16.mxu0 0
  %1801 = vmatpush2.bf16.msra.mxu0 0
  %1802 = vmatprep.subr.bf16.mxu0 0
  %1803 = vmatpush2.bf16.msra.mxu0 0
  %1804 = vmatprep.subr.bf16.mxu0 0
  %1805 = vmatpush2.bf16.msra.mxu0 0
  %1806 = vmatprep.subr.bf16.mxu0 0
  %1807 = vmatpush2.bf16.msra.mxu0 0
  %1808 = vmatprep.subr.bf16.mxu0 0
  %1809 = vmatpush2.bf16.msra.mxu0 0
  %1810 = vmatprep.mubr.bf16.mxu0 0
  %1811 = vmatmul.mubr.bf16.gmra.mxu0 %v1776
  %v1812 = vpop.f32.mrf.mxu0
  %v1813 = vadd.f32 %v1756, %v1812
  %v1814 = vpop.f32.mrf.mxu0
  %v1815 = vpop.f32.mrf.mxu0
  %v1816 = vadd.f32 %v1756, %v1815
  %v1817 = vpop.f32.mrf.mxu0
  %1818 = vdwg.mxu0
  %s1819 = scalar_lea.vmem %s12, 16
  %v1820 = vld [vmem:[%s1819] sm:$0xf]
  %v1821 = vld [vmem:[%s1819 + $0x4] sm:$0xf]
  %v1822 = vld [vmem:[%s1819 + $0x8] sm:$0xf]
  %v1823 = vld [vmem:[%s1819 + $0xc] sm:$0xf]
  %1824 = vset.pattern.permute.xlu0 1
  %1825 = vperm.xlu0 %1824, %v984
  %v1826 = vpop.permute.xlu0 %1825
  %1828 = vset.pattern.permute.xlu0 1
  %1829 = vperm.xlu0 %1828, %v985
  %v1830 = vpop.permute.xlu0 %1829
  %v1832 = vlaneseq
  %v1833 = vshrl.u32 %v1832, 7
  %v1834 = vsub.s32 5, %v1833
  %v1835 = vrot.slane %v983, %v1834
  %v1836 = vmul.f32 %v1826, %v1835
  %v1837 = vmul.f32 %v1830, %v1835
  %v1838 = vadd.f32 %v1813, %v1836
  %v1839 = vadd.f32 %v1816, %v1837
  %v1840 = vmul.f32 %v1838, 0.2
  %v1841 = vmul.f32 %v1839, 0.2
  %v1842 = vmax.f32 %v1838, %v1840
  %v1843 = vmax.f32 %v1839, %v1841
  %1844 = vmatprep.subr.mxu0 0.0
  %1845 = vmatpush1.msra.mxu0 0.0
  %1846 = vmatprep.subr.mxu0 0.0
  %1847 = vmatpush1.msra.mxu0 0.0
  %1848 = vmatprep.subr.mxu0 0.0
  %1849 = vmatpush1.msra.mxu0 0.0
  %1850 = vmatprep.subr.mxu0 0.0
  %1851 = vmatpush1.msra.mxu0 0.0
  %1852 = vmatprep.subr.mxu0 0.0
  %1853 = vmatpush1.msra.mxu0 0.0
  %1854 = vmatprep.subr.mxu0 0.0
  %1855 = vmatpush1.msra.mxu0 0.0
  %1856 = vmatprep.subr.mxu0 0.0
  %1857 = vmatpush1.msra.mxu0 0.0
  %1858 = vmatprep.subr.mxu0 0.0
  %1859 = vmatpush1.msra.mxu0 0.0
  %1860 = vmatprep.subr.mxu0 0.0
  %1861 = vmatpush1.msra.mxu0 0.0
  %1862 = vmatprep.subr.mxu0 0.0
  %1863 = vmatpush1.msra.mxu0 0.0
  %1864 = vmatprep.subr.mxu0 0.0
  %1865 = vmatpush1.msra.mxu0 0.0
  %1866 = vmatprep.subr.mxu0 0.0
  %1867 = vmatpush1.msra.mxu0 0.0
  %1868 = vmatprep.subr.mxu0 0.0
  %1869 = vmatpush1.msra.mxu0 0.0
  %1870 = vmatprep.subr.mxu0 0.0
  %1871 = vmatpush1.msra.mxu0 0.0
  %1872 = vmatprep.subr.mxu0 0.0
  %1873 = vmatpush1.msra.mxu0 %v1843
  %1874 = vmatprep.subr.mxu0 0.0
  %1875 = vmatpush1.msra.mxu0 %v1842
  %1876 = vmatprep.subr.mxu0 0.0
  %1877 = vmatpush2.msra.mxu0 0.0
  %1878 = vmatprep.subr.mxu0 0.0
  %1879 = vmatpush2.msra.mxu0 0.0
  %1880 = vmatprep.subr.mxu0 0.0
  %1881 = vmatpush2.msra.mxu0 0.0
  %1882 = vmatprep.subr.mxu0 0.0
  %1883 = vmatpush2.msra.mxu0 0.0
  %1884 = vmatprep.subr.mxu0 0.0
  %1885 = vmatpush2.msra.mxu0 0.0
  %1886 = vmatprep.subr.mxu0 0.0
  %1887 = vmatpush2.msra.mxu0 0.0
  %1888 = vmatprep.subr.mxu0 0.0
  %1889 = vmatpush2.msra.mxu0 0.0
  %1890 = vmatprep.subr.mxu0 0.0
  %1891 = vmatpush2.msra.mxu0 0.0
  %1892 = vmatprep.subr.mxu0 0.0
  %1893 = vmatpush2.msra.mxu0 0.0
  %1894 = vmatprep.subr.mxu0 0.0
  %1895 = vmatpush2.msra.mxu0 0.0
  %1896 = vmatprep.subr.mxu0 0.0
  %1897 = vmatpush2.msra.mxu0 0.0
  %1898 = vmatprep.subr.mxu0 0.0
  %1899 = vmatpush2.msra.mxu0 0.0
  %1900 = vmatprep.subr.mxu0 0.0
  %1901 = vmatpush2.msra.mxu0 0.0
  %1902 = vmatprep.subr.mxu0 0.0
  %1903 = vmatpush2.msra.mxu0 0.0
  %1904 = vmatprep.subr.mxu0 0.0
  %1905 = vmatpush2.msra.mxu0 0.0
  %1906 = vmatprep.subr.mxu0 0.0
  %1907 = vmatpush2.msra.mxu0 0.0
  %1908 = vmatprep.mubr.f32.mxu0 0.0
  %1909 = vmatmul.mubr.f32.gmra.mxu0 %v1287
  %v1910 = vpop.f32.mrf.mxu0
  %v1911 = vadd.f32 0.0, %v1910
  %v1912 = vpop.f32.mrf.mxu0
  %1913 = vdwg.mxu0
  %v1914 = vmul.f32 %v1842, %v1842
  %v1915 = vmul.f32 %v1843, %v1843
  %1916 = vmatprep.subr.mxu0 0.0
  %1917 = vmatpush1.msra.mxu0 0.0
  %1918 = vmatprep.subr.mxu0 0.0
  %1919 = vmatpush1.msra.mxu0 0.0
  %1920 = vmatprep.subr.mxu0 0.0
  %1921 = vmatpush1.msra.mxu0 0.0
  %1922 = vmatprep.subr.mxu0 0.0
  %1923 = vmatpush1.msra.mxu0 0.0
  %1924 = vmatprep.subr.mxu0 0.0
  %1925 = vmatpush1.msra.mxu0 0.0
  %1926 = vmatprep.subr.mxu0 0.0
  %1927 = vmatpush1.msra.mxu0 0.0
  %1928 = vmatprep.subr.mxu0 0.0
  %1929 = vmatpush1.msra.mxu0 0.0
  %1930 = vmatprep.subr.mxu0 0.0
  %1931 = vmatpush1.msra.mxu0 0.0
  %1932 = vmatprep.subr.mxu0 0.0
  %1933 = vmatpush1.msra.mxu0 0.0
  %1934 = vmatprep.subr.mxu0 0.0
  %1935 = vmatpush1.msra.mxu0 0.0
  %1936 = vmatprep.subr.mxu0 0.0
  %1937 = vmatpush1.msra.mxu0 0.0
  %1938 = vmatprep.subr.mxu0 0.0
  %1939 = vmatpush1.msra.mxu0 0.0
  %1940 = vmatprep.subr.mxu0 0.0
  %1941 = vmatpush1.msra.mxu0 0.0
  %1942 = vmatprep.subr.mxu0 0.0
  %1943 = vmatpush1.msra.mxu0 0.0
  %1944 = vmatprep.subr.mxu0 0.0
  %1945 = vmatpush1.msra.mxu0 %v1915
  %1946 = vmatprep.subr.mxu0 0.0
  %1947 = vmatpush1.msra.mxu0 %v1914
  %1948 = vmatprep.subr.mxu0 0.0
  %1949 = vmatpush2.msra.mxu0 0.0
  %1950 = vmatprep.subr.mxu0 0.0
  %1951 = vmatpush2.msra.mxu0 0.0
  %1952 = vmatprep.subr.mxu0 0.0
  %1953 = vmatpush2.msra.mxu0 0.0
  %1954 = vmatprep.subr.mxu0 0.0
  %1955 = vmatpush2.msra.mxu0 0.0
  %1956 = vmatprep.subr.mxu0 0.0
  %1957 = vmatpush2.msra.mxu0 0.0
  %1958 = vmatprep.subr.mxu0 0.0
  %1959 = vmatpush2.msra.mxu0 0.0
  %1960 = vmatprep.subr.mxu0 0.0
  %1961 = vmatpush2.msra.mxu0 0.0
  %1962 = vmatprep.subr.mxu0 0.0
  %1963 = vmatpush2.msra.mxu0 0.0
  %1964 = vmatprep.subr.mxu0 0.0
  %1965 = vmatpush2.msra.mxu0 0.0
  %1966 = vmatprep.subr.mxu0 0.0
  %1967 = vmatpush2.msra.mxu0 0.0
  %1968 = vmatprep.subr.mxu0 0.0
  %1969 = vmatpush2.msra.mxu0 0.0
  %1970 = vmatprep.subr.mxu0 0.0
  %1971 = vmatpush2.msra.mxu0 0.0
  %1972 = vmatprep.subr.mxu0 0.0
  %1973 = vmatpush2.msra.mxu0 0.0
  %1974 = vmatprep.subr.mxu0 0.0
  %1975 = vmatpush2.msra.mxu0 0.0
  %1976 = vmatprep.subr.mxu0 0.0
  %1977 = vmatpush2.msra.mxu0 0.0
  %1978 = vmatprep.subr.mxu0 0.0
  %1979 = vmatpush2.msra.mxu0 0.0
  %1980 = vmatprep.mubr.f32.mxu0 0.0
  %1981 = vmatmul.mubr.f32.gmra.mxu0 %v1287
  %v1982 = vpop.f32.mrf.mxu0
  %v1983 = vadd.f32 0.0, %v1982
  %v1984 = vpop.f32.mrf.mxu0
  %1985 = vdwg.mxu0
  %v1986 = vmul.f32 %v1911, %v1911
  %v1987 = vsub.f32 %v1983, %v1986
  %v1988 = vmax.f32 %v1987, 0.0
  %v1989 = vadd.f32 %v1988, 1e-05
  %v1990 = vrsqrt.pop %v1989
  %v1991 = vrot.slane %v1442, 3
  %v1992 = vrot.slane %v1443, 2
  %v1993 = vsel %vm265, %v1992, %v1991
  %v1994 = vpack.c.b16 %v1993, %v1993
  %v1999 = vunpack.c.l.b16 %v1820
  %v2000 = vunpack.c.l.b16 %v1821
  %v2001 = vunpack.c.l.b16 %v1822
  %v2002 = vunpack.c.l.b16 %v1823
  %v2003 = vpack.c.b16 %v2000, %v1999
  %v2004 = vpack.c.b16 %v2002, %v2001
  %v2008 = vsel %vm280, %v1994, 0
  %2010 = vmatprep.subr.bf16.mxu0 0
  %2011 = vmatpush1.bf16.msra.mxu0 0
  %2012 = vmatprep.subr.bf16.mxu0 0
  %2013 = vmatpush1.bf16.msra.mxu0 0
  %2014 = vmatprep.subr.bf16.mxu0 0
  %2015 = vmatpush1.bf16.msra.mxu0 0
  %2016 = vmatprep.subr.bf16.mxu0 0
  %2017 = vmatpush1.bf16.msra.mxu0 0
  %2018 = vmatprep.subr.bf16.mxu0 0
  %2019 = vmatpush1.bf16.msra.mxu0 0
  %2020 = vmatprep.subr.bf16.mxu0 0
  %2021 = vmatpush1.bf16.msra.mxu0 0
  %2022 = vmatprep.subr.bf16.mxu0 0
  %2023 = vmatpush1.bf16.msra.mxu0 %v2004
  %2024 = vmatprep.subr.bf16.mxu0 0
  %2025 = vmatpush1.bf16.msra.mxu0 %v2003
  %2026 = vmatprep.subr.bf16.mxu0 0
  %2027 = vmatpush2.bf16.msra.mxu0 0
  %2028 = vmatprep.subr.bf16.mxu0 0
  %2029 = vmatpush2.bf16.msra.mxu0 0
  %2030 = vmatprep.subr.bf16.mxu0 0
  %2031 = vmatpush2.bf16.msra.mxu0 0
  %2032 = vmatprep.subr.bf16.mxu0 0
  %2033 = vmatpush2.bf16.msra.mxu0 0
  %2034 = vmatprep.subr.bf16.mxu0 0
  %2035 = vmatpush2.bf16.msra.mxu0 0
  %2036 = vmatprep.subr.bf16.mxu0 0
  %2037 = vmatpush2.bf16.msra.mxu0 0
  %2038 = vmatprep.subr.bf16.mxu0 0
  %2039 = vmatpush2.bf16.msra.mxu0 0
  %2040 = vmatprep.subr.bf16.mxu0 0
  %2041 = vmatpush2.bf16.msra.mxu0 0
  %2042 = vmatprep.mubr.bf16.mxu0 0
  %2043 = vmatmul.mubr.bf16.gmra.mxu0 %v2008
  %v2044 = vpop.f32.mrf.mxu0
  %v2045 = vadd.f32 0.0, %v2044
  %v2046 = vpop.f32.mrf.mxu0
  %v2047 = vpop.f32.mrf.mxu0
  %v2048 = vpop.f32.mrf.mxu0
  %2049 = vdwg.mxu0
  %v2050 = vlaneseq
  %v2051 = vshrl.u32 %v2050, 7
  %v2052 = vsub.s32 6, %v2051
  %v2053 = vrot.slane %v983, %v2052
  %v2054 = vadd.f32 %v2045, %v2053
  %v2055 = vlaneseq
  %v2056 = vshrl.u32 %v2055, 7
  %v2057 = vsub.s32 7, %v2056
  %v2058 = vrot.slane %v983, %v2057
  %2060 = vrot.lane.b32.xlu0 %v2058, 16
  %v2061 = vpop.permute.xlu0 %2060
  %v2063 = vadd.f32 %v2045, %v2061
  %v2064 = vadd.f32 %v2054, 1.0
  %v2065 = vmul.f32 %v1990, %v2064
  %v2066 = vmul.f32 %v1911, %v2065
  %2068 = vrot.lane.b32.xlu0 %v2066, 16
  %v2069 = vpop.permute.xlu0 %2068
  %v2071 = vsub.f32 %v2063, %v2069
  %v2072 = vpack.c.bf16 %v2065, %v2065
  %v2074 = vsel %vm351, %v2072, 0
  %2076 = vmatprep.subr.bf16.mxu0 0
  %2077 = vmatpush1.bf16.msra.mxu0 0
  %2078 = vmatprep.subr.bf16.mxu0 0
  %2079 = vmatpush1.bf16.msra.mxu0 0
  %2080 = vmatprep.subr.bf16.mxu0 0
  %2081 = vmatpush1.bf16.msra.mxu0 0
  %2082 = vmatprep.subr.bf16.mxu0 0
  %2083 = vmatpush1.bf16.msra.mxu0 0
  %2084 = vmatprep.subr.bf16.mxu0 0
  %2085 = vmatpush1.bf16.msra.mxu0 0
  %2086 = vmatprep.subr.bf16.mxu0 0
  %2087 = vmatpush1.bf16.msra.mxu0 0
  %2088 = vmatprep.subr.bf16.mxu0 0
  %2089 = vmatpush1.bf16.msra.mxu0 0
  %2090 = vmatprep.subr.bf16.mxu0 0
  %2091 = vmatpush1.bf16.msra.mxu0 %v2074
  %2092 = vmatprep.subr.bf16.mxu0 0
  %2093 = vmatpush2.bf16.msra.mxu0 0
  %2094 = vmatprep.subr.bf16.mxu0 0
  %2095 = vmatpush2.bf16.msra.mxu0 0
  %2096 = vmatprep.subr.bf16.mxu0 0
  %2097 = vmatpush2.bf16.msra.mxu0 0
  %2098 = vmatprep.subr.bf16.mxu0 0
  %2099 = vmatpush2.bf16.msra.mxu0 0
  %2100 = vmatprep.subr.bf16.mxu0 0
  %2101 = vmatpush2.bf16.msra.mxu0 0
  %2102 = vmatprep.subr.bf16.mxu0 0
  %2103 = vmatpush2.bf16.msra.mxu0 0
  %2104 = vmatprep.subr.bf16.mxu0 0
  %2105 = vmatpush2.bf16.msra.mxu0 0
  %2106 = vmatprep.subr.bf16.mxu0 0
  %2107 = vmatpush2.bf16.msra.mxu0 0
  %2108 = vmatprep.mubr.bf16.mxu0 0
  %2109 = vmatmul.mubr.bf16.gmra.mxu0 %v1532
  %v2110 = vpop.f32.mrf.mxu0
  %v2111 = vadd.f32 0.0, %v2110
  %v2112 = vpop.f32.mrf.mxu0
  %v2113 = vpop.f32.mrf.mxu0
  %v2114 = vadd.f32 0.0, %v2113
  %v2115 = vpop.f32.mrf.mxu0
  %2116 = vdwg.mxu0
  %v2117 = vpack.c.bf16 %v2071, %v2071
  %2119 = vrot.lane.b32.xlu0 %v2117, 112
  %v2120 = vpop.permute.xlu0 %2119
  %v2122 = vsel %vm351, %v2120, 0
  %2124 = vmatprep.subr.bf16.mxu0 0
  %2125 = vmatpush1.bf16.msra.mxu0 0
  %2126 = vmatprep.subr.bf16.mxu0 0
  %2127 = vmatpush1.bf16.msra.mxu0 0
  %2128 = vmatprep.subr.bf16.mxu0 0
  %2129 = vmatpush1.bf16.msra.mxu0 0
  %2130 = vmatprep.subr.bf16.mxu0 0
  %2131 = vmatpush1.bf16.msra.mxu0 0
  %2132 = vmatprep.subr.bf16.mxu0 0
  %2133 = vmatpush1.bf16.msra.mxu0 0
  %2134 = vmatprep.subr.bf16.mxu0 0
  %2135 = vmatpush1.bf16.msra.mxu0 0
  %2136 = vmatprep.subr.bf16.mxu0 0
  %2137 = vmatpush1.bf16.msra.mxu0 0
  %2138 = vmatprep.subr.bf16.mxu0 0
  %2139 = vmatpush1.bf16.msra.mxu0 %v2122
  %2140 = vmatprep.subr.bf16.mxu0 0
  %2141 = vmatpush2.bf16.msra.mxu0 0
  %2142 = vmatprep.subr.bf16.mxu0 0
  %2143 = vmatpush2.bf16.msra.mxu0 0
  %2144 = vmatprep.subr.bf16.mxu0 0
  %2145 = vmatpush2.bf16.msra.mxu0 0
  %2146 = vmatprep.subr.bf16.mxu0 0
  %2147 = vmatpush2.bf16.msra.mxu0 0
  %2148 = vmatprep.subr.bf16.mxu0 0
  %2149 = vmatpush2.bf16.msra.mxu0 0
  %2150 = vmatprep.subr.bf16.mxu0 0
  %2151 = vmatpush2.bf16.msra.mxu0 0
  %2152 = vmatprep.subr.bf16.mxu0 0
  %2153 = vmatpush2.bf16.msra.mxu0 0
  %2154 = vmatprep.subr.bf16.mxu0 0
  %2155 = vmatpush2.bf16.msra.mxu0 0
  %2156 = vmatprep.mubr.bf16.mxu0 0
  %2157 = vmatmul.mubr.bf16.gmra.mxu0 %v1532
  %v2158 = vpop.f32.mrf.mxu0
  %v2159 = vadd.f32 0.0, %v2158
  %v2160 = vpop.f32.mrf.mxu0
  %v2161 = vpop.f32.mrf.mxu0
  %v2162 = vadd.f32 0.0, %v2161
  %v2163 = vpop.f32.mrf.mxu0
  %2164 = vdwg.mxu0
  %v2165 = vmul.f32 %v1842, %v2111
  %v2166 = vmul.f32 %v1843, %v2114
  %v2167 = vadd.f32 %v2165, %v2159
  %v2168 = vadd.f32 %v2166, %v2162
  %v2169 = vld [vmem:[%s19] sm:$0x3]
  %v2170 = vld [vmem:[%s20] sm:$0xf]
  %2172 = vset.pattern.permute.xlu0 0
  %2173 = vperm.xlu0 %2172, %v2170
  %v2174 = vpop.permute.xlu0 %2173
  %v2177 = vsel %vm280, %v2169, 0
  %v2180 = vsel %vm280, %v1097, 0
  %2182 = vmatprep.subr.bf16.mxu0 0
  %2183 = vmatpush1.bf16.xpose.msra.mxu0 0
  %2184 = vmatprep.subr.bf16.mxu0 0
  %2185 = vmatpush1.bf16.xpose.msra.mxu0 0
  %2186 = vmatprep.subr.bf16.mxu0 0
  %2187 = vmatpush1.bf16.xpose.msra.mxu0 0
  %2188 = vmatprep.subr.bf16.mxu0 0
  %2189 = vmatpush1.bf16.xpose.msra.mxu0 0
  %2190 = vmatprep.subr.bf16.mxu0 0
  %2191 = vmatpush1.bf16.xpose.msra.mxu0 0
  %2192 = vmatprep.subr.bf16.mxu0 0
  %2193 = vmatpush1.bf16.xpose.msra.mxu0 0
  %2194 = vmatprep.subr.bf16.mxu0 0
  %2195 = vmatpush1.bf16.xpose.msra.mxu0 0
  %2196 = vmatprep.subr.bf16.mxu0 0
  %2197 = vmatpush1.bf16.xpose.msra.mxu0 %v2180
  %2198 = vmatprep.subr.bf16.mxu0 0
  %2199 = vmatpush2.bf16.xpose.msra.mxu0 0
  %2200 = vmatprep.subr.bf16.mxu0 0
  %2201 = vmatpush2.bf16.xpose.msra.mxu0 0
  %2202 = vmatprep.subr.bf16.mxu0 0
  %2203 = vmatpush2.bf16.xpose.msra.mxu0 0
  %2204 = vmatprep.subr.bf16.mxu0 0
  %2205 = vmatpush2.bf16.xpose.msra.mxu0 0
  %2206 = vmatprep.subr.bf16.mxu0 0
  %2207 = vmatpush2.bf16.xpose.msra.mxu0 0
  %2208 = vmatprep.subr.bf16.mxu0 0
  %2209 = vmatpush2.bf16.xpose.msra.mxu0 0
  %2210 = vmatprep.subr.bf16.mxu0 0
  %2211 = vmatpush2.bf16.xpose.msra.mxu0 0
  %2212 = vmatprep.subr.bf16.mxu0 0
  %2213 = vmatpush2.bf16.xpose.msra.mxu0 0
  %2214 = vmatprep.mubr.bf16.mxu0 0
  %2215 = vmatmul.mubr.bf16.gmra.mxu0 %v2177
  %v2216 = vpop.f32.mrf.mxu0
  %v2217 = vadd.f32 %v2174, %v2216
  %v2218 = vpop.f32.mrf.mxu0
  %v2219 = vpop.f32.mrf.mxu0
  %v2220 = vpop.f32.mrf.mxu0
  %2221 = vdwg.mxu0
  %v2222 = vpack.c.bf16 %v2168, %v2167
  %v2223 = vld [vmem:[%s21] sm:$0x3]
  %v2224 = vld [vmem:[%s22] sm:$0xf]
  %2226 = vset.pattern.permute.xlu0 0
  %2227 = vperm.xlu0 %2226, %v2224
  %v2228 = vpop.permute.xlu0 %2227
  %v2231 = vsel %vm1285, %v2223, 0
  %v2234 = vsel %vm1285, %v2222, 0
  %2236 = vmatprep.subr.bf16.mxu0 0
  %2237 = vmatpush1.bf16.xpose.msra.mxu0 0
  %2238 = vmatprep.subr.bf16.mxu0 0
  %2239 = vmatpush1.bf16.xpose.msra.mxu0 0
  %2240 = vmatprep.subr.bf16.mxu0 0
  %2241 = vmatpush1.bf16.xpose.msra.mxu0 0
  %2242 = vmatprep.subr.bf16.mxu0 0
  %2243 = vmatpush1.bf16.xpose.msra.mxu0 0
  %2244 = vmatprep.subr.bf16.mxu0 0
  %2245 = vmatpush1.bf16.xpose.msra.mxu0 0
  %2246 = vmatprep.subr.bf16.mxu0 0
  %2247 = vmatpush1.bf16.xpose.msra.mxu0 0
  %2248 = vmatprep.subr.bf16.mxu0 0
  %2249 = vmatpush1.bf16.xpose.msra.mxu0 0
  %2250 = vmatprep.subr.bf16.mxu0 0
  %2251 = vmatpush1.bf16.xpose.msra.mxu0 %v2234
  %2252 = vmatprep.subr.bf16.mxu0 0
  %2253 = vmatpush2.bf16.xpose.msra.mxu0 0
  %2254 = vmatprep.subr.bf16.mxu0 0
  %2255 = vmatpush2.bf16.xpose.msra.mxu0 0
  %2256 = vmatprep.subr.bf16.mxu0 0
  %2257 = vmatpush2.bf16.xpose.msra.mxu0 0
  %2258 = vmatprep.subr.bf16.mxu0 0
  %2259 = vmatpush2.bf16.xpose.msra.mxu0 0
  %2260 = vmatprep.subr.bf16.mxu0 0
  %2261 = vmatpush2.bf16.xpose.msra.mxu0 0
  %2262 = vmatprep.subr.bf16.mxu0 0
  %2263 = vmatpush2.bf16.xpose.msra.mxu0 0
  %2264 = vmatprep.subr.bf16.mxu0 0
  %2265 = vmatpush2.bf16.xpose.msra.mxu0 0
  %2266 = vmatprep.subr.bf16.mxu0 0
  %2267 = vmatpush2.bf16.xpose.msra.mxu0 0
  %2268 = vmatprep.mubr.bf16.mxu0 0
  %2269 = vmatmul.mubr.bf16.gmra.mxu0 %v2231
  %v2270 = vpop.f32.mrf.mxu0
  %v2271 = vadd.f32 %v2228, %v2270
  %v2272 = vpop.f32.mrf.mxu0
  %v2273 = vpop.f32.mrf.mxu0
  %v2274 = vpop.f32.mrf.mxu0
  %2275 = vdwg.mxu0
  %v2276 = vld [vmem:[#allocation2] sm:$0x1]
  %s2277 = vtos %v2276
  %v2278 = vstv %s2277
  %v2279 = vmul.f32 %v2278, %v2271
  %s2280 = ssub.f32 1.0, %s2277
  %v2281 = vstv %s2280
  %v2282 = vmul.f32 %v2281, %v2217
  %v2283 = vadd.f32 %v2279, %v2282
  %vm2284 = vcmask 125952
  %2285 = vst.msk [vmem:[%s23] sm:$0xf] %vm2284, %v2283
  // Predicated region
  $region94: #{gsynthesis_forward.1} parent=0 // pred_check
    _
  $region95: #{gsynthesis_forward.1} parent=0 // pred_check_branch
    %2287 = sbr.rel (0) target = $region97
  $region96: #{gsynthesis_forward.1} parent=0 // pred_region
    _
  $region97: #{gsynthesis_forward.1} parent=0 // pred_fallthru
    _
  // Predicated region
  $region98: #{gsynthesis_forward.1} parent=0 // pred_check
    _
  $region99: #{gsynthesis_forward.1} parent=0 // pred_check_branch
    %2289 = sbr.rel (0) target = $region101
  $region100: #{gsynthesis_forward.1} parent=0 // pred_region
    _
  $region101: #{gsynthesis_forward.1} parent=0 // pred_fallthru
    _

</llo_original>
